<compile_context>
chip_gen: v5e
topology: v5e:2x2
jax: 0.10.0
libtpu: 0.0.40
codegen_flags: <defaults>
</compile_context>

<pallas_src>
import functools

import jax
import jax.numpy as jnp
import numpy as np
from jax.experimental import pallas as pl
from jax.experimental.pallas import tpu as pltpu

_EPS = 1e-8


def _build_bfs(parents):
    num_joints = len(parents)
    children = {i: [] for i in range(num_joints)}
    for j, p in enumerate(parents):
        if p != -1:
            children[p].append(j)
    bfs, q, visited, head = [], [0], {0}, 0
    while head < len(q):
        cur = q[head]
        head += 1
        bfs.append(cur)
        for c in children[cur]:
            if c not in visited:
                visited.add(c)
                q.append(c)
    assert len(bfs) == num_joints, "parents list has disconnected components"
    return tuple(bfs)


def _fk_kernel(root_q_ref, root_p_ref, local_q_ref, bone_len_ref, out_ref,
               *, parents, bfs_order, rest_dirs, num_joints):
    """All component arrays are (1, B_tile): batch rides the 128-lane axis."""
    J = num_joints

    # ---- root joint: normalize orientation, emit position -----------------
    rw = root_q_ref[0:1, :]
    rx = root_q_ref[1:2, :]
    ry = root_q_ref[2:3, :]
    rz = root_q_ref[3:4, :]
    inv = 1.0 / (jnp.sqrt(rw * rw + rx * rx + ry * ry + rz * rz) + _EPS)
    glob_q = {0: (rw * inv, rx * inv, ry * inv, rz * inv)}

    p0x = root_p_ref[0:1, :]
    p0y = root_p_ref[1:2, :]
    p0z = root_p_ref[2:3, :]
    glob_p = {0: (p0x, p0y, p0z)}
    out_ref[0 * J:0 * J + 1, :] = p0x
    out_ref[1 * J:1 * J + 1, :] = p0y
    out_ref[2 * J:2 * J + 1, :] = p0z

    # ---- traverse the static joint tree (unrolled at trace time) ----------
    for j in bfs_order:
        par = parents[j]
        if par == -1:
            continue
        pw, px, py, pz = glob_q[par]            # parent global orientation
        ppx, ppy, ppz = glob_p[par]             # parent global position

        # child local quaternion (normalized) — matches x / (||x|| + eps)
        cw = local_q_ref[j * 4 + 0:j * 4 + 1, :]
        cx = local_q_ref[j * 4 + 1:j * 4 + 2, :]
        cy = local_q_ref[j * 4 + 2:j * 4 + 3, :]
        cz = local_q_ref[j * 4 + 3:j * 4 + 4, :]
        inv_c = 1.0 / (jnp.sqrt(cw * cw + cx * cx + cy * cy + cz * cz) + _EPS)
        cw, cx, cy, cz = cw * inv_c, cx * inv_c, cy * inv_c, cz * inv_c

        # global orientation = parent_global (Hamilton) child_local
        nw = pw * cw - px * cx - py * cy - pz * cz
        nx = pw * cx + px * cw + py * cz - pz * cy
        ny = pw * cy - px * cz + py * cw + pz * cx
        nz = pw * cz + px * cy - py * cx + pz * cw
        glob_q[j] = (nw, nx, ny, nz)

        # rotate the (compile-time constant) rest direction by the PARENT
        # orientation: rotated = r + qw*t + q_vec x t, t = 2 * (q_vec x r)
        rxc, ryc, rzc = rest_dirs[j]
        tx = 2.0 * (py * rzc - pz * ryc)
        ty = 2.0 * (pz * rxc - px * rzc)
        tz = 2.0 * (px * ryc - py * rxc)
        rox = rxc + pw * tx + (py * tz - pz * ty)
        roy = ryc + pw * ty + (pz * tx - px * tz)
        roz = rzc + pw * tz + (px * ty - py * tx)

        bl = bone_len_ref[j:j + 1, :]
        posx = ppx + rox * bl
        posy = ppy + roy * bl
        posz = ppz + roz * bl
        glob_p[j] = (posx, posy, posz)
        out_ref[0 * J + j:0 * J + j + 1, :] = posx
        out_ref[1 * J + j:1 * J + j + 1, :] = posy
        out_ref[2 * J + j:2 * J + j + 1, :] = posz


def forward_kinematics(parents_list, rest_directions, root_orientation_quat,
                       root_position, local_joint_rotations_quat, bone_lengths):
    parents = tuple(int(p) for p in parents_list)
    J = len(parents)
    bfs_order = _build_bfs(parents)
    B = root_position.shape[0]
    dtype = root_position.dtype

    # rest_directions is a static module buffer -> bake as compile-time floats.
    rest_np = np.asarray(rest_directions, dtype=np.float32)
    assert rest_np.shape == (J, 3)
    rest_dirs = tuple(tuple(float(v) for v in rest_np[j]) for j in range(J))

    # Lane-dense re-layout (batch on the last/lane axis); done in the wrapper.
    root_q_t = jnp.transpose(root_orientation_quat, (1, 0))                 # (4, B)
    root_p_t = jnp.transpose(root_position, (1, 0))                         # (3, B)
    local_q_t = jnp.transpose(local_joint_rotations_quat, (1, 2, 0))        # (J, 4, B)
    local_q_t = local_q_t.reshape(J * 4, B)                                 # (J*4, B)
    bone_len_t = jnp.transpose(bone_lengths, (1, 0))                        # (J, B)

    # Batch tile: largest lane-aligned tile that divides B (enables the
    # automatic double-buffered HBM<->VMEM pipeline for large batches).
    b_tile = B
    for cand in (2048, 1024, 512, 256, 128):
        if B % cand == 0:
            b_tile = cand
            break
    n_tiles = B // b_tile

    kernel = functools.partial(
        _fk_kernel, parents=parents, bfs_order=bfs_order,
        rest_dirs=rest_dirs, num_joints=J)

    out_t = pl.pallas_call(
        kernel,
        out_shape=jax.ShapeDtypeStruct((3 * J, B), dtype),
        grid_spec=pltpu.PrefetchScalarGridSpec(
            num_scalar_prefetch=0,
            grid=(n_tiles,),
            in_specs=[
                pl.BlockSpec((4, b_tile), lambda i: (0, i)),
                pl.BlockSpec((3, b_tile), lambda i: (0, i)),
                pl.BlockSpec((J * 4, b_tile), lambda i: (0, i)),
                pl.BlockSpec((J, b_tile), lambda i: (0, i)),
            ],
            out_specs=pl.BlockSpec((3 * J, b_tile), lambda i: (0, i)),
        ),
        compiler_params=pltpu.CompilerParams(
            dimension_semantics=("parallel",)),
    )(root_q_t, root_p_t, local_q_t, bone_len_t)

    # (3*J, B) -> (3, J, B) -> (B, J, 3)  (the PyTorch return layout)
    return jnp.transpose(out_t.reshape(3, J, B), (2, 1, 0))


def _fk_reference(parents_list, rest_directions, root_q, root_p, local_q, bone_len):
    # Pure-JAX mirror of the PyTorch forward, batch-major, for correctness check.
    parents = tuple(int(p) for p in parents_list)
    bfs_order = _build_bfs(parents)
    eps = 1e-8
    root_q = root_q / (jnp.linalg.norm(root_q, axis=-1, keepdims=True) + eps)
    local_q = local_q / (jnp.linalg.norm(local_q, axis=-1, keepdims=True) + eps)

    def quat_mul(p, c):
        pw, px, py, pz = p[:, 0:1], p[:, 1:2], p[:, 2:3], p[:, 3:4]
        cw, cx, cy, cz = c[:, 0:1], c[:, 1:2], c[:, 2:3], c[:, 3:4]
        return jnp.concatenate([
            pw * cw - px * cx - py * cy - pz * cz,
            pw * cx + px * cw + py * cz - pz * cy,
            pw * cy - px * cz + py * cw + pz * cx,
            pw * cz + px * cy - py * cx + pz * cw], axis=-1)

    glob_q = {0: root_q}
    glob_p = {0: root_p}
    for j in bfs_order:
        p = parents[j]
        if p == -1:
            continue
        pq, pp = glob_q[p], glob_p[p]
        glob_q[j] = quat_mul(pq, local_q[:, j, :])
        rest_j = rest_directions[j][None, :]
        q_vec, q_s = pq[:, 1:4], pq[:, 0:1]
        t = 2.0 * jnp.cross(q_vec, jnp.broadcast_to(rest_j, q_vec.shape))
        rotated = rest_j + q_s * t + jnp.cross(q_vec, t)
        glob_p[j] = pp + rotated * bone_len[:, j:j + 1]
    return jnp.stack([glob_p[j] for j in range(len(parents))], axis=1)


if __name__ == "__main__":
    SMPL_PARENTS = [-1, 0, 0, 0, 1, 2, 3, 4, 5, 6, 7, 8,
                    9, 9, 9, 12, 13, 14, 16, 17, 18, 19, 20, 21]
    J = len(SMPL_PARENTS)
    B = 8

    key = jax.random.PRNGKey(0)
    k1, k2, k3, k4, k5 = jax.random.split(key, 5)
    # deterministic in-script "parameters" (rest bone directions buffer)
    rest_dirs = jax.random.normal(k1, (J, 3), jnp.float32)

    root_q = jax.random.normal(k2, (B, 4), jnp.float32)
    root_p = jax.random.normal(k3, (B, 3), jnp.float32)
    local_q = jax.random.normal(k4, (B, J, 4), jnp.float32)
    bone_len = jax.nn.softplus(jax.random.normal(k5, (B, J), jnp.float32))

    out = forward_kinematics(SMPL_PARENTS, rest_dirs, root_q, root_p, local_q, bone_len)
    out = jax.block_until_ready(out)

    ref = _fk_reference(SMPL_PARENTS, rest_dirs, root_q, root_p, local_q, bone_len)
    assert out.shape == (B, J, 3)
    assert np.allclose(np.asarray(out), np.asarray(ref), atol=1e-4, rtol=1e-4)
    print("KERNEL_OK")
</pallas_src>

<mosaic_0001>
module attributes {stable_mosaic.version = 11 : i64} {
  func.func @_fk_kernel(%arg0: i32, %arg1: memref<4x8xf32, #tpu.memory_space<vmem>>, %arg2: memref<3x8xf32, #tpu.memory_space<vmem>>, %arg3: memref<96x8xf32, #tpu.memory_space<vmem>>, %arg4: memref<24x8xf32, #tpu.memory_space<vmem>>, %arg5: memref<72x8xf32, #tpu.memory_space<vmem>>) attributes {dimension_semantics = [#tpu.dimension_semantics<parallel>], iteration_bounds = array<i64: 1>, scalar_prefetch = 0 : i64, scratch_operands = 0 : i64, tpu.core_type = #tpu.core_type<tc>, window_params = [{transform_indices = @transform_0, window_bounds = array<i64: 4, 8>}, {transform_indices = @transform_1, window_bounds = array<i64: 3, 8>}, {transform_indices = @transform_2, window_bounds = array<i64: 96, 8>}, {transform_indices = @transform_3, window_bounds = array<i64: 24, 8>}, {transform_indices = @transform_4, window_bounds = array<i64: 72, 8>}]} {
    %c0 = arith.constant 0 : index
    %c0_0 = arith.constant 0 : index
    %0 = vector.load %arg1[%c0, %c0_0] : memref<4x8xf32, #tpu.memory_space<vmem>>, vector<1x8xf32>
    %c1 = arith.constant 1 : index
    %c0_1 = arith.constant 0 : index
    %1 = vector.load %arg1[%c1, %c0_1] : memref<4x8xf32, #tpu.memory_space<vmem>>, vector<1x8xf32>
    %c2 = arith.constant 2 : index
    %c0_2 = arith.constant 0 : index
    %2 = vector.load %arg1[%c2, %c0_2] : memref<4x8xf32, #tpu.memory_space<vmem>>, vector<1x8xf32>
    %c3 = arith.constant 3 : index
    %c0_3 = arith.constant 0 : index
    %3 = vector.load %arg1[%c3, %c0_3] : memref<4x8xf32, #tpu.memory_space<vmem>>, vector<1x8xf32>
    %4 = arith.mulf %0, %0 : vector<1x8xf32>
    %5 = arith.mulf %1, %1 : vector<1x8xf32>
    %6 = arith.addf %4, %5 : vector<1x8xf32>
    %7 = arith.mulf %2, %2 : vector<1x8xf32>
    %8 = arith.addf %6, %7 : vector<1x8xf32>
    %9 = arith.mulf %3, %3 : vector<1x8xf32>
    %10 = arith.addf %8, %9 : vector<1x8xf32>
    %11 = math.sqrt %10 : vector<1x8xf32>
    %cst = arith.constant 9.99999993E-9 : f32
    %12 = vector.broadcast %cst : f32 to vector<1x8xf32>
    %13 = arith.addf %11, %12 : vector<1x8xf32>
    %cst_4 = arith.constant 1.000000e+00 : f32
    %14 = vector.broadcast %cst_4 : f32 to vector<1x8xf32>
    %15 = arith.divf %14, %13 : vector<1x8xf32>
    %16 = arith.mulf %0, %15 : vector<1x8xf32>
    %17 = arith.mulf %1, %15 : vector<1x8xf32>
    %18 = arith.mulf %2, %15 : vector<1x8xf32>
    %19 = arith.mulf %3, %15 : vector<1x8xf32>
    %c0_5 = arith.constant 0 : index
    %c0_6 = arith.constant 0 : index
    %20 = vector.load %arg2[%c0_5, %c0_6] : memref<3x8xf32, #tpu.memory_space<vmem>>, vector<1x8xf32>
    %c1_7 = arith.constant 1 : index
    %c0_8 = arith.constant 0 : index
    %21 = vector.load %arg2[%c1_7, %c0_8] : memref<3x8xf32, #tpu.memory_space<vmem>>, vector<1x8xf32>
    %c2_9 = arith.constant 2 : index
    %c0_10 = arith.constant 0 : index
    %22 = vector.load %arg2[%c2_9, %c0_10] : memref<3x8xf32, #tpu.memory_space<vmem>>, vector<1x8xf32>
    %c0_11 = arith.constant 0 : index
    %c0_12 = arith.constant 0 : index
    %23 = vector.load %arg5[%c0_11, %c0_12] : memref<72x8xf32, #tpu.memory_space<vmem>>, vector<1x8xf32>
    tpu.vector_store %arg5[%c0_11, %c0_12], %20 {strides = array<i32>} : memref<72x8xf32, #tpu.memory_space<vmem>>, vector<1x8xf32>,
    %c24 = arith.constant 24 : index
    %c0_13 = arith.constant 0 : index
    %24 = vector.load %arg5[%c24, %c0_13] : memref<72x8xf32, #tpu.memory_space<vmem>>, vector<1x8xf32>
    tpu.vector_store %arg5[%c24, %c0_13], %21 {strides = array<i32>} : memref<72x8xf32, #tpu.memory_space<vmem>>, vector<1x8xf32>,
    %c48 = arith.constant 48 : index
    %c0_14 = arith.constant 0 : index
    %25 = vector.load %arg5[%c48, %c0_14] : memref<72x8xf32, #tpu.memory_space<vmem>>, vector<1x8xf32>
    tpu.vector_store %arg5[%c48, %c0_14], %22 {strides = array<i32>} : memref<72x8xf32, #tpu.memory_space<vmem>>, vector<1x8xf32>,
    %c4 = arith.constant 4 : index
    %c0_15 = arith.constant 0 : index
    %26 = vector.load %arg3[%c4, %c0_15] : memref<96x8xf32, #tpu.memory_space<vmem>>, vector<1x8xf32>
    %c5 = arith.constant 5 : index
    %c0_16 = arith.constant 0 : index
    %27 = vector.load %arg3[%c5, %c0_16] : memref<96x8xf32, #tpu.memory_space<vmem>>, vector<1x8xf32>
    %c6 = arith.constant 6 : index
    %c0_17 = arith.constant 0 : index
    %28 = vector.load %arg3[%c6, %c0_17] : memref<96x8xf32, #tpu.memory_space<vmem>>, vector<1x8xf32>
    %c7 = arith.constant 7 : index
    %c0_18 = arith.constant 0 : index
    %29 = vector.load %arg3[%c7, %c0_18] : memref<96x8xf32, #tpu.memory_space<vmem>>, vector<1x8xf32>
    %30 = arith.mulf %26, %26 : vector<1x8xf32>
    %31 = arith.mulf %27, %27 : vector<1x8xf32>
    %32 = arith.addf %30, %31 : vector<1x8xf32>
    %33 = arith.mulf %28, %28 : vector<1x8xf32>
    %34 = arith.addf %32, %33 : vector<1x8xf32>
    %35 = arith.mulf %29, %29 : vector<1x8xf32>
    %36 = arith.addf %34, %35 : vector<1x8xf32>
    %37 = math.sqrt %36 : vector<1x8xf32>
    %cst_19 = arith.constant 9.99999993E-9 : f32
    %38 = vector.broadcast %cst_19 : f32 to vector<1x8xf32>
    %39 = arith.addf %37, %38 : vector<1x8xf32>
    %cst_20 = arith.constant 1.000000e+00 : f32
    %40 = vector.broadcast %cst_20 : f32 to vector<1x8xf32>
    %41 = arith.divf %40, %39 : vector<1x8xf32>
    %42 = arith.mulf %26, %41 : vector<1x8xf32>
    %43 = arith.mulf %27, %41 : vector<1x8xf32>
    %44 = arith.mulf %28, %41 : vector<1x8xf32>
    %45 = arith.mulf %29, %41 : vector<1x8xf32>
    %46 = arith.mulf %16, %42 : vector<1x8xf32>
    %47 = arith.mulf %17, %43 : vector<1x8xf32>
    %48 = arith.subf %46, %47 : vector<1x8xf32>
    %49 = arith.mulf %18, %44 : vector<1x8xf32>
    %50 = arith.subf %48, %49 : vector<1x8xf32>
    %51 = arith.mulf %19, %45 : vector<1x8xf32>
    %52 = arith.subf %50, %51 : vector<1x8xf32>
    %53 = arith.mulf %16, %43 : vector<1x8xf32>
    %54 = arith.mulf %17, %42 : vector<1x8xf32>
    %55 = arith.addf %53, %54 : vector<1x8xf32>
    %56 = arith.mulf %18, %45 : vector<1x8xf32>
    %57 = arith.addf %55, %56 : vector<1x8xf32>
    %58 = arith.mulf %19, %44 : vector<1x8xf32>
    %59 = arith.subf %57, %58 : vector<1x8xf32>
    %60 = arith.mulf %16, %44 : vector<1x8xf32>
    %61 = arith.mulf %17, %45 : vector<1x8xf32>
    %62 = arith.subf %60, %61 : vector<1x8xf32>
    %63 = arith.mulf %18, %42 : vector<1x8xf32>
    %64 = arith.addf %62, %63 : vector<1x8xf32>
    %65 = arith.mulf %19, %43 : vector<1x8xf32>
    %66 = arith.addf %64, %65 : vector<1x8xf32>
    %67 = arith.mulf %16, %45 : vector<1x8xf32>
    %68 = arith.mulf %17, %44 : vector<1x8xf32>
    %69 = arith.addf %67, %68 : vector<1x8xf32>
    %70 = arith.mulf %18, %43 : vector<1x8xf32>
    %71 = arith.subf %69, %70 : vector<1x8xf32>
    %72 = arith.mulf %19, %42 : vector<1x8xf32>
    %73 = arith.addf %71, %72 : vector<1x8xf32>
    %cst_21 = arith.constant 0.5888381 : f32
    %74 = vector.broadcast %cst_21 : f32 to vector<1x8xf32>
    %75 = arith.mulf %18, %74 : vector<1x8xf32>
    %cst_22 = arith.constant -0.871232807 : f32
    %76 = vector.broadcast %cst_22 : f32 to vector<1x8xf32>
    %77 = arith.mulf %19, %76 : vector<1x8xf32>
    %78 = arith.subf %75, %77 : vector<1x8xf32>
    %cst_23 = arith.constant 2.000000e+00 : f32
    %79 = vector.broadcast %cst_23 : f32 to vector<1x8xf32>
    %80 = arith.mulf %79, %78 : vector<1x8xf32>
    %cst_24 = arith.constant -1.17136693 : f32
    %81 = vector.broadcast %cst_24 : f32 to vector<1x8xf32>
    %82 = arith.mulf %19, %81 : vector<1x8xf32>
    %cst_25 = arith.constant 0.5888381 : f32
    %83 = vector.broadcast %cst_25 : f32 to vector<1x8xf32>
    %84 = arith.mulf %17, %83 : vector<1x8xf32>
    %85 = arith.subf %82, %84 : vector<1x8xf32>
    %cst_26 = arith.constant 2.000000e+00 : f32
    %86 = vector.broadcast %cst_26 : f32 to vector<1x8xf32>
    %87 = arith.mulf %86, %85 : vector<1x8xf32>
    %cst_27 = arith.constant -0.871232807 : f32
    %88 = vector.broadcast %cst_27 : f32 to vector<1x8xf32>
    %89 = arith.mulf %17, %88 : vector<1x8xf32>
    %cst_28 = arith.constant -1.17136693 : f32
    %90 = vector.broadcast %cst_28 : f32 to vector<1x8xf32>
    %91 = arith.mulf %18, %90 : vector<1x8xf32>
    %92 = arith.subf %89, %91 : vector<1x8xf32>
    %cst_29 = arith.constant 2.000000e+00 : f32
    %93 = vector.broadcast %cst_29 : f32 to vector<1x8xf32>
    %94 = arith.mulf %93, %92 : vector<1x8xf32>
    %95 = arith.mulf %16, %80 : vector<1x8xf32>
    %cst_30 = arith.constant -1.17136693 : f32
    %96 = vector.broadcast %cst_30 : f32 to vector<1x8xf32>
    %97 = arith.addf %96, %95 : vector<1x8xf32>
    %98 = arith.mulf %18, %94 : vector<1x8xf32>
    %99 = arith.mulf %19, %87 : vector<1x8xf32>
    %100 = arith.subf %98, %99 : vector<1x8xf32>
    %101 = arith.addf %97, %100 : vector<1x8xf32>
    %102 = arith.mulf %16, %87 : vector<1x8xf32>
    %cst_31 = arith.constant -0.871232807 : f32
    %103 = vector.broadcast %cst_31 : f32 to vector<1x8xf32>
    %104 = arith.addf %103, %102 : vector<1x8xf32>
    %105 = arith.mulf %19, %80 : vector<1x8xf32>
    %106 = arith.mulf %17, %94 : vector<1x8xf32>
    %107 = arith.subf %105, %106 : vector<1x8xf32>
    %108 = arith.addf %104, %107 : vector<1x8xf32>
    %109 = arith.mulf %16, %94 : vector<1x8xf32>
    %cst_32 = arith.constant 0.5888381 : f32
    %110 = vector.broadcast %cst_32 : f32 to vector<1x8xf32>
    %111 = arith.addf %110, %109 : vector<1x8xf32>
    %112 = arith.mulf %17, %87 : vector<1x8xf32>
    %113 = arith.mulf %18, %80 : vector<1x8xf32>
    %114 = arith.subf %112, %113 : vector<1x8xf32>
    %115 = arith.addf %111, %114 : vector<1x8xf32>
    %c1_33 = arith.constant 1 : index
    %c0_34 = arith.constant 0 : index
    %116 = vector.load %arg4[%c1_33, %c0_34] : memref<24x8xf32, #tpu.memory_space<vmem>>, vector<1x8xf32>
    %117 = arith.mulf %101, %116 : vector<1x8xf32>
    %118 = arith.addf %20, %117 : vector<1x8xf32>
    %119 = arith.mulf %108, %116 : vector<1x8xf32>
    %120 = arith.addf %21, %119 : vector<1x8xf32>
    %121 = arith.mulf %115, %116 : vector<1x8xf32>
    %122 = arith.addf %22, %121 : vector<1x8xf32>
    %c1_35 = arith.constant 1 : index
    %c0_36 = arith.constant 0 : index
    %123 = vector.load %arg5[%c1_35, %c0_36] : memref<72x8xf32, #tpu.memory_space<vmem>>, vector<1x8xf32>
    tpu.vector_store %arg5[%c1_35, %c0_36], %118 {strides = array<i32>} : memref<72x8xf32, #tpu.memory_space<vmem>>, vector<1x8xf32>,
    %c25 = arith.constant 25 : index
    %c0_37 = arith.constant 0 : index
    %124 = vector.load %arg5[%c25, %c0_37] : memref<72x8xf32, #tpu.memory_space<vmem>>, vector<1x8xf32>
    tpu.vector_store %arg5[%c25, %c0_37], %120 {strides = array<i32>} : memref<72x8xf32, #tpu.memory_space<vmem>>, vector<1x8xf32>,
    %c49 = arith.constant 49 : index
    %c0_38 = arith.constant 0 : index
    %125 = vector.load %arg5[%c49, %c0_38] : memref<72x8xf32, #tpu.memory_space<vmem>>, vector<1x8xf32>
    tpu.vector_store %arg5[%c49, %c0_38], %122 {strides = array<i32>} : memref<72x8xf32, #tpu.memory_space<vmem>>, vector<1x8xf32>,
    %c8 = arith.constant 8 : index
    %c0_39 = arith.constant 0 : index
    %126 = vector.load %arg3[%c8, %c0_39] : memref<96x8xf32, #tpu.memory_space<vmem>>, vector<1x8xf32>
    %c9 = arith.constant 9 : index
    %c0_40 = arith.constant 0 : index
    %127 = vector.load %arg3[%c9, %c0_40] : memref<96x8xf32, #tpu.memory_space<vmem>>, vector<1x8xf32>
    %c10 = arith.constant 10 : index
    %c0_41 = arith.constant 0 : index
    %128 = vector.load %arg3[%c10, %c0_41] : memref<96x8xf32, #tpu.memory_space<vmem>>, vector<1x8xf32>
    %c11 = arith.constant 11 : index
    %c0_42 = arith.constant 0 : index
    %129 = vector.load %arg3[%c11, %c0_42] : memref<96x8xf32, #tpu.memory_space<vmem>>, vector<1x8xf32>
    %130 = arith.mulf %126, %126 : vector<1x8xf32>
    %131 = arith.mulf %127, %127 : vector<1x8xf32>
    %132 = arith.addf %130, %131 : vector<1x8xf32>
    %133 = arith.mulf %128, %128 : vector<1x8xf32>
    %134 = arith.addf %132, %133 : vector<1x8xf32>
    %135 = arith.mulf %129, %129 : vector<1x8xf32>
    %136 = arith.addf %134, %135 : vector<1x8xf32>
    %137 = math.sqrt %136 : vector<1x8xf32>
    %cst_43 = arith.constant 9.99999993E-9 : f32
    %138 = vector.broadcast %cst_43 : f32 to vector<1x8xf32>
    %139 = arith.addf %137, %138 : vector<1x8xf32>
    %cst_44 = arith.constant 1.000000e+00 : f32
    %140 = vector.broadcast %cst_44 : f32 to vector<1x8xf32>
    %141 = arith.divf %140, %139 : vector<1x8xf32>
    %142 = arith.mulf %126, %141 : vector<1x8xf32>
    %143 = arith.mulf %127, %141 : vector<1x8xf32>
    %144 = arith.mulf %128, %141 : vector<1x8xf32>
    %145 = arith.mulf %129, %141 : vector<1x8xf32>
    %146 = arith.mulf %16, %142 : vector<1x8xf32>
    %147 = arith.mulf %17, %143 : vector<1x8xf32>
    %148 = arith.subf %146, %147 : vector<1x8xf32>
    %149 = arith.mulf %18, %144 : vector<1x8xf32>
    %150 = arith.subf %148, %149 : vector<1x8xf32>
    %151 = arith.mulf %19, %145 : vector<1x8xf32>
    %152 = arith.subf %150, %151 : vector<1x8xf32>
    %153 = arith.mulf %16, %143 : vector<1x8xf32>
    %154 = arith.mulf %17, %142 : vector<1x8xf32>
    %155 = arith.addf %153, %154 : vector<1x8xf32>
    %156 = arith.mulf %18, %145 : vector<1x8xf32>
    %157 = arith.addf %155, %156 : vector<1x8xf32>
    %158 = arith.mulf %19, %144 : vector<1x8xf32>
    %159 = arith.subf %157, %158 : vector<1x8xf32>
    %160 = arith.mulf %16, %144 : vector<1x8xf32>
    %161 = arith.mulf %17, %145 : vector<1x8xf32>
    %162 = arith.subf %160, %161 : vector<1x8xf32>
    %163 = arith.mulf %18, %142 : vector<1x8xf32>
    %164 = arith.addf %162, %163 : vector<1x8xf32>
    %165 = arith.mulf %19, %143 : vector<1x8xf32>
    %166 = arith.addf %164, %165 : vector<1x8xf32>
    %167 = arith.mulf %16, %145 : vector<1x8xf32>
    %168 = arith.mulf %17, %144 : vector<1x8xf32>
    %169 = arith.addf %167, %168 : vector<1x8xf32>
    %170 = arith.mulf %18, %143 : vector<1x8xf32>
    %171 = arith.subf %169, %170 : vector<1x8xf32>
    %172 = arith.mulf %19, %142 : vector<1x8xf32>
    %173 = arith.addf %171, %172 : vector<1x8xf32>
    %cst_45 = arith.constant 1.66162801 : f32
    %174 = vector.broadcast %cst_45 : f32 to vector<1x8xf32>
    %175 = arith.mulf %18, %174 : vector<1x8xf32>
    %cst_46 = arith.constant -1.02559817 : f32
    %176 = vector.broadcast %cst_46 : f32 to vector<1x8xf32>
    %177 = arith.mulf %19, %176 : vector<1x8xf32>
    %178 = arith.subf %175, %177 : vector<1x8xf32>
    %cst_47 = arith.constant 2.000000e+00 : f32
    %179 = vector.broadcast %cst_47 : f32 to vector<1x8xf32>
    %180 = arith.mulf %179, %178 : vector<1x8xf32>
    %cst_48 = arith.constant 0.723929941 : f32
    %181 = vector.broadcast %cst_48 : f32 to vector<1x8xf32>
    %182 = arith.mulf %19, %181 : vector<1x8xf32>
    %cst_49 = arith.constant 1.66162801 : f32
    %183 = vector.broadcast %cst_49 : f32 to vector<1x8xf32>
    %184 = arith.mulf %17, %183 : vector<1x8xf32>
    %185 = arith.subf %182, %184 : vector<1x8xf32>
    %cst_50 = arith.constant 2.000000e+00 : f32
    %186 = vector.broadcast %cst_50 : f32 to vector<1x8xf32>
    %187 = arith.mulf %186, %185 : vector<1x8xf32>
    %cst_51 = arith.constant -1.02559817 : f32
    %188 = vector.broadcast %cst_51 : f32 to vector<1x8xf32>
    %189 = arith.mulf %17, %188 : vector<1x8xf32>
    %cst_52 = arith.constant 0.723929941 : f32
    %190 = vector.broadcast %cst_52 : f32 to vector<1x8xf32>
    %191 = arith.mulf %18, %190 : vector<1x8xf32>
    %192 = arith.subf %189, %191 : vector<1x8xf32>
    %cst_53 = arith.constant 2.000000e+00 : f32
    %193 = vector.broadcast %cst_53 : f32 to vector<1x8xf32>
    %194 = arith.mulf %193, %192 : vector<1x8xf32>
    %195 = arith.mulf %16, %180 : vector<1x8xf32>
    %cst_54 = arith.constant 0.723929941 : f32
    %196 = vector.broadcast %cst_54 : f32 to vector<1x8xf32>
    %197 = arith.addf %196, %195 : vector<1x8xf32>
    %198 = arith.mulf %18, %194 : vector<1x8xf32>
    %199 = arith.mulf %19, %187 : vector<1x8xf32>
    %200 = arith.subf %198, %199 : vector<1x8xf32>
    %201 = arith.addf %197, %200 : vector<1x8xf32>
    %202 = arith.mulf %16, %187 : vector<1x8xf32>
    %cst_55 = arith.constant -1.02559817 : f32
    %203 = vector.broadcast %cst_55 : f32 to vector<1x8xf32>
    %204 = arith.addf %203, %202 : vector<1x8xf32>
    %205 = arith.mulf %19, %180 : vector<1x8xf32>
    %206 = arith.mulf %17, %194 : vector<1x8xf32>
    %207 = arith.subf %205, %206 : vector<1x8xf32>
    %208 = arith.addf %204, %207 : vector<1x8xf32>
    %209 = arith.mulf %16, %194 : vector<1x8xf32>
    %cst_56 = arith.constant 1.66162801 : f32
    %210 = vector.broadcast %cst_56 : f32 to vector<1x8xf32>
    %211 = arith.addf %210, %209 : vector<1x8xf32>
    %212 = arith.mulf %17, %187 : vector<1x8xf32>
    %213 = arith.mulf %18, %180 : vector<1x8xf32>
    %214 = arith.subf %212, %213 : vector<1x8xf32>
    %215 = arith.addf %211, %214 : vector<1x8xf32>
    %c2_57 = arith.constant 2 : index
    %c0_58 = arith.constant 0 : index
    %216 = vector.load %arg4[%c2_57, %c0_58] : memref<24x8xf32, #tpu.memory_space<vmem>>, vector<1x8xf32>
    %217 = arith.mulf %201, %216 : vector<1x8xf32>
    %218 = arith.addf %20, %217 : vector<1x8xf32>
    %219 = arith.mulf %208, %216 : vector<1x8xf32>
    %220 = arith.addf %21, %219 : vector<1x8xf32>
    %221 = arith.mulf %215, %216 : vector<1x8xf32>
    %222 = arith.addf %22, %221 : vector<1x8xf32>
    %c2_59 = arith.constant 2 : index
    %c0_60 = arith.constant 0 : index
    %223 = vector.load %arg5[%c2_59, %c0_60] : memref<72x8xf32, #tpu.memory_space<vmem>>, vector<1x8xf32>
    tpu.vector_store %arg5[%c2_59, %c0_60], %218 {strides = array<i32>} : memref<72x8xf32, #tpu.memory_space<vmem>>, vector<1x8xf32>,
    %c26 = arith.constant 26 : index
    %c0_61 = arith.constant 0 : index
    %224 = vector.load %arg5[%c26, %c0_61] : memref<72x8xf32, #tpu.memory_space<vmem>>, vector<1x8xf32>
    tpu.vector_store %arg5[%c26, %c0_61], %220 {strides = array<i32>} : memref<72x8xf32, #tpu.memory_space<vmem>>, vector<1x8xf32>,
    %c50 = arith.constant 50 : index
    %c0_62 = arith.constant 0 : index
    %225 = vector.load %arg5[%c50, %c0_62] : memref<72x8xf32, #tpu.memory_space<vmem>>, vector<1x8xf32>
    tpu.vector_store %arg5[%c50, %c0_62], %222 {strides = array<i32>} : memref<72x8xf32, #tpu.memory_space<vmem>>, vector<1x8xf32>,
    %c12 = arith.constant 12 : index
    %c0_63 = arith.constant 0 : index
    %226 = vector.load %arg3[%c12, %c0_63] : memref<96x8xf32, #tpu.memory_space<vmem>>, vector<1x8xf32>
    %c13 = arith.constant 13 : index
    %c0_64 = arith.constant 0 : index
    %227 = vector.load %arg3[%c13, %c0_64] : memref<96x8xf32, #tpu.memory_space<vmem>>, vector<1x8xf32>
    %c14 = arith.constant 14 : index
    %c0_65 = arith.constant 0 : index
    %228 = vector.load %arg3[%c14, %c0_65] : memref<96x8xf32, #tpu.memory_space<vmem>>, vector<1x8xf32>
    %c15 = arith.constant 15 : index
    %c0_66 = arith.constant 0 : index
    %229 = vector.load %arg3[%c15, %c0_66] : memref<96x8xf32, #tpu.memory_space<vmem>>, vector<1x8xf32>
    %230 = arith.mulf %226, %226 : vector<1x8xf32>
    %231 = arith.mulf %227, %227 : vector<1x8xf32>
    %232 = arith.addf %230, %231 : vector<1x8xf32>
    %233 = arith.mulf %228, %228 : vector<1x8xf32>
    %234 = arith.addf %232, %233 : vector<1x8xf32>
    %235 = arith.mulf %229, %229 : vector<1x8xf32>
    %236 = arith.addf %234, %235 : vector<1x8xf32>
    %237 = math.sqrt %236 : vector<1x8xf32>
    %cst_67 = arith.constant 9.99999993E-9 : f32
    %238 = vector.broadcast %cst_67 : f32 to vector<1x8xf32>
    %239 = arith.addf %237, %238 : vector<1x8xf32>
    %cst_68 = arith.constant 1.000000e+00 : f32
    %240 = vector.broadcast %cst_68 : f32 to vector<1x8xf32>
    %241 = arith.divf %240, %239 : vector<1x8xf32>
    %242 = arith.mulf %226, %241 : vector<1x8xf32>
    %243 = arith.mulf %227, %241 : vector<1x8xf32>
    %244 = arith.mulf %228, %241 : vector<1x8xf32>
    %245 = arith.mulf %229, %241 : vector<1x8xf32>
    %246 = arith.mulf %16, %242 : vector<1x8xf32>
    %247 = arith.mulf %17, %243 : vector<1x8xf32>
    %248 = arith.subf %246, %247 : vector<1x8xf32>
    %249 = arith.mulf %18, %244 : vector<1x8xf32>
    %250 = arith.subf %248, %249 : vector<1x8xf32>
    %251 = arith.mulf %19, %245 : vector<1x8xf32>
    %252 = arith.subf %250, %251 : vector<1x8xf32>
    %253 = arith.mulf %16, %243 : vector<1x8xf32>
    %254 = arith.mulf %17, %242 : vector<1x8xf32>
    %255 = arith.addf %253, %254 : vector<1x8xf32>
    %256 = arith.mulf %18, %245 : vector<1x8xf32>
    %257 = arith.addf %255, %256 : vector<1x8xf32>
    %258 = arith.mulf %19, %244 : vector<1x8xf32>
    %259 = arith.subf %257, %258 : vector<1x8xf32>
    %260 = arith.mulf %16, %244 : vector<1x8xf32>
    %261 = arith.mulf %17, %245 : vector<1x8xf32>
    %262 = arith.subf %260, %261 : vector<1x8xf32>
    %263 = arith.mulf %18, %242 : vector<1x8xf32>
    %264 = arith.addf %262, %263 : vector<1x8xf32>
    %265 = arith.mulf %19, %243 : vector<1x8xf32>
    %266 = arith.addf %264, %265 : vector<1x8xf32>
    %267 = arith.mulf %16, %245 : vector<1x8xf32>
    %268 = arith.mulf %17, %244 : vector<1x8xf32>
    %269 = arith.addf %267, %268 : vector<1x8xf32>
    %270 = arith.mulf %18, %243 : vector<1x8xf32>
    %271 = arith.subf %269, %270 : vector<1x8xf32>
    %272 = arith.mulf %19, %242 : vector<1x8xf32>
    %273 = arith.addf %271, %272 : vector<1x8xf32>
    %cst_69 = arith.constant 0.133606911 : f32
    %274 = vector.broadcast %cst_69 : f32 to vector<1x8xf32>
    %275 = arith.mulf %18, %274 : vector<1x8xf32>
    %cst_70 = arith.constant -1.28893387 : f32
    %276 = vector.broadcast %cst_70 : f32 to vector<1x8xf32>
    %277 = arith.mulf %19, %276 : vector<1x8xf32>
    %278 = arith.subf %275, %277 : vector<1x8xf32>
    %cst_71 = arith.constant 2.000000e+00 : f32
    %279 = vector.broadcast %cst_71 : f32 to vector<1x8xf32>
    %280 = arith.mulf %279, %278 : vector<1x8xf32>
    %cst_72 = arith.constant -1.89102507 : f32
    %281 = vector.broadcast %cst_72 : f32 to vector<1x8xf32>
    %282 = arith.mulf %19, %281 : vector<1x8xf32>
    %cst_73 = arith.constant 0.133606911 : f32
    %283 = vector.broadcast %cst_73 : f32 to vector<1x8xf32>
    %284 = arith.mulf %17, %283 : vector<1x8xf32>
    %285 = arith.subf %282, %284 : vector<1x8xf32>
    %cst_74 = arith.constant 2.000000e+00 : f32
    %286 = vector.broadcast %cst_74 : f32 to vector<1x8xf32>
    %287 = arith.mulf %286, %285 : vector<1x8xf32>
    %cst_75 = arith.constant -1.28893387 : f32
    %288 = vector.broadcast %cst_75 : f32 to vector<1x8xf32>
    %289 = arith.mulf %17, %288 : vector<1x8xf32>
    %cst_76 = arith.constant -1.89102507 : f32
    %290 = vector.broadcast %cst_76 : f32 to vector<1x8xf32>
    %291 = arith.mulf %18, %290 : vector<1x8xf32>
    %292 = arith.subf %289, %291 : vector<1x8xf32>
    %cst_77 = arith.constant 2.000000e+00 : f32
    %293 = vector.broadcast %cst_77 : f32 to vector<1x8xf32>
    %294 = arith.mulf %293, %292 : vector<1x8xf32>
    %295 = arith.mulf %16, %280 : vector<1x8xf32>
    %cst_78 = arith.constant -1.89102507 : f32
    %296 = vector.broadcast %cst_78 : f32 to vector<1x8xf32>
    %297 = arith.addf %296, %295 : vector<1x8xf32>
    %298 = arith.mulf %18, %294 : vector<1x8xf32>
    %299 = arith.mulf %19, %287 : vector<1x8xf32>
    %300 = arith.subf %298, %299 : vector<1x8xf32>
    %301 = arith.addf %297, %300 : vector<1x8xf32>
    %302 = arith.mulf %16, %287 : vector<1x8xf32>
    %cst_79 = arith.constant -1.28893387 : f32
    %303 = vector.broadcast %cst_79 : f32 to vector<1x8xf32>
    %304 = arith.addf %303, %302 : vector<1x8xf32>
    %305 = arith.mulf %19, %280 : vector<1x8xf32>
    %306 = arith.mulf %17, %294 : vector<1x8xf32>
    %307 = arith.subf %305, %306 : vector<1x8xf32>
    %308 = arith.addf %304, %307 : vector<1x8xf32>
    %309 = arith.mulf %16, %294 : vector<1x8xf32>
    %cst_80 = arith.constant 0.133606911 : f32
    %310 = vector.broadcast %cst_80 : f32 to vector<1x8xf32>
    %311 = arith.addf %310, %309 : vector<1x8xf32>
    %312 = arith.mulf %17, %287 : vector<1x8xf32>
    %313 = arith.mulf %18, %280 : vector<1x8xf32>
    %314 = arith.subf %312, %313 : vector<1x8xf32>
    %315 = arith.addf %311, %314 : vector<1x8xf32>
    %c3_81 = arith.constant 3 : index
    %c0_82 = arith.constant 0 : index
    %316 = vector.load %arg4[%c3_81, %c0_82] : memref<24x8xf32, #tpu.memory_space<vmem>>, vector<1x8xf32>
    %317 = arith.mulf %301, %316 : vector<1x8xf32>
    %318 = arith.addf %20, %317 : vector<1x8xf32>
    %319 = arith.mulf %308, %316 : vector<1x8xf32>
    %320 = arith.addf %21, %319 : vector<1x8xf32>
    %321 = arith.mulf %315, %316 : vector<1x8xf32>
    %322 = arith.addf %22, %321 : vector<1x8xf32>
    %c3_83 = arith.constant 3 : index
    %c0_84 = arith.constant 0 : index
    %323 = vector.load %arg5[%c3_83, %c0_84] : memref<72x8xf32, #tpu.memory_space<vmem>>, vector<1x8xf32>
    tpu.vector_store %arg5[%c3_83, %c0_84], %318 {strides = array<i32>} : memref<72x8xf32, #tpu.memory_space<vmem>>, vector<1x8xf32>,
    %c27 = arith.constant 27 : index
    %c0_85 = arith.constant 0 : index
    %324 = vector.load %arg5[%c27, %c0_85] : memref<72x8xf32, #tpu.memory_space<vmem>>, vector<1x8xf32>
    tpu.vector_store %arg5[%c27, %c0_85], %320 {strides = array<i32>} : memref<72x8xf32, #tpu.memory_space<vmem>>, vector<1x8xf32>,
    %c51 = arith.constant 51 : index
    %c0_86 = arith.constant 0 : index
    %325 = vector.load %arg5[%c51, %c0_86] : memref<72x8xf32, #tpu.memory_space<vmem>>, vector<1x8xf32>
    tpu.vector_store %arg5[%c51, %c0_86], %322 {strides = array<i32>} : memref<72x8xf32, #tpu.memory_space<vmem>>, vector<1x8xf32>,
    %c16 = arith.constant 16 : index
    %c0_87 = arith.constant 0 : index
    %326 = vector.load %arg3[%c16, %c0_87] : memref<96x8xf32, #tpu.memory_space<vmem>>, vector<1x8xf32>
    %c17 = arith.constant 17 : index
    %c0_88 = arith.constant 0 : index
    %327 = vector.load %arg3[%c17, %c0_88] : memref<96x8xf32, #tpu.memory_space<vmem>>, vector<1x8xf32>
    %c18 = arith.constant 18 : index
    %c0_89 = arith.constant 0 : index
    %328 = vector.load %arg3[%c18, %c0_89] : memref<96x8xf32, #tpu.memory_space<vmem>>, vector<1x8xf32>
    %c19 = arith.constant 19 : index
    %c0_90 = arith.constant 0 : index
    %329 = vector.load %arg3[%c19, %c0_90] : memref<96x8xf32, #tpu.memory_space<vmem>>, vector<1x8xf32>
    %330 = arith.mulf %326, %326 : vector<1x8xf32>
    %331 = arith.mulf %327, %327 : vector<1x8xf32>
    %332 = arith.addf %330, %331 : vector<1x8xf32>
    %333 = arith.mulf %328, %328 : vector<1x8xf32>
    %334 = arith.addf %332, %333 : vector<1x8xf32>
    %335 = arith.mulf %329, %329 : vector<1x8xf32>
    %336 = arith.addf %334, %335 : vector<1x8xf32>
    %337 = math.sqrt %336 : vector<1x8xf32>
    %cst_91 = arith.constant 9.99999993E-9 : f32
    %338 = vector.broadcast %cst_91 : f32 to vector<1x8xf32>
    %339 = arith.addf %337, %338 : vector<1x8xf32>
    %cst_92 = arith.constant 1.000000e+00 : f32
    %340 = vector.broadcast %cst_92 : f32 to vector<1x8xf32>
    %341 = arith.divf %340, %339 : vector<1x8xf32>
    %342 = arith.mulf %326, %341 : vector<1x8xf32>
    %343 = arith.mulf %327, %341 : vector<1x8xf32>
    %344 = arith.mulf %328, %341 : vector<1x8xf32>
    %345 = arith.mulf %329, %341 : vector<1x8xf32>
    %346 = arith.mulf %52, %342 : vector<1x8xf32>
    %347 = arith.mulf %59, %343 : vector<1x8xf32>
    %348 = arith.subf %346, %347 : vector<1x8xf32>
    %349 = arith.mulf %66, %344 : vector<1x8xf32>
    %350 = arith.subf %348, %349 : vector<1x8xf32>
    %351 = arith.mulf %73, %345 : vector<1x8xf32>
    %352 = arith.subf %350, %351 : vector<1x8xf32>
    %353 = arith.mulf %52, %343 : vector<1x8xf32>
    %354 = arith.mulf %59, %342 : vector<1x8xf32>
    %355 = arith.addf %353, %354 : vector<1x8xf32>
    %356 = arith.mulf %66, %345 : vector<1x8xf32>
    %357 = arith.addf %355, %356 : vector<1x8xf32>
    %358 = arith.mulf %73, %344 : vector<1x8xf32>
    %359 = arith.subf %357, %358 : vector<1x8xf32>
    %360 = arith.mulf %52, %344 : vector<1x8xf32>
    %361 = arith.mulf %59, %345 : vector<1x8xf32>
    %362 = arith.subf %360, %361 : vector<1x8xf32>
    %363 = arith.mulf %66, %342 : vector<1x8xf32>
    %364 = arith.addf %362, %363 : vector<1x8xf32>
    %365 = arith.mulf %73, %343 : vector<1x8xf32>
    %366 = arith.addf %364, %365 : vector<1x8xf32>
    %367 = arith.mulf %52, %345 : vector<1x8xf32>
    %368 = arith.mulf %59, %344 : vector<1x8xf32>
    %369 = arith.addf %367, %368 : vector<1x8xf32>
    %370 = arith.mulf %66, %343 : vector<1x8xf32>
    %371 = arith.subf %369, %370 : vector<1x8xf32>
    %372 = arith.mulf %73, %342 : vector<1x8xf32>
    %373 = arith.addf %371, %372 : vector<1x8xf32>
    %cst_93 = arith.constant 1.74480736 : f32
    %374 = vector.broadcast %cst_93 : f32 to vector<1x8xf32>
    %375 = arith.mulf %66, %374 : vector<1x8xf32>
    %cst_94 = arith.constant 0.239296287 : f32
    %376 = vector.broadcast %cst_94 : f32 to vector<1x8xf32>
    %377 = arith.mulf %73, %376 : vector<1x8xf32>
    %378 = arith.subf %375, %377 : vector<1x8xf32>
    %cst_95 = arith.constant 2.000000e+00 : f32
    %379 = vector.broadcast %cst_95 : f32 to vector<1x8xf32>
    %380 = arith.mulf %379, %378 : vector<1x8xf32>
    %cst_96 = arith.constant -1.15303922 : f32
    %381 = vector.broadcast %cst_96 : f32 to vector<1x8xf32>
    %382 = arith.mulf %73, %381 : vector<1x8xf32>
    %cst_97 = arith.constant 1.74480736 : f32
    %383 = vector.broadcast %cst_97 : f32 to vector<1x8xf32>
    %384 = arith.mulf %59, %383 : vector<1x8xf32>
    %385 = arith.subf %382, %384 : vector<1x8xf32>
    %cst_98 = arith.constant 2.000000e+00 : f32
    %386 = vector.broadcast %cst_98 : f32 to vector<1x8xf32>
    %387 = arith.mulf %386, %385 : vector<1x8xf32>
    %cst_99 = arith.constant 0.239296287 : f32
    %388 = vector.broadcast %cst_99 : f32 to vector<1x8xf32>
    %389 = arith.mulf %59, %388 : vector<1x8xf32>
    %cst_100 = arith.constant -1.15303922 : f32
    %390 = vector.broadcast %cst_100 : f32 to vector<1x8xf32>
    %391 = arith.mulf %66, %390 : vector<1x8xf32>
    %392 = arith.subf %389, %391 : vector<1x8xf32>
    %cst_101 = arith.constant 2.000000e+00 : f32
    %393 = vector.broadcast %cst_101 : f32 to vector<1x8xf32>
    %394 = arith.mulf %393, %392 : vector<1x8xf32>
    %395 = arith.mulf %52, %380 : vector<1x8xf32>
    %cst_102 = arith.constant -1.15303922 : f32
    %396 = vector.broadcast %cst_102 : f32 to vector<1x8xf32>
    %397 = arith.addf %396, %395 : vector<1x8xf32>
    %398 = arith.mulf %66, %394 : vector<1x8xf32>
    %399 = arith.mulf %73, %387 : vector<1x8xf32>
    %400 = arith.subf %398, %399 : vector<1x8xf32>
    %401 = arith.addf %397, %400 : vector<1x8xf32>
    %402 = arith.mulf %52, %387 : vector<1x8xf32>
    %cst_103 = arith.constant 0.239296287 : f32
    %403 = vector.broadcast %cst_103 : f32 to vector<1x8xf32>
    %404 = arith.addf %403, %402 : vector<1x8xf32>
    %405 = arith.mulf %73, %380 : vector<1x8xf32>
    %406 = arith.mulf %59, %394 : vector<1x8xf32>
    %407 = arith.subf %405, %406 : vector<1x8xf32>
    %408 = arith.addf %404, %407 : vector<1x8xf32>
    %409 = arith.mulf %52, %394 : vector<1x8xf32>
    %cst_104 = arith.constant 1.74480736 : f32
    %410 = vector.broadcast %cst_104 : f32 to vector<1x8xf32>
    %411 = arith.addf %410, %409 : vector<1x8xf32>
    %412 = arith.mulf %59, %387 : vector<1x8xf32>
    %413 = arith.mulf %66, %380 : vector<1x8xf32>
    %414 = arith.subf %412, %413 : vector<1x8xf32>
    %415 = arith.addf %411, %414 : vector<1x8xf32>
    %c4_105 = arith.constant 4 : index
    %c0_106 = arith.constant 0 : index
    %416 = vector.load %arg4[%c4_105, %c0_106] : memref<24x8xf32, #tpu.memory_space<vmem>>, vector<1x8xf32>
    %417 = arith.mulf %401, %416 : vector<1x8xf32>
    %418 = arith.addf %118, %417 : vector<1x8xf32>
    %419 = arith.mulf %408, %416 : vector<1x8xf32>
    %420 = arith.addf %120, %419 : vector<1x8xf32>
    %421 = arith.mulf %415, %416 : vector<1x8xf32>
    %422 = arith.addf %122, %421 : vector<1x8xf32>
    %c4_107 = arith.constant 4 : index
    %c0_108 = arith.constant 0 : index
    %423 = vector.load %arg5[%c4_107, %c0_108] : memref<72x8xf32, #tpu.memory_space<vmem>>, vector<1x8xf32>
    tpu.vector_store %arg5[%c4_107, %c0_108], %418 {strides = array<i32>} : memref<72x8xf32, #tpu.memory_space<vmem>>, vector<1x8xf32>,
    %c28 = arith.constant 28 : index
    %c0_109 = arith.constant 0 : index
    %424 = vector.load %arg5[%c28, %c0_109] : memref<72x8xf32, #tpu.memory_space<vmem>>, vector<1x8xf32>
    tpu.vector_store %arg5[%c28, %c0_109], %420 {strides = array<i32>} : memref<72x8xf32, #tpu.memory_space<vmem>>, vector<1x8xf32>,
    %c52 = arith.constant 52 : index
    %c0_110 = arith.constant 0 : index
    %425 = vector.load %arg5[%c52, %c0_110] : memref<72x8xf32, #tpu.memory_space<vmem>>, vector<1x8xf32>
    tpu.vector_store %arg5[%c52, %c0_110], %422 {strides = array<i32>} : memref<72x8xf32, #tpu.memory_space<vmem>>, vector<1x8xf32>,
    %c20 = arith.constant 20 : index
    %c0_111 = arith.constant 0 : index
    %426 = vector.load %arg3[%c20, %c0_111] : memref<96x8xf32, #tpu.memory_space<vmem>>, vector<1x8xf32>
    %c21 = arith.constant 21 : index
    %c0_112 = arith.constant 0 : index
    %427 = vector.load %arg3[%c21, %c0_112] : memref<96x8xf32, #tpu.memory_space<vmem>>, vector<1x8xf32>
    %c22 = arith.constant 22 : index
    %c0_113 = arith.constant 0 : index
    %428 = vector.load %arg3[%c22, %c0_113] : memref<96x8xf32, #tpu.memory_space<vmem>>, vector<1x8xf32>
    %c23 = arith.constant 23 : index
    %c0_114 = arith.constant 0 : index
    %429 = vector.load %arg3[%c23, %c0_114] : memref<96x8xf32, #tpu.memory_space<vmem>>, vector<1x8xf32>
    %430 = arith.mulf %426, %426 : vector<1x8xf32>
    %431 = arith.mulf %427, %427 : vector<1x8xf32>
    %432 = arith.addf %430, %431 : vector<1x8xf32>
    %433 = arith.mulf %428, %428 : vector<1x8xf32>
    %434 = arith.addf %432, %433 : vector<1x8xf32>
    %435 = arith.mulf %429, %429 : vector<1x8xf32>
    %436 = arith.addf %434, %435 : vector<1x8xf32>
    %437 = math.sqrt %436 : vector<1x8xf32>
    %cst_115 = arith.constant 9.99999993E-9 : f32
    %438 = vector.broadcast %cst_115 : f32 to vector<1x8xf32>
    %439 = arith.addf %437, %438 : vector<1x8xf32>
    %cst_116 = arith.constant 1.000000e+00 : f32
    %440 = vector.broadcast %cst_116 : f32 to vector<1x8xf32>
    %441 = arith.divf %440, %439 : vector<1x8xf32>
    %442 = arith.mulf %426, %441 : vector<1x8xf32>
    %443 = arith.mulf %427, %441 : vector<1x8xf32>
    %444 = arith.mulf %428, %441 : vector<1x8xf32>
    %445 = arith.mulf %429, %441 : vector<1x8xf32>
    %446 = arith.mulf %152, %442 : vector<1x8xf32>
    %447 = arith.mulf %159, %443 : vector<1x8xf32>
    %448 = arith.subf %446, %447 : vector<1x8xf32>
    %449 = arith.mulf %166, %444 : vector<1x8xf32>
    %450 = arith.subf %448, %449 : vector<1x8xf32>
    %451 = arith.mulf %173, %445 : vector<1x8xf32>
    %452 = arith.subf %450, %451 : vector<1x8xf32>
    %453 = arith.mulf %152, %443 : vector<1x8xf32>
    %454 = arith.mulf %159, %442 : vector<1x8xf32>
    %455 = arith.addf %453, %454 : vector<1x8xf32>
    %456 = arith.mulf %166, %445 : vector<1x8xf32>
    %457 = arith.addf %455, %456 : vector<1x8xf32>
    %458 = arith.mulf %173, %444 : vector<1x8xf32>
    %459 = arith.subf %457, %458 : vector<1x8xf32>
    %460 = arith.mulf %152, %444 : vector<1x8xf32>
    %461 = arith.mulf %159, %445 : vector<1x8xf32>
    %462 = arith.subf %460, %461 : vector<1x8xf32>
    %463 = arith.mulf %166, %442 : vector<1x8xf32>
    %464 = arith.addf %462, %463 : vector<1x8xf32>
    %465 = arith.mulf %173, %443 : vector<1x8xf32>
    %466 = arith.addf %464, %465 : vector<1x8xf32>
    %467 = arith.mulf %152, %445 : vector<1x8xf32>
    %468 = arith.mulf %159, %444 : vector<1x8xf32>
    %469 = arith.addf %467, %468 : vector<1x8xf32>
    %470 = arith.mulf %166, %443 : vector<1x8xf32>
    %471 = arith.subf %469, %470 : vector<1x8xf32>
    %472 = arith.mulf %173, %442 : vector<1x8xf32>
    %473 = arith.addf %471, %472 : vector<1x8xf32>
    %cst_117 = arith.constant -0.472838074 : f32
    %474 = vector.broadcast %cst_117 : f32 to vector<1x8xf32>
    %475 = arith.mulf %166, %474 : vector<1x8xf32>
    %cst_118 = arith.constant 5.950530e-01 : f32
    %476 = vector.broadcast %cst_118 : f32 to vector<1x8xf32>
    %477 = arith.mulf %173, %476 : vector<1x8xf32>
    %478 = arith.subf %475, %477 : vector<1x8xf32>
    %cst_119 = arith.constant 2.000000e+00 : f32
    %479 = vector.broadcast %cst_119 : f32 to vector<1x8xf32>
    %480 = arith.mulf %479, %478 : vector<1x8xf32>
    %cst_120 = arith.constant 0.50501889 : f32
    %481 = vector.broadcast %cst_120 : f32 to vector<1x8xf32>
    %482 = arith.mulf %173, %481 : vector<1x8xf32>
    %cst_121 = arith.constant -0.472838074 : f32
    %483 = vector.broadcast %cst_121 : f32 to vector<1x8xf32>
    %484 = arith.mulf %159, %483 : vector<1x8xf32>
    %485 = arith.subf %482, %484 : vector<1x8xf32>
    %cst_122 = arith.constant 2.000000e+00 : f32
    %486 = vector.broadcast %cst_122 : f32 to vector<1x8xf32>
    %487 = arith.mulf %486, %485 : vector<1x8xf32>
    %cst_123 = arith.constant 5.950530e-01 : f32
    %488 = vector.broadcast %cst_123 : f32 to vector<1x8xf32>
    %489 = arith.mulf %159, %488 : vector<1x8xf32>
    %cst_124 = arith.constant 0.50501889 : f32
    %490 = vector.broadcast %cst_124 : f32 to vector<1x8xf32>
    %491 = arith.mulf %166, %490 : vector<1x8xf32>
    %492 = arith.subf %489, %491 : vector<1x8xf32>
    %cst_125 = arith.constant 2.000000e+00 : f32
    %493 = vector.broadcast %cst_125 : f32 to vector<1x8xf32>
    %494 = arith.mulf %493, %492 : vector<1x8xf32>
    %495 = arith.mulf %152, %480 : vector<1x8xf32>
    %cst_126 = arith.constant 0.50501889 : f32
    %496 = vector.broadcast %cst_126 : f32 to vector<1x8xf32>
    %497 = arith.addf %496, %495 : vector<1x8xf32>
    %498 = arith.mulf %166, %494 : vector<1x8xf32>
    %499 = arith.mulf %173, %487 : vector<1x8xf32>
    %500 = arith.subf %498, %499 : vector<1x8xf32>
    %501 = arith.addf %497, %500 : vector<1x8xf32>
    %502 = arith.mulf %152, %487 : vector<1x8xf32>
    %cst_127 = arith.constant 5.950530e-01 : f32
    %503 = vector.broadcast %cst_127 : f32 to vector<1x8xf32>
    %504 = arith.addf %503, %502 : vector<1x8xf32>
    %505 = arith.mulf %173, %480 : vector<1x8xf32>
    %506 = arith.mulf %159, %494 : vector<1x8xf32>
    %507 = arith.subf %505, %506 : vector<1x8xf32>
    %508 = arith.addf %504, %507 : vector<1x8xf32>
    %509 = arith.mulf %152, %494 : vector<1x8xf32>
    %cst_128 = arith.constant -0.472838074 : f32
    %510 = vector.broadcast %cst_128 : f32 to vector<1x8xf32>
    %511 = arith.addf %510, %509 : vector<1x8xf32>
    %512 = arith.mulf %159, %487 : vector<1x8xf32>
    %513 = arith.mulf %166, %480 : vector<1x8xf32>
    %514 = arith.subf %512, %513 : vector<1x8xf32>
    %515 = arith.addf %511, %514 : vector<1x8xf32>
    %c5_129 = arith.constant 5 : index
    %c0_130 = arith.constant 0 : index
    %516 = vector.load %arg4[%c5_129, %c0_130] : memref<24x8xf32, #tpu.memory_space<vmem>>, vector<1x8xf32>
    %517 = arith.mulf %501, %516 : vector<1x8xf32>
    %518 = arith.addf %218, %517 : vector<1x8xf32>
    %519 = arith.mulf %508, %516 : vector<1x8xf32>
    %520 = arith.addf %220, %519 : vector<1x8xf32>
    %521 = arith.mulf %515, %516 : vector<1x8xf32>
    %522 = arith.addf %222, %521 : vector<1x8xf32>
    %c5_131 = arith.constant 5 : index
    %c0_132 = arith.constant 0 : index
    %523 = vector.load %arg5[%c5_131, %c0_132] : memref<72x8xf32, #tpu.memory_space<vmem>>, vector<1x8xf32>
    tpu.vector_store %arg5[%c5_131, %c0_132], %518 {strides = array<i32>} : memref<72x8xf32, #tpu.memory_space<vmem>>, vector<1x8xf32>,
    %c29 = arith.constant 29 : index
    %c0_133 = arith.constant 0 : index
    %524 = vector.load %arg5[%c29, %c0_133] : memref<72x8xf32, #tpu.memory_space<vmem>>, vector<1x8xf32>
    tpu.vector_store %arg5[%c29, %c0_133], %520 {strides = array<i32>} : memref<72x8xf32, #tpu.memory_space<vmem>>, vector<1x8xf32>,
    %c53 = arith.constant 53 : index
    %c0_134 = arith.constant 0 : index
    %525 = vector.load %arg5[%c53, %c0_134] : memref<72x8xf32, #tpu.memory_space<vmem>>, vector<1x8xf32>
    tpu.vector_store %arg5[%c53, %c0_134], %522 {strides = array<i32>} : memref<72x8xf32, #tpu.memory_space<vmem>>, vector<1x8xf32>,
    %c24_135 = arith.constant 24 : index
    %c0_136 = arith.constant 0 : index
    %526 = vector.load %arg3[%c24_135, %c0_136] : memref<96x8xf32, #tpu.memory_space<vmem>>, vector<1x8xf32>
    %c25_137 = arith.constant 25 : index
    %c0_138 = arith.constant 0 : index
    %527 = vector.load %arg3[%c25_137, %c0_138] : memref<96x8xf32, #tpu.memory_space<vmem>>, vector<1x8xf32>
    %c26_139 = arith.constant 26 : index
    %c0_140 = arith.constant 0 : index
    %528 = vector.load %arg3[%c26_139, %c0_140] : memref<96x8xf32, #tpu.memory_space<vmem>>, vector<1x8xf32>
    %c27_141 = arith.constant 27 : index
    %c0_142 = arith.constant 0 : index
    %529 = vector.load %arg3[%c27_141, %c0_142] : memref<96x8xf32, #tpu.memory_space<vmem>>, vector<1x8xf32>
    %530 = arith.mulf %526, %526 : vector<1x8xf32>
    %531 = arith.mulf %527, %527 : vector<1x8xf32>
    %532 = arith.addf %530, %531 : vector<1x8xf32>
    %533 = arith.mulf %528, %528 : vector<1x8xf32>
    %534 = arith.addf %532, %533 : vector<1x8xf32>
    %535 = arith.mulf %529, %529 : vector<1x8xf32>
    %536 = arith.addf %534, %535 : vector<1x8xf32>
    %537 = math.sqrt %536 : vector<1x8xf32>
    %cst_143 = arith.constant 9.99999993E-9 : f32
    %538 = vector.broadcast %cst_143 : f32 to vector<1x8xf32>
    %539 = arith.addf %537, %538 : vector<1x8xf32>
    %cst_144 = arith.constant 1.000000e+00 : f32
    %540 = vector.broadcast %cst_144 : f32 to vector<1x8xf32>
    %541 = arith.divf %540, %539 : vector<1x8xf32>
    %542 = arith.mulf %526, %541 : vector<1x8xf32>
    %543 = arith.mulf %527, %541 : vector<1x8xf32>
    %544 = arith.mulf %528, %541 : vector<1x8xf32>
    %545 = arith.mulf %529, %541 : vector<1x8xf32>
    %546 = arith.mulf %252, %542 : vector<1x8xf32>
    %547 = arith.mulf %259, %543 : vector<1x8xf32>
    %548 = arith.subf %546, %547 : vector<1x8xf32>
    %549 = arith.mulf %266, %544 : vector<1x8xf32>
    %550 = arith.subf %548, %549 : vector<1x8xf32>
    %551 = arith.mulf %273, %545 : vector<1x8xf32>
    %552 = arith.subf %550, %551 : vector<1x8xf32>
    %553 = arith.mulf %252, %543 : vector<1x8xf32>
    %554 = arith.mulf %259, %542 : vector<1x8xf32>
    %555 = arith.addf %553, %554 : vector<1x8xf32>
    %556 = arith.mulf %266, %545 : vector<1x8xf32>
    %557 = arith.addf %555, %556 : vector<1x8xf32>
    %558 = arith.mulf %273, %544 : vector<1x8xf32>
    %559 = arith.subf %557, %558 : vector<1x8xf32>
    %560 = arith.mulf %252, %544 : vector<1x8xf32>
    %561 = arith.mulf %259, %545 : vector<1x8xf32>
    %562 = arith.subf %560, %561 : vector<1x8xf32>
    %563 = arith.mulf %266, %542 : vector<1x8xf32>
    %564 = arith.addf %562, %563 : vector<1x8xf32>
    %565 = arith.mulf %273, %543 : vector<1x8xf32>
    %566 = arith.addf %564, %565 : vector<1x8xf32>
    %567 = arith.mulf %252, %545 : vector<1x8xf32>
    %568 = arith.mulf %259, %544 : vector<1x8xf32>
    %569 = arith.addf %567, %568 : vector<1x8xf32>
    %570 = arith.mulf %266, %543 : vector<1x8xf32>
    %571 = arith.subf %569, %570 : vector<1x8xf32>
    %572 = arith.mulf %273, %542 : vector<1x8xf32>
    %573 = arith.addf %571, %572 : vector<1x8xf32>
    %cst_145 = arith.constant -0.634164333 : f32
    %574 = vector.broadcast %cst_145 : f32 to vector<1x8xf32>
    %575 = arith.mulf %266, %574 : vector<1x8xf32>
    %cst_146 = arith.constant 0.361203402 : f32
    %576 = vector.broadcast %cst_146 : f32 to vector<1x8xf32>
    %577 = arith.mulf %273, %576 : vector<1x8xf32>
    %578 = arith.subf %575, %577 : vector<1x8xf32>
    %cst_147 = arith.constant 2.000000e+00 : f32
    %579 = vector.broadcast %cst_147 : f32 to vector<1x8xf32>
    %580 = arith.mulf %579, %578 : vector<1x8xf32>
    %cst_148 = arith.constant 0.915637493 : f32
    %581 = vector.broadcast %cst_148 : f32 to vector<1x8xf32>
    %582 = arith.mulf %273, %581 : vector<1x8xf32>
    %cst_149 = arith.constant -0.634164333 : f32
    %583 = vector.broadcast %cst_149 : f32 to vector<1x8xf32>
    %584 = arith.mulf %259, %583 : vector<1x8xf32>
    %585 = arith.subf %582, %584 : vector<1x8xf32>
    %cst_150 = arith.constant 2.000000e+00 : f32
    %586 = vector.broadcast %cst_150 : f32 to vector<1x8xf32>
    %587 = arith.mulf %586, %585 : vector<1x8xf32>
    %cst_151 = arith.constant 0.361203402 : f32
    %588 = vector.broadcast %cst_151 : f32 to vector<1x8xf32>
    %589 = arith.mulf %259, %588 : vector<1x8xf32>
    %cst_152 = arith.constant 0.915637493 : f32
    %590 = vector.broadcast %cst_152 : f32 to vector<1x8xf32>
    %591 = arith.mulf %266, %590 : vector<1x8xf32>
    %592 = arith.subf %589, %591 : vector<1x8xf32>
    %cst_153 = arith.constant 2.000000e+00 : f32
    %593 = vector.broadcast %cst_153 : f32 to vector<1x8xf32>
    %594 = arith.mulf %593, %592 : vector<1x8xf32>
    %595 = arith.mulf %252, %580 : vector<1x8xf32>
    %cst_154 = arith.constant 0.915637493 : f32
    %596 = vector.broadcast %cst_154 : f32 to vector<1x8xf32>
    %597 = arith.addf %596, %595 : vector<1x8xf32>
    %598 = arith.mulf %266, %594 : vector<1x8xf32>
    %599 = arith.mulf %273, %587 : vector<1x8xf32>
    %600 = arith.subf %598, %599 : vector<1x8xf32>
    %601 = arith.addf %597, %600 : vector<1x8xf32>
    %602 = arith.mulf %252, %587 : vector<1x8xf32>
    %cst_155 = arith.constant 0.361203402 : f32
    %603 = vector.broadcast %cst_155 : f32 to vector<1x8xf32>
    %604 = arith.addf %603, %602 : vector<1x8xf32>
    %605 = arith.mulf %273, %580 : vector<1x8xf32>
    %606 = arith.mulf %259, %594 : vector<1x8xf32>
    %607 = arith.subf %605, %606 : vector<1x8xf32>
    %608 = arith.addf %604, %607 : vector<1x8xf32>
    %609 = arith.mulf %252, %594 : vector<1x8xf32>
    %cst_156 = arith.constant -0.634164333 : f32
    %610 = vector.broadcast %cst_156 : f32 to vector<1x8xf32>
    %611 = arith.addf %610, %609 : vector<1x8xf32>
    %612 = arith.mulf %259, %587 : vector<1x8xf32>
    %613 = arith.mulf %266, %580 : vector<1x8xf32>
    %614 = arith.subf %612, %613 : vector<1x8xf32>
    %615 = arith.addf %611, %614 : vector<1x8xf32>
    %c6_157 = arith.constant 6 : index
    %c0_158 = arith.constant 0 : index
    %616 = vector.load %arg4[%c6_157, %c0_158] : memref<24x8xf32, #tpu.memory_space<vmem>>, vector<1x8xf32>
    %617 = arith.mulf %601, %616 : vector<1x8xf32>
    %618 = arith.addf %318, %617 : vector<1x8xf32>
    %619 = arith.mulf %608, %616 : vector<1x8xf32>
    %620 = arith.addf %320, %619 : vector<1x8xf32>
    %621 = arith.mulf %615, %616 : vector<1x8xf32>
    %622 = arith.addf %322, %621 : vector<1x8xf32>
    %c6_159 = arith.constant 6 : index
    %c0_160 = arith.constant 0 : index
    %623 = vector.load %arg5[%c6_159, %c0_160] : memref<72x8xf32, #tpu.memory_space<vmem>>, vector<1x8xf32>
    tpu.vector_store %arg5[%c6_159, %c0_160], %618 {strides = array<i32>} : memref<72x8xf32, #tpu.memory_space<vmem>>, vector<1x8xf32>,
    %c30 = arith.constant 30 : index
    %c0_161 = arith.constant 0 : index
    %624 = vector.load %arg5[%c30, %c0_161] : memref<72x8xf32, #tpu.memory_space<vmem>>, vector<1x8xf32>
    tpu.vector_store %arg5[%c30, %c0_161], %620 {strides = array<i32>} : memref<72x8xf32, #tpu.memory_space<vmem>>, vector<1x8xf32>,
    %c54 = arith.constant 54 : index
    %c0_162 = arith.constant 0 : index
    %625 = vector.load %arg5[%c54, %c0_162] : memref<72x8xf32, #tpu.memory_space<vmem>>, vector<1x8xf32>
    tpu.vector_store %arg5[%c54, %c0_162], %622 {strides = array<i32>} : memref<72x8xf32, #tpu.memory_space<vmem>>, vector<1x8xf32>,
    %c28_163 = arith.constant 28 : index
    %c0_164 = arith.constant 0 : index
    %626 = vector.load %arg3[%c28_163, %c0_164] : memref<96x8xf32, #tpu.memory_space<vmem>>, vector<1x8xf32>
    %c29_165 = arith.constant 29 : index
    %c0_166 = arith.constant 0 : index
    %627 = vector.load %arg3[%c29_165, %c0_166] : memref<96x8xf32, #tpu.memory_space<vmem>>, vector<1x8xf32>
    %c30_167 = arith.constant 30 : index
    %c0_168 = arith.constant 0 : index
    %628 = vector.load %arg3[%c30_167, %c0_168] : memref<96x8xf32, #tpu.memory_space<vmem>>, vector<1x8xf32>
    %c31 = arith.constant 31 : index
    %c0_169 = arith.constant 0 : index
    %629 = vector.load %arg3[%c31, %c0_169] : memref<96x8xf32, #tpu.memory_space<vmem>>, vector<1x8xf32>
    %630 = arith.mulf %626, %626 : vector<1x8xf32>
    %631 = arith.mulf %627, %627 : vector<1x8xf32>
    %632 = arith.addf %630, %631 : vector<1x8xf32>
    %633 = arith.mulf %628, %628 : vector<1x8xf32>
    %634 = arith.addf %632, %633 : vector<1x8xf32>
    %635 = arith.mulf %629, %629 : vector<1x8xf32>
    %636 = arith.addf %634, %635 : vector<1x8xf32>
    %637 = math.sqrt %636 : vector<1x8xf32>
    %cst_170 = arith.constant 9.99999993E-9 : f32
    %638 = vector.broadcast %cst_170 : f32 to vector<1x8xf32>
    %639 = arith.addf %637, %638 : vector<1x8xf32>
    %cst_171 = arith.constant 1.000000e+00 : f32
    %640 = vector.broadcast %cst_171 : f32 to vector<1x8xf32>
    %641 = arith.divf %640, %639 : vector<1x8xf32>
    %642 = arith.mulf %626, %641 : vector<1x8xf32>
    %643 = arith.mulf %627, %641 : vector<1x8xf32>
    %644 = arith.mulf %628, %641 : vector<1x8xf32>
    %645 = arith.mulf %629, %641 : vector<1x8xf32>
    %646 = arith.mulf %352, %642 : vector<1x8xf32>
    %647 = arith.mulf %359, %643 : vector<1x8xf32>
    %648 = arith.subf %646, %647 : vector<1x8xf32>
    %649 = arith.mulf %366, %644 : vector<1x8xf32>
    %650 = arith.subf %648, %649 : vector<1x8xf32>
    %651 = arith.mulf %373, %645 : vector<1x8xf32>
    %652 = arith.subf %650, %651 : vector<1x8xf32>
    %653 = arith.mulf %352, %643 : vector<1x8xf32>
    %654 = arith.mulf %359, %642 : vector<1x8xf32>
    %655 = arith.addf %653, %654 : vector<1x8xf32>
    %656 = arith.mulf %366, %645 : vector<1x8xf32>
    %657 = arith.addf %655, %656 : vector<1x8xf32>
    %658 = arith.mulf %373, %644 : vector<1x8xf32>
    %659 = arith.subf %657, %658 : vector<1x8xf32>
    %660 = arith.mulf %352, %644 : vector<1x8xf32>
    %661 = arith.mulf %359, %645 : vector<1x8xf32>
    %662 = arith.subf %660, %661 : vector<1x8xf32>
    %663 = arith.mulf %366, %642 : vector<1x8xf32>
    %664 = arith.addf %662, %663 : vector<1x8xf32>
    %665 = arith.mulf %373, %643 : vector<1x8xf32>
    %666 = arith.addf %664, %665 : vector<1x8xf32>
    %667 = arith.mulf %352, %645 : vector<1x8xf32>
    %668 = arith.mulf %359, %644 : vector<1x8xf32>
    %669 = arith.addf %667, %668 : vector<1x8xf32>
    %670 = arith.mulf %366, %643 : vector<1x8xf32>
    %671 = arith.subf %669, %670 : vector<1x8xf32>
    %672 = arith.mulf %373, %642 : vector<1x8xf32>
    %673 = arith.addf %671, %672 : vector<1x8xf32>
    %cst_172 = arith.constant 1.06285346 : f32
    %674 = vector.broadcast %cst_172 : f32 to vector<1x8xf32>
    %675 = arith.mulf %366, %674 : vector<1x8xf32>
    %cst_173 = arith.constant 0.758387923 : f32
    %676 = vector.broadcast %cst_173 : f32 to vector<1x8xf32>
    %677 = arith.mulf %373, %676 : vector<1x8xf32>
    %678 = arith.subf %675, %677 : vector<1x8xf32>
    %cst_174 = arith.constant 2.000000e+00 : f32
    %679 = vector.broadcast %cst_174 : f32 to vector<1x8xf32>
    %680 = arith.mulf %679, %678 : vector<1x8xf32>
    %cst_175 = arith.constant -8.704910e-01 : f32
    %681 = vector.broadcast %cst_175 : f32 to vector<1x8xf32>
    %682 = arith.mulf %373, %681 : vector<1x8xf32>
    %cst_176 = arith.constant 1.06285346 : f32
    %683 = vector.broadcast %cst_176 : f32 to vector<1x8xf32>
    %684 = arith.mulf %359, %683 : vector<1x8xf32>
    %685 = arith.subf %682, %684 : vector<1x8xf32>
    %cst_177 = arith.constant 2.000000e+00 : f32
    %686 = vector.broadcast %cst_177 : f32 to vector<1x8xf32>
    %687 = arith.mulf %686, %685 : vector<1x8xf32>
    %cst_178 = arith.constant 0.758387923 : f32
    %688 = vector.broadcast %cst_178 : f32 to vector<1x8xf32>
    %689 = arith.mulf %359, %688 : vector<1x8xf32>
    %cst_179 = arith.constant -8.704910e-01 : f32
    %690 = vector.broadcast %cst_179 : f32 to vector<1x8xf32>
    %691 = arith.mulf %366, %690 : vector<1x8xf32>
    %692 = arith.subf %689, %691 : vector<1x8xf32>
    %cst_180 = arith.constant 2.000000e+00 : f32
    %693 = vector.broadcast %cst_180 : f32 to vector<1x8xf32>
    %694 = arith.mulf %693, %692 : vector<1x8xf32>
    %695 = arith.mulf %352, %680 : vector<1x8xf32>
    %cst_181 = arith.constant -8.704910e-01 : f32
    %696 = vector.broadcast %cst_181 : f32 to vector<1x8xf32>
    %697 = arith.addf %696, %695 : vector<1x8xf32>
    %698 = arith.mulf %366, %694 : vector<1x8xf32>
    %699 = arith.mulf %373, %687 : vector<1x8xf32>
    %700 = arith.subf %698, %699 : vector<1x8xf32>
    %701 = arith.addf %697, %700 : vector<1x8xf32>
    %702 = arith.mulf %352, %687 : vector<1x8xf32>
    %cst_182 = arith.constant 0.758387923 : f32
    %703 = vector.broadcast %cst_182 : f32 to vector<1x8xf32>
    %704 = arith.addf %703, %702 : vector<1x8xf32>
    %705 = arith.mulf %373, %680 : vector<1x8xf32>
    %706 = arith.mulf %359, %694 : vector<1x8xf32>
    %707 = arith.subf %705, %706 : vector<1x8xf32>
    %708 = arith.addf %704, %707 : vector<1x8xf32>
    %709 = arith.mulf %352, %694 : vector<1x8xf32>
    %cst_183 = arith.constant 1.06285346 : f32
    %710 = vector.broadcast %cst_183 : f32 to vector<1x8xf32>
    %711 = arith.addf %710, %709 : vector<1x8xf32>
    %712 = arith.mulf %359, %687 : vector<1x8xf32>
    %713 = arith.mulf %366, %680 : vector<1x8xf32>
    %714 = arith.subf %712, %713 : vector<1x8xf32>
    %715 = arith.addf %711, %714 : vector<1x8xf32>
    %c7_184 = arith.constant 7 : index
    %c0_185 = arith.constant 0 : index
    %716 = vector.load %arg4[%c7_184, %c0_185] : memref<24x8xf32, #tpu.memory_space<vmem>>, vector<1x8xf32>
    %717 = arith.mulf %701, %716 : vector<1x8xf32>
    %718 = arith.addf %418, %717 : vector<1x8xf32>
    %719 = arith.mulf %708, %716 : vector<1x8xf32>
    %720 = arith.addf %420, %719 : vector<1x8xf32>
    %721 = arith.mulf %715, %716 : vector<1x8xf32>
    %722 = arith.addf %422, %721 : vector<1x8xf32>
    %c7_186 = arith.constant 7 : index
    %c0_187 = arith.constant 0 : index
    %723 = vector.load %arg5[%c7_186, %c0_187] : memref<72x8xf32, #tpu.memory_space<vmem>>, vector<1x8xf32>
    tpu.vector_store %arg5[%c7_186, %c0_187], %718 {strides = array<i32>} : memref<72x8xf32, #tpu.memory_space<vmem>>, vector<1x8xf32>,
    %c31_188 = arith.constant 31 : index
    %c0_189 = arith.constant 0 : index
    %724 = vector.load %arg5[%c31_188, %c0_189] : memref<72x8xf32, #tpu.memory_space<vmem>>, vector<1x8xf32>
    tpu.vector_store %arg5[%c31_188, %c0_189], %720 {strides = array<i32>} : memref<72x8xf32, #tpu.memory_space<vmem>>, vector<1x8xf32>,
    %c55 = arith.constant 55 : index
    %c0_190 = arith.constant 0 : index
    %725 = vector.load %arg5[%c55, %c0_190] : memref<72x8xf32, #tpu.memory_space<vmem>>, vector<1x8xf32>
    tpu.vector_store %arg5[%c55, %c0_190], %722 {strides = array<i32>} : memref<72x8xf32, #tpu.memory_space<vmem>>, vector<1x8xf32>,
    %c32 = arith.constant 32 : index
    %c0_191 = arith.constant 0 : index
    %726 = vector.load %arg3[%c32, %c0_191] : memref<96x8xf32, #tpu.memory_space<vmem>>, vector<1x8xf32>
    %c33 = arith.constant 33 : index
    %c0_192 = arith.constant 0 : index
    %727 = vector.load %arg3[%c33, %c0_192] : memref<96x8xf32, #tpu.memory_space<vmem>>, vector<1x8xf32>
    %c34 = arith.constant 34 : index
    %c0_193 = arith.constant 0 : index
    %728 = vector.load %arg3[%c34, %c0_193] : memref<96x8xf32, #tpu.memory_space<vmem>>, vector<1x8xf32>
    %c35 = arith.constant 35 : index
    %c0_194 = arith.constant 0 : index
    %729 = vector.load %arg3[%c35, %c0_194] : memref<96x8xf32, #tpu.memory_space<vmem>>, vector<1x8xf32>
    %730 = arith.mulf %726, %726 : vector<1x8xf32>
    %731 = arith.mulf %727, %727 : vector<1x8xf32>
    %732 = arith.addf %730, %731 : vector<1x8xf32>
    %733 = arith.mulf %728, %728 : vector<1x8xf32>
    %734 = arith.addf %732, %733 : vector<1x8xf32>
    %735 = arith.mulf %729, %729 : vector<1x8xf32>
    %736 = arith.addf %734, %735 : vector<1x8xf32>
    %737 = math.sqrt %736 : vector<1x8xf32>
    %cst_195 = arith.constant 9.99999993E-9 : f32
    %738 = vector.broadcast %cst_195 : f32 to vector<1x8xf32>
    %739 = arith.addf %737, %738 : vector<1x8xf32>
    %cst_196 = arith.constant 1.000000e+00 : f32
    %740 = vector.broadcast %cst_196 : f32 to vector<1x8xf32>
    %741 = arith.divf %740, %739 : vector<1x8xf32>
    %742 = arith.mulf %726, %741 : vector<1x8xf32>
    %743 = arith.mulf %727, %741 : vector<1x8xf32>
    %744 = arith.mulf %728, %741 : vector<1x8xf32>
    %745 = arith.mulf %729, %741 : vector<1x8xf32>
    %746 = arith.mulf %452, %742 : vector<1x8xf32>
    %747 = arith.mulf %459, %743 : vector<1x8xf32>
    %748 = arith.subf %746, %747 : vector<1x8xf32>
    %749 = arith.mulf %466, %744 : vector<1x8xf32>
    %750 = arith.subf %748, %749 : vector<1x8xf32>
    %751 = arith.mulf %473, %745 : vector<1x8xf32>
    %752 = arith.subf %750, %751 : vector<1x8xf32>
    %753 = arith.mulf %452, %743 : vector<1x8xf32>
    %754 = arith.mulf %459, %742 : vector<1x8xf32>
    %755 = arith.addf %753, %754 : vector<1x8xf32>
    %756 = arith.mulf %466, %745 : vector<1x8xf32>
    %757 = arith.addf %755, %756 : vector<1x8xf32>
    %758 = arith.mulf %473, %744 : vector<1x8xf32>
    %759 = arith.subf %757, %758 : vector<1x8xf32>
    %760 = arith.mulf %452, %744 : vector<1x8xf32>
    %761 = arith.mulf %459, %745 : vector<1x8xf32>
    %762 = arith.subf %760, %761 : vector<1x8xf32>
    %763 = arith.mulf %466, %742 : vector<1x8xf32>
    %764 = arith.addf %762, %763 : vector<1x8xf32>
    %765 = arith.mulf %473, %743 : vector<1x8xf32>
    %766 = arith.addf %764, %765 : vector<1x8xf32>
    %767 = arith.mulf %452, %745 : vector<1x8xf32>
    %768 = arith.mulf %459, %744 : vector<1x8xf32>
    %769 = arith.addf %767, %768 : vector<1x8xf32>
    %770 = arith.mulf %466, %743 : vector<1x8xf32>
    %771 = arith.subf %769, %770 : vector<1x8xf32>
    %772 = arith.mulf %473, %742 : vector<1x8xf32>
    %773 = arith.addf %771, %772 : vector<1x8xf32>
    %cst_197 = arith.constant 0.888492047 : f32
    %774 = vector.broadcast %cst_197 : f32 to vector<1x8xf32>
    %775 = arith.mulf %466, %774 : vector<1x8xf32>
    %cst_198 = arith.constant -0.49232015 : f32
    %776 = vector.broadcast %cst_198 : f32 to vector<1x8xf32>
    %777 = arith.mulf %473, %776 : vector<1x8xf32>
    %778 = arith.subf %775, %777 : vector<1x8xf32>
    %cst_199 = arith.constant 2.000000e+00 : f32
    %779 = vector.broadcast %cst_199 : f32 to vector<1x8xf32>
    %780 = arith.mulf %779, %778 : vector<1x8xf32>
    %cst_200 = arith.constant 0.908356547 : f32
    %781 = vector.broadcast %cst_200 : f32 to vector<1x8xf32>
    %782 = arith.mulf %473, %781 : vector<1x8xf32>
    %cst_201 = arith.constant 0.888492047 : f32
    %783 = vector.broadcast %cst_201 : f32 to vector<1x8xf32>
    %784 = arith.mulf %459, %783 : vector<1x8xf32>
    %785 = arith.subf %782, %784 : vector<1x8xf32>
    %cst_202 = arith.constant 2.000000e+00 : f32
    %786 = vector.broadcast %cst_202 : f32 to vector<1x8xf32>
    %787 = arith.mulf %786, %785 : vector<1x8xf32>
    %cst_203 = arith.constant -0.49232015 : f32
    %788 = vector.broadcast %cst_203 : f32 to vector<1x8xf32>
    %789 = arith.mulf %459, %788 : vector<1x8xf32>
    %cst_204 = arith.constant 0.908356547 : f32
    %790 = vector.broadcast %cst_204 : f32 to vector<1x8xf32>
    %791 = arith.mulf %466, %790 : vector<1x8xf32>
    %792 = arith.subf %789, %791 : vector<1x8xf32>
    %cst_205 = arith.constant 2.000000e+00 : f32
    %793 = vector.broadcast %cst_205 : f32 to vector<1x8xf32>
    %794 = arith.mulf %793, %792 : vector<1x8xf32>
    %795 = arith.mulf %452, %780 : vector<1x8xf32>
    %cst_206 = arith.constant 0.908356547 : f32
    %796 = vector.broadcast %cst_206 : f32 to vector<1x8xf32>
    %797 = arith.addf %796, %795 : vector<1x8xf32>
    %798 = arith.mulf %466, %794 : vector<1x8xf32>
    %799 = arith.mulf %473, %787 : vector<1x8xf32>
    %800 = arith.subf %798, %799 : vector<1x8xf32>
    %801 = arith.addf %797, %800 : vector<1x8xf32>
    %802 = arith.mulf %452, %787 : vector<1x8xf32>
    %cst_207 = arith.constant -0.49232015 : f32
    %803 = vector.broadcast %cst_207 : f32 to vector<1x8xf32>
    %804 = arith.addf %803, %802 : vector<1x8xf32>
    %805 = arith.mulf %473, %780 : vector<1x8xf32>
    %806 = arith.mulf %459, %794 : vector<1x8xf32>
    %807 = arith.subf %805, %806 : vector<1x8xf32>
    %808 = arith.addf %804, %807 : vector<1x8xf32>
    %809 = arith.mulf %452, %794 : vector<1x8xf32>
    %cst_208 = arith.constant 0.888492047 : f32
    %810 = vector.broadcast %cst_208 : f32 to vector<1x8xf32>
    %811 = arith.addf %810, %809 : vector<1x8xf32>
    %812 = arith.mulf %459, %787 : vector<1x8xf32>
    %813 = arith.mulf %466, %780 : vector<1x8xf32>
    %814 = arith.subf %812, %813 : vector<1x8xf32>
    %815 = arith.addf %811, %814 : vector<1x8xf32>
    %c8_209 = arith.constant 8 : index
    %c0_210 = arith.constant 0 : index
    %816 = vector.load %arg4[%c8_209, %c0_210] : memref<24x8xf32, #tpu.memory_space<vmem>>, vector<1x8xf32>
    %817 = arith.mulf %801, %816 : vector<1x8xf32>
    %818 = arith.addf %518, %817 : vector<1x8xf32>
    %819 = arith.mulf %808, %816 : vector<1x8xf32>
    %820 = arith.addf %520, %819 : vector<1x8xf32>
    %821 = arith.mulf %815, %816 : vector<1x8xf32>
    %822 = arith.addf %522, %821 : vector<1x8xf32>
    %c8_211 = arith.constant 8 : index
    %c0_212 = arith.constant 0 : index
    %823 = vector.load %arg5[%c8_211, %c0_212] : memref<72x8xf32, #tpu.memory_space<vmem>>, vector<1x8xf32>
    tpu.vector_store %arg5[%c8_211, %c0_212], %818 {strides = array<i32>} : memref<72x8xf32, #tpu.memory_space<vmem>>, vector<1x8xf32>,
    %c32_213 = arith.constant 32 : index
    %c0_214 = arith.constant 0 : index
    %824 = vector.load %arg5[%c32_213, %c0_214] : memref<72x8xf32, #tpu.memory_space<vmem>>, vector<1x8xf32>
    tpu.vector_store %arg5[%c32_213, %c0_214], %820 {strides = array<i32>} : memref<72x8xf32, #tpu.memory_space<vmem>>, vector<1x8xf32>,
    %c56 = arith.constant 56 : index
    %c0_215 = arith.constant 0 : index
    %825 = vector.load %arg5[%c56, %c0_215] : memref<72x8xf32, #tpu.memory_space<vmem>>, vector<1x8xf32>
    tpu.vector_store %arg5[%c56, %c0_215], %822 {strides = array<i32>} : memref<72x8xf32, #tpu.memory_space<vmem>>, vector<1x8xf32>,
    %c36 = arith.constant 36 : index
    %c0_216 = arith.constant 0 : index
    %826 = vector.load %arg3[%c36, %c0_216] : memref<96x8xf32, #tpu.memory_space<vmem>>, vector<1x8xf32>
    %c37 = arith.constant 37 : index
    %c0_217 = arith.constant 0 : index
    %827 = vector.load %arg3[%c37, %c0_217] : memref<96x8xf32, #tpu.memory_space<vmem>>, vector<1x8xf32>
    %c38 = arith.constant 38 : index
    %c0_218 = arith.constant 0 : index
    %828 = vector.load %arg3[%c38, %c0_218] : memref<96x8xf32, #tpu.memory_space<vmem>>, vector<1x8xf32>
    %c39 = arith.constant 39 : index
    %c0_219 = arith.constant 0 : index
    %829 = vector.load %arg3[%c39, %c0_219] : memref<96x8xf32, #tpu.memory_space<vmem>>, vector<1x8xf32>
    %830 = arith.mulf %826, %826 : vector<1x8xf32>
    %831 = arith.mulf %827, %827 : vector<1x8xf32>
    %832 = arith.addf %830, %831 : vector<1x8xf32>
    %833 = arith.mulf %828, %828 : vector<1x8xf32>
    %834 = arith.addf %832, %833 : vector<1x8xf32>
    %835 = arith.mulf %829, %829 : vector<1x8xf32>
    %836 = arith.addf %834, %835 : vector<1x8xf32>
    %837 = math.sqrt %836 : vector<1x8xf32>
    %cst_220 = arith.constant 9.99999993E-9 : f32
    %838 = vector.broadcast %cst_220 : f32 to vector<1x8xf32>
    %839 = arith.addf %837, %838 : vector<1x8xf32>
    %cst_221 = arith.constant 1.000000e+00 : f32
    %840 = vector.broadcast %cst_221 : f32 to vector<1x8xf32>
    %841 = arith.divf %840, %839 : vector<1x8xf32>
    %842 = arith.mulf %826, %841 : vector<1x8xf32>
    %843 = arith.mulf %827, %841 : vector<1x8xf32>
    %844 = arith.mulf %828, %841 : vector<1x8xf32>
    %845 = arith.mulf %829, %841 : vector<1x8xf32>
    %846 = arith.mulf %552, %842 : vector<1x8xf32>
    %847 = arith.mulf %559, %843 : vector<1x8xf32>
    %848 = arith.subf %846, %847 : vector<1x8xf32>
    %849 = arith.mulf %566, %844 : vector<1x8xf32>
    %850 = arith.subf %848, %849 : vector<1x8xf32>
    %851 = arith.mulf %573, %845 : vector<1x8xf32>
    %852 = arith.subf %850, %851 : vector<1x8xf32>
    %853 = arith.mulf %552, %843 : vector<1x8xf32>
    %854 = arith.mulf %559, %842 : vector<1x8xf32>
    %855 = arith.addf %853, %854 : vector<1x8xf32>
    %856 = arith.mulf %566, %845 : vector<1x8xf32>
    %857 = arith.addf %855, %856 : vector<1x8xf32>
    %858 = arith.mulf %573, %844 : vector<1x8xf32>
    %859 = arith.subf %857, %858 : vector<1x8xf32>
    %860 = arith.mulf %552, %844 : vector<1x8xf32>
    %861 = arith.mulf %559, %845 : vector<1x8xf32>
    %862 = arith.subf %860, %861 : vector<1x8xf32>
    %863 = arith.mulf %566, %842 : vector<1x8xf32>
    %864 = arith.addf %862, %863 : vector<1x8xf32>
    %865 = arith.mulf %573, %843 : vector<1x8xf32>
    %866 = arith.addf %864, %865 : vector<1x8xf32>
    %867 = arith.mulf %552, %845 : vector<1x8xf32>
    %868 = arith.mulf %559, %844 : vector<1x8xf32>
    %869 = arith.addf %867, %868 : vector<1x8xf32>
    %870 = arith.mulf %566, %843 : vector<1x8xf32>
    %871 = arith.subf %869, %870 : vector<1x8xf32>
    %872 = arith.mulf %573, %842 : vector<1x8xf32>
    %873 = arith.addf %871, %872 : vector<1x8xf32>
    %cst_222 = arith.constant 0.441780686 : f32
    %874 = vector.broadcast %cst_222 : f32 to vector<1x8xf32>
    %875 = arith.mulf %566, %874 : vector<1x8xf32>
    %cst_223 = arith.constant -2.5158658 : f32
    %876 = vector.broadcast %cst_223 : f32 to vector<1x8xf32>
    %877 = arith.mulf %573, %876 : vector<1x8xf32>
    %878 = arith.subf %875, %877 : vector<1x8xf32>
    %cst_224 = arith.constant 2.000000e+00 : f32
    %879 = vector.broadcast %cst_224 : f32 to vector<1x8xf32>
    %880 = arith.mulf %879, %878 : vector<1x8xf32>
    %cst_225 = arith.constant 1.64539087 : f32
    %881 = vector.broadcast %cst_225 : f32 to vector<1x8xf32>
    %882 = arith.mulf %573, %881 : vector<1x8xf32>
    %cst_226 = arith.constant 0.441780686 : f32
    %883 = vector.broadcast %cst_226 : f32 to vector<1x8xf32>
    %884 = arith.mulf %559, %883 : vector<1x8xf32>
    %885 = arith.subf %882, %884 : vector<1x8xf32>
    %cst_227 = arith.constant 2.000000e+00 : f32
    %886 = vector.broadcast %cst_227 : f32 to vector<1x8xf32>
    %887 = arith.mulf %886, %885 : vector<1x8xf32>
    %cst_228 = arith.constant -2.5158658 : f32
    %888 = vector.broadcast %cst_228 : f32 to vector<1x8xf32>
    %889 = arith.mulf %559, %888 : vector<1x8xf32>
    %cst_229 = arith.constant 1.64539087 : f32
    %890 = vector.broadcast %cst_229 : f32 to vector<1x8xf32>
    %891 = arith.mulf %566, %890 : vector<1x8xf32>
    %892 = arith.subf %889, %891 : vector<1x8xf32>
    %cst_230 = arith.constant 2.000000e+00 : f32
    %893 = vector.broadcast %cst_230 : f32 to vector<1x8xf32>
    %894 = arith.mulf %893, %892 : vector<1x8xf32>
    %895 = arith.mulf %552, %880 : vector<1x8xf32>
    %cst_231 = arith.constant 1.64539087 : f32
    %896 = vector.broadcast %cst_231 : f32 to vector<1x8xf32>
    %897 = arith.addf %896, %895 : vector<1x8xf32>
    %898 = arith.mulf %566, %894 : vector<1x8xf32>
    %899 = arith.mulf %573, %887 : vector<1x8xf32>
    %900 = arith.subf %898, %899 : vector<1x8xf32>
    %901 = arith.addf %897, %900 : vector<1x8xf32>
    %902 = arith.mulf %552, %887 : vector<1x8xf32>
    %cst_232 = arith.constant -2.5158658 : f32
    %903 = vector.broadcast %cst_232 : f32 to vector<1x8xf32>
    %904 = arith.addf %903, %902 : vector<1x8xf32>
    %905 = arith.mulf %573, %880 : vector<1x8xf32>
    %906 = arith.mulf %559, %894 : vector<1x8xf32>
    %907 = arith.subf %905, %906 : vector<1x8xf32>
    %908 = arith.addf %904, %907 : vector<1x8xf32>
    %909 = arith.mulf %552, %894 : vector<1x8xf32>
    %cst_233 = arith.constant 0.441780686 : f32
    %910 = vector.broadcast %cst_233 : f32 to vector<1x8xf32>
    %911 = arith.addf %910, %909 : vector<1x8xf32>
    %912 = arith.mulf %559, %887 : vector<1x8xf32>
    %913 = arith.mulf %566, %880 : vector<1x8xf32>
    %914 = arith.subf %912, %913 : vector<1x8xf32>
    %915 = arith.addf %911, %914 : vector<1x8xf32>
    %c9_234 = arith.constant 9 : index
    %c0_235 = arith.constant 0 : index
    %916 = vector.load %arg4[%c9_234, %c0_235] : memref<24x8xf32, #tpu.memory_space<vmem>>, vector<1x8xf32>
    %917 = arith.mulf %901, %916 : vector<1x8xf32>
    %918 = arith.addf %618, %917 : vector<1x8xf32>
    %919 = arith.mulf %908, %916 : vector<1x8xf32>
    %920 = arith.addf %620, %919 : vector<1x8xf32>
    %921 = arith.mulf %915, %916 : vector<1x8xf32>
    %922 = arith.addf %622, %921 : vector<1x8xf32>
    %c9_236 = arith.constant 9 : index
    %c0_237 = arith.constant 0 : index
    %923 = vector.load %arg5[%c9_236, %c0_237] : memref<72x8xf32, #tpu.memory_space<vmem>>, vector<1x8xf32>
    tpu.vector_store %arg5[%c9_236, %c0_237], %918 {strides = array<i32>} : memref<72x8xf32, #tpu.memory_space<vmem>>, vector<1x8xf32>,
    %c33_238 = arith.constant 33 : index
    %c0_239 = arith.constant 0 : index
    %924 = vector.load %arg5[%c33_238, %c0_239] : memref<72x8xf32, #tpu.memory_space<vmem>>, vector<1x8xf32>
    tpu.vector_store %arg5[%c33_238, %c0_239], %920 {strides = array<i32>} : memref<72x8xf32, #tpu.memory_space<vmem>>, vector<1x8xf32>,
    %c57 = arith.constant 57 : index
    %c0_240 = arith.constant 0 : index
    %925 = vector.load %arg5[%c57, %c0_240] : memref<72x8xf32, #tpu.memory_space<vmem>>, vector<1x8xf32>
    tpu.vector_store %arg5[%c57, %c0_240], %922 {strides = array<i32>} : memref<72x8xf32, #tpu.memory_space<vmem>>, vector<1x8xf32>,
    %cst_241 = arith.constant -0.588716388 : f32
    %926 = vector.broadcast %cst_241 : f32 to vector<1x8xf32>
    %927 = arith.mulf %666, %926 : vector<1x8xf32>
    %cst_242 = arith.constant -1.17313886 : f32
    %928 = vector.broadcast %cst_242 : f32 to vector<1x8xf32>
    %929 = arith.mulf %673, %928 : vector<1x8xf32>
    %930 = arith.subf %927, %929 : vector<1x8xf32>
    %cst_243 = arith.constant 2.000000e+00 : f32
    %931 = vector.broadcast %cst_243 : f32 to vector<1x8xf32>
    %932 = arith.mulf %931, %930 : vector<1x8xf32>
    %cst_244 = arith.constant 1.81731272 : f32
    %933 = vector.broadcast %cst_244 : f32 to vector<1x8xf32>
    %934 = arith.mulf %673, %933 : vector<1x8xf32>
    %cst_245 = arith.constant -0.588716388 : f32
    %935 = vector.broadcast %cst_245 : f32 to vector<1x8xf32>
    %936 = arith.mulf %659, %935 : vector<1x8xf32>
    %937 = arith.subf %934, %936 : vector<1x8xf32>
    %cst_246 = arith.constant 2.000000e+00 : f32
    %938 = vector.broadcast %cst_246 : f32 to vector<1x8xf32>
    %939 = arith.mulf %938, %937 : vector<1x8xf32>
    %cst_247 = arith.constant -1.17313886 : f32
    %940 = vector.broadcast %cst_247 : f32 to vector<1x8xf32>
    %941 = arith.mulf %659, %940 : vector<1x8xf32>
    %cst_248 = arith.constant 1.81731272 : f32
    %942 = vector.broadcast %cst_248 : f32 to vector<1x8xf32>
    %943 = arith.mulf %666, %942 : vector<1x8xf32>
    %944 = arith.subf %941, %943 : vector<1x8xf32>
    %cst_249 = arith.constant 2.000000e+00 : f32
    %945 = vector.broadcast %cst_249 : f32 to vector<1x8xf32>
    %946 = arith.mulf %945, %944 : vector<1x8xf32>
    %947 = arith.mulf %652, %932 : vector<1x8xf32>
    %cst_250 = arith.constant 1.81731272 : f32
    %948 = vector.broadcast %cst_250 : f32 to vector<1x8xf32>
    %949 = arith.addf %948, %947 : vector<1x8xf32>
    %950 = arith.mulf %666, %946 : vector<1x8xf32>
    %951 = arith.mulf %673, %939 : vector<1x8xf32>
    %952 = arith.subf %950, %951 : vector<1x8xf32>
    %953 = arith.addf %949, %952 : vector<1x8xf32>
    %954 = arith.mulf %652, %939 : vector<1x8xf32>
    %cst_251 = arith.constant -1.17313886 : f32
    %955 = vector.broadcast %cst_251 : f32 to vector<1x8xf32>
    %956 = arith.addf %955, %954 : vector<1x8xf32>
    %957 = arith.mulf %673, %932 : vector<1x8xf32>
    %958 = arith.mulf %659, %946 : vector<1x8xf32>
    %959 = arith.subf %957, %958 : vector<1x8xf32>
    %960 = arith.addf %956, %959 : vector<1x8xf32>
    %961 = arith.mulf %652, %946 : vector<1x8xf32>
    %cst_252 = arith.constant -0.588716388 : f32
    %962 = vector.broadcast %cst_252 : f32 to vector<1x8xf32>
    %963 = arith.addf %962, %961 : vector<1x8xf32>
    %964 = arith.mulf %659, %939 : vector<1x8xf32>
    %965 = arith.mulf %666, %932 : vector<1x8xf32>
    %966 = arith.subf %964, %965 : vector<1x8xf32>
    %967 = arith.addf %963, %966 : vector<1x8xf32>
    %c10_253 = arith.constant 10 : index
    %c0_254 = arith.constant 0 : index
    %968 = vector.load %arg4[%c10_253, %c0_254] : memref<24x8xf32, #tpu.memory_space<vmem>>, vector<1x8xf32>
    %969 = arith.mulf %953, %968 : vector<1x8xf32>
    %970 = arith.addf %718, %969 : vector<1x8xf32>
    %971 = arith.mulf %960, %968 : vector<1x8xf32>
    %972 = arith.addf %720, %971 : vector<1x8xf32>
    %973 = arith.mulf %967, %968 : vector<1x8xf32>
    %974 = arith.addf %722, %973 : vector<1x8xf32>
    %c10_255 = arith.constant 10 : index
    %c0_256 = arith.constant 0 : index
    %975 = vector.load %arg5[%c10_255, %c0_256] : memref<72x8xf32, #tpu.memory_space<vmem>>, vector<1x8xf32>
    tpu.vector_store %arg5[%c10_255, %c0_256], %970 {strides = array<i32>} : memref<72x8xf32, #tpu.memory_space<vmem>>, vector<1x8xf32>,
    %c34_257 = arith.constant 34 : index
    %c0_258 = arith.constant 0 : index
    %976 = vector.load %arg5[%c34_257, %c0_258] : memref<72x8xf32, #tpu.memory_space<vmem>>, vector<1x8xf32>
    tpu.vector_store %arg5[%c34_257, %c0_258], %972 {strides = array<i32>} : memref<72x8xf32, #tpu.memory_space<vmem>>, vector<1x8xf32>,
    %c58 = arith.constant 58 : index
    %c0_259 = arith.constant 0 : index
    %977 = vector.load %arg5[%c58, %c0_259] : memref<72x8xf32, #tpu.memory_space<vmem>>, vector<1x8xf32>
    tpu.vector_store %arg5[%c58, %c0_259], %974 {strides = array<i32>} : memref<72x8xf32, #tpu.memory_space<vmem>>, vector<1x8xf32>,
    %cst_260 = arith.constant -0.197454274 : f32
    %978 = vector.broadcast %cst_260 : f32 to vector<1x8xf32>
    %979 = arith.mulf %766, %978 : vector<1x8xf32>
    %cst_261 = arith.constant 0.801880359 : f32
    %980 = vector.broadcast %cst_261 : f32 to vector<1x8xf32>
    %981 = arith.mulf %773, %980 : vector<1x8xf32>
    %982 = arith.subf %979, %981 : vector<1x8xf32>
    %cst_262 = arith.constant 2.000000e+00 : f32
    %983 = vector.broadcast %cst_262 : f32 to vector<1x8xf32>
    %984 = arith.mulf %983, %982 : vector<1x8xf32>
    %cst_263 = arith.constant 2.14698505 : f32
    %985 = vector.broadcast %cst_263 : f32 to vector<1x8xf32>
    %986 = arith.mulf %773, %985 : vector<1x8xf32>
    %cst_264 = arith.constant -0.197454274 : f32
    %987 = vector.broadcast %cst_264 : f32 to vector<1x8xf32>
    %988 = arith.mulf %759, %987 : vector<1x8xf32>
    %989 = arith.subf %986, %988 : vector<1x8xf32>
    %cst_265 = arith.constant 2.000000e+00 : f32
    %990 = vector.broadcast %cst_265 : f32 to vector<1x8xf32>
    %991 = arith.mulf %990, %989 : vector<1x8xf32>
    %cst_266 = arith.constant 0.801880359 : f32
    %992 = vector.broadcast %cst_266 : f32 to vector<1x8xf32>
    %993 = arith.mulf %759, %992 : vector<1x8xf32>
    %cst_267 = arith.constant 2.14698505 : f32
    %994 = vector.broadcast %cst_267 : f32 to vector<1x8xf32>
    %995 = arith.mulf %766, %994 : vector<1x8xf32>
    %996 = arith.subf %993, %995 : vector<1x8xf32>
    %cst_268 = arith.constant 2.000000e+00 : f32
    %997 = vector.broadcast %cst_268 : f32 to vector<1x8xf32>
    %998 = arith.mulf %997, %996 : vector<1x8xf32>
    %999 = arith.mulf %752, %984 : vector<1x8xf32>
    %cst_269 = arith.constant 2.14698505 : f32
    %1000 = vector.broadcast %cst_269 : f32 to vector<1x8xf32>
    %1001 = arith.addf %1000, %999 : vector<1x8xf32>
    %1002 = arith.mulf %766, %998 : vector<1x8xf32>
    %1003 = arith.mulf %773, %991 : vector<1x8xf32>
    %1004 = arith.subf %1002, %1003 : vector<1x8xf32>
    %1005 = arith.addf %1001, %1004 : vector<1x8xf32>
    %1006 = arith.mulf %752, %991 : vector<1x8xf32>
    %cst_270 = arith.constant 0.801880359 : f32
    %1007 = vector.broadcast %cst_270 : f32 to vector<1x8xf32>
    %1008 = arith.addf %1007, %1006 : vector<1x8xf32>
    %1009 = arith.mulf %773, %984 : vector<1x8xf32>
    %1010 = arith.mulf %759, %998 : vector<1x8xf32>
    %1011 = arith.subf %1009, %1010 : vector<1x8xf32>
    %1012 = arith.addf %1008, %1011 : vector<1x8xf32>
    %1013 = arith.mulf %752, %998 : vector<1x8xf32>
    %cst_271 = arith.constant -0.197454274 : f32
    %1014 = vector.broadcast %cst_271 : f32 to vector<1x8xf32>
    %1015 = arith.addf %1014, %1013 : vector<1x8xf32>
    %1016 = arith.mulf %759, %991 : vector<1x8xf32>
    %1017 = arith.mulf %766, %984 : vector<1x8xf32>
    %1018 = arith.subf %1016, %1017 : vector<1x8xf32>
    %1019 = arith.addf %1015, %1018 : vector<1x8xf32>
    %c11_272 = arith.constant 11 : index
    %c0_273 = arith.constant 0 : index
    %1020 = vector.load %arg4[%c11_272, %c0_273] : memref<24x8xf32, #tpu.memory_space<vmem>>, vector<1x8xf32>
    %1021 = arith.mulf %1005, %1020 : vector<1x8xf32>
    %1022 = arith.addf %818, %1021 : vector<1x8xf32>
    %1023 = arith.mulf %1012, %1020 : vector<1x8xf32>
    %1024 = arith.addf %820, %1023 : vector<1x8xf32>
    %1025 = arith.mulf %1019, %1020 : vector<1x8xf32>
    %1026 = arith.addf %822, %1025 : vector<1x8xf32>
    %c11_274 = arith.constant 11 : index
    %c0_275 = arith.constant 0 : index
    %1027 = vector.load %arg5[%c11_274, %c0_275] : memref<72x8xf32, #tpu.memory_space<vmem>>, vector<1x8xf32>
    tpu.vector_store %arg5[%c11_274, %c0_275], %1022 {strides = array<i32>} : memref<72x8xf32, #tpu.memory_space<vmem>>, vector<1x8xf32>,
    %c35_276 = arith.constant 35 : index
    %c0_277 = arith.constant 0 : index
    %1028 = vector.load %arg5[%c35_276, %c0_277] : memref<72x8xf32, #tpu.memory_space<vmem>>, vector<1x8xf32>
    tpu.vector_store %arg5[%c35_276, %c0_277], %1024 {strides = array<i32>} : memref<72x8xf32, #tpu.memory_space<vmem>>, vector<1x8xf32>,
    %c59 = arith.constant 59 : index
    %c0_278 = arith.constant 0 : index
    %1029 = vector.load %arg5[%c59, %c0_278] : memref<72x8xf32, #tpu.memory_space<vmem>>, vector<1x8xf32>
    tpu.vector_store %arg5[%c59, %c0_278], %1026 {strides = array<i32>} : memref<72x8xf32, #tpu.memory_space<vmem>>, vector<1x8xf32>,
    %c48_279 = arith.constant 48 : index
    %c0_280 = arith.constant 0 : index
    %1030 = vector.load %arg3[%c48_279, %c0_280] : memref<96x8xf32, #tpu.memory_space<vmem>>, vector<1x8xf32>
    %c49_281 = arith.constant 49 : index
    %c0_282 = arith.constant 0 : index
    %1031 = vector.load %arg3[%c49_281, %c0_282] : memref<96x8xf32, #tpu.memory_space<vmem>>, vector<1x8xf32>
    %c50_283 = arith.constant 50 : index
    %c0_284 = arith.constant 0 : index
    %1032 = vector.load %arg3[%c50_283, %c0_284] : memref<96x8xf32, #tpu.memory_space<vmem>>, vector<1x8xf32>
    %c51_285 = arith.constant 51 : index
    %c0_286 = arith.constant 0 : index
    %1033 = vector.load %arg3[%c51_285, %c0_286] : memref<96x8xf32, #tpu.memory_space<vmem>>, vector<1x8xf32>
    %1034 = arith.mulf %1030, %1030 : vector<1x8xf32>
    %1035 = arith.mulf %1031, %1031 : vector<1x8xf32>
    %1036 = arith.addf %1034, %1035 : vector<1x8xf32>
    %1037 = arith.mulf %1032, %1032 : vector<1x8xf32>
    %1038 = arith.addf %1036, %1037 : vector<1x8xf32>
    %1039 = arith.mulf %1033, %1033 : vector<1x8xf32>
    %1040 = arith.addf %1038, %1039 : vector<1x8xf32>
    %1041 = math.sqrt %1040 : vector<1x8xf32>
    %cst_287 = arith.constant 9.99999993E-9 : f32
    %1042 = vector.broadcast %cst_287 : f32 to vector<1x8xf32>
    %1043 = arith.addf %1041, %1042 : vector<1x8xf32>
    %cst_288 = arith.constant 1.000000e+00 : f32
    %1044 = vector.broadcast %cst_288 : f32 to vector<1x8xf32>
    %1045 = arith.divf %1044, %1043 : vector<1x8xf32>
    %1046 = arith.mulf %1030, %1045 : vector<1x8xf32>
    %1047 = arith.mulf %1031, %1045 : vector<1x8xf32>
    %1048 = arith.mulf %1032, %1045 : vector<1x8xf32>
    %1049 = arith.mulf %1033, %1045 : vector<1x8xf32>
    %1050 = arith.mulf %852, %1046 : vector<1x8xf32>
    %1051 = arith.mulf %859, %1047 : vector<1x8xf32>
    %1052 = arith.subf %1050, %1051 : vector<1x8xf32>
    %1053 = arith.mulf %866, %1048 : vector<1x8xf32>
    %1054 = arith.subf %1052, %1053 : vector<1x8xf32>
    %1055 = arith.mulf %873, %1049 : vector<1x8xf32>
    %1056 = arith.subf %1054, %1055 : vector<1x8xf32>
    %1057 = arith.mulf %852, %1047 : vector<1x8xf32>
    %1058 = arith.mulf %859, %1046 : vector<1x8xf32>
    %1059 = arith.addf %1057, %1058 : vector<1x8xf32>
    %1060 = arith.mulf %866, %1049 : vector<1x8xf32>
    %1061 = arith.addf %1059, %1060 : vector<1x8xf32>
    %1062 = arith.mulf %873, %1048 : vector<1x8xf32>
    %1063 = arith.subf %1061, %1062 : vector<1x8xf32>
    %1064 = arith.mulf %852, %1048 : vector<1x8xf32>
    %1065 = arith.mulf %859, %1049 : vector<1x8xf32>
    %1066 = arith.subf %1064, %1065 : vector<1x8xf32>
    %1067 = arith.mulf %866, %1046 : vector<1x8xf32>
    %1068 = arith.addf %1066, %1067 : vector<1x8xf32>
    %1069 = arith.mulf %873, %1047 : vector<1x8xf32>
    %1070 = arith.addf %1068, %1069 : vector<1x8xf32>
    %1071 = arith.mulf %852, %1049 : vector<1x8xf32>
    %1072 = arith.mulf %859, %1048 : vector<1x8xf32>
    %1073 = arith.addf %1071, %1072 : vector<1x8xf32>
    %1074 = arith.mulf %866, %1047 : vector<1x8xf32>
    %1075 = arith.subf %1073, %1074 : vector<1x8xf32>
    %1076 = arith.mulf %873, %1046 : vector<1x8xf32>
    %1077 = arith.addf %1075, %1076 : vector<1x8xf32>
    %cst_289 = arith.constant -2.3626771 : f32
    %1078 = vector.broadcast %cst_289 : f32 to vector<1x8xf32>
    %1079 = arith.mulf %866, %1078 : vector<1x8xf32>
    %cst_290 = arith.constant -0.821419119 : f32
    %1080 = vector.broadcast %cst_290 : f32 to vector<1x8xf32>
    %1081 = arith.mulf %873, %1080 : vector<1x8xf32>
    %1082 = arith.subf %1079, %1081 : vector<1x8xf32>
    %cst_291 = arith.constant 2.000000e+00 : f32
    %1083 = vector.broadcast %cst_291 : f32 to vector<1x8xf32>
    %1084 = arith.mulf %1083, %1082 : vector<1x8xf32>
    %cst_292 = arith.constant -1.73980486 : f32
    %1085 = vector.broadcast %cst_292 : f32 to vector<1x8xf32>
    %1086 = arith.mulf %873, %1085 : vector<1x8xf32>
    %cst_293 = arith.constant -2.3626771 : f32
    %1087 = vector.broadcast %cst_293 : f32 to vector<1x8xf32>
    %1088 = arith.mulf %859, %1087 : vector<1x8xf32>
    %1089 = arith.subf %1086, %1088 : vector<1x8xf32>
    %cst_294 = arith.constant 2.000000e+00 : f32
    %1090 = vector.broadcast %cst_294 : f32 to vector<1x8xf32>
    %1091 = arith.mulf %1090, %1089 : vector<1x8xf32>
    %cst_295 = arith.constant -0.821419119 : f32
    %1092 = vector.broadcast %cst_295 : f32 to vector<1x8xf32>
    %1093 = arith.mulf %859, %1092 : vector<1x8xf32>
    %cst_296 = arith.constant -1.73980486 : f32
    %1094 = vector.broadcast %cst_296 : f32 to vector<1x8xf32>
    %1095 = arith.mulf %866, %1094 : vector<1x8xf32>
    %1096 = arith.subf %1093, %1095 : vector<1x8xf32>
    %cst_297 = arith.constant 2.000000e+00 : f32
    %1097 = vector.broadcast %cst_297 : f32 to vector<1x8xf32>
    %1098 = arith.mulf %1097, %1096 : vector<1x8xf32>
    %1099 = arith.mulf %852, %1084 : vector<1x8xf32>
    %cst_298 = arith.constant -1.73980486 : f32
    %1100 = vector.broadcast %cst_298 : f32 to vector<1x8xf32>
    %1101 = arith.addf %1100, %1099 : vector<1x8xf32>
    %1102 = arith.mulf %866, %1098 : vector<1x8xf32>
    %1103 = arith.mulf %873, %1091 : vector<1x8xf32>
    %1104 = arith.subf %1102, %1103 : vector<1x8xf32>
    %1105 = arith.addf %1101, %1104 : vector<1x8xf32>
    %1106 = arith.mulf %852, %1091 : vector<1x8xf32>
    %cst_299 = arith.constant -0.821419119 : f32
    %1107 = vector.broadcast %cst_299 : f32 to vector<1x8xf32>
    %1108 = arith.addf %1107, %1106 : vector<1x8xf32>
    %1109 = arith.mulf %873, %1084 : vector<1x8xf32>
    %1110 = arith.mulf %859, %1098 : vector<1x8xf32>
    %1111 = arith.subf %1109, %1110 : vector<1x8xf32>
    %1112 = arith.addf %1108, %1111 : vector<1x8xf32>
    %1113 = arith.mulf %852, %1098 : vector<1x8xf32>
    %cst_300 = arith.constant -2.3626771 : f32
    %1114 = vector.broadcast %cst_300 : f32 to vector<1x8xf32>
    %1115 = arith.addf %1114, %1113 : vector<1x8xf32>
    %1116 = arith.mulf %859, %1091 : vector<1x8xf32>
    %1117 = arith.mulf %866, %1084 : vector<1x8xf32>
    %1118 = arith.subf %1116, %1117 : vector<1x8xf32>
    %1119 = arith.addf %1115, %1118 : vector<1x8xf32>
    %c12_301 = arith.constant 12 : index
    %c0_302 = arith.constant 0 : index
    %1120 = vector.load %arg4[%c12_301, %c0_302] : memref<24x8xf32, #tpu.memory_space<vmem>>, vector<1x8xf32>
    %1121 = arith.mulf %1105, %1120 : vector<1x8xf32>
    %1122 = arith.addf %918, %1121 : vector<1x8xf32>
    %1123 = arith.mulf %1112, %1120 : vector<1x8xf32>
    %1124 = arith.addf %920, %1123 : vector<1x8xf32>
    %1125 = arith.mulf %1119, %1120 : vector<1x8xf32>
    %1126 = arith.addf %922, %1125 : vector<1x8xf32>
    %c12_303 = arith.constant 12 : index
    %c0_304 = arith.constant 0 : index
    %1127 = vector.load %arg5[%c12_303, %c0_304] : memref<72x8xf32, #tpu.memory_space<vmem>>, vector<1x8xf32>
    tpu.vector_store %arg5[%c12_303, %c0_304], %1122 {strides = array<i32>} : memref<72x8xf32, #tpu.memory_space<vmem>>, vector<1x8xf32>,
    %c36_305 = arith.constant 36 : index
    %c0_306 = arith.constant 0 : index
    %1128 = vector.load %arg5[%c36_305, %c0_306] : memref<72x8xf32, #tpu.memory_space<vmem>>, vector<1x8xf32>
    tpu.vector_store %arg5[%c36_305, %c0_306], %1124 {strides = array<i32>} : memref<72x8xf32, #tpu.memory_space<vmem>>, vector<1x8xf32>,
    %c60 = arith.constant 60 : index
    %c0_307 = arith.constant 0 : index
    %1129 = vector.load %arg5[%c60, %c0_307] : memref<72x8xf32, #tpu.memory_space<vmem>>, vector<1x8xf32>
    tpu.vector_store %arg5[%c60, %c0_307], %1126 {strides = array<i32>} : memref<72x8xf32, #tpu.memory_space<vmem>>, vector<1x8xf32>,
    %c52_308 = arith.constant 52 : index
    %c0_309 = arith.constant 0 : index
    %1130 = vector.load %arg3[%c52_308, %c0_309] : memref<96x8xf32, #tpu.memory_space<vmem>>, vector<1x8xf32>
    %c53_310 = arith.constant 53 : index
    %c0_311 = arith.constant 0 : index
    %1131 = vector.load %arg3[%c53_310, %c0_311] : memref<96x8xf32, #tpu.memory_space<vmem>>, vector<1x8xf32>
    %c54_312 = arith.constant 54 : index
    %c0_313 = arith.constant 0 : index
    %1132 = vector.load %arg3[%c54_312, %c0_313] : memref<96x8xf32, #tpu.memory_space<vmem>>, vector<1x8xf32>
    %c55_314 = arith.constant 55 : index
    %c0_315 = arith.constant 0 : index
    %1133 = vector.load %arg3[%c55_314, %c0_315] : memref<96x8xf32, #tpu.memory_space<vmem>>, vector<1x8xf32>
    %1134 = arith.mulf %1130, %1130 : vector<1x8xf32>
    %1135 = arith.mulf %1131, %1131 : vector<1x8xf32>
    %1136 = arith.addf %1134, %1135 : vector<1x8xf32>
    %1137 = arith.mulf %1132, %1132 : vector<1x8xf32>
    %1138 = arith.addf %1136, %1137 : vector<1x8xf32>
    %1139 = arith.mulf %1133, %1133 : vector<1x8xf32>
    %1140 = arith.addf %1138, %1139 : vector<1x8xf32>
    %1141 = math.sqrt %1140 : vector<1x8xf32>
    %cst_316 = arith.constant 9.99999993E-9 : f32
    %1142 = vector.broadcast %cst_316 : f32 to vector<1x8xf32>
    %1143 = arith.addf %1141, %1142 : vector<1x8xf32>
    %cst_317 = arith.constant 1.000000e+00 : f32
    %1144 = vector.broadcast %cst_317 : f32 to vector<1x8xf32>
    %1145 = arith.divf %1144, %1143 : vector<1x8xf32>
    %1146 = arith.mulf %1130, %1145 : vector<1x8xf32>
    %1147 = arith.mulf %1131, %1145 : vector<1x8xf32>
    %1148 = arith.mulf %1132, %1145 : vector<1x8xf32>
    %1149 = arith.mulf %1133, %1145 : vector<1x8xf32>
    %1150 = arith.mulf %852, %1146 : vector<1x8xf32>
    %1151 = arith.mulf %859, %1147 : vector<1x8xf32>
    %1152 = arith.subf %1150, %1151 : vector<1x8xf32>
    %1153 = arith.mulf %866, %1148 : vector<1x8xf32>
    %1154 = arith.subf %1152, %1153 : vector<1x8xf32>
    %1155 = arith.mulf %873, %1149 : vector<1x8xf32>
    %1156 = arith.subf %1154, %1155 : vector<1x8xf32>
    %1157 = arith.mulf %852, %1147 : vector<1x8xf32>
    %1158 = arith.mulf %859, %1146 : vector<1x8xf32>
    %1159 = arith.addf %1157, %1158 : vector<1x8xf32>
    %1160 = arith.mulf %866, %1149 : vector<1x8xf32>
    %1161 = arith.addf %1159, %1160 : vector<1x8xf32>
    %1162 = arith.mulf %873, %1148 : vector<1x8xf32>
    %1163 = arith.subf %1161, %1162 : vector<1x8xf32>
    %1164 = arith.mulf %852, %1148 : vector<1x8xf32>
    %1165 = arith.mulf %859, %1149 : vector<1x8xf32>
    %1166 = arith.subf %1164, %1165 : vector<1x8xf32>
    %1167 = arith.mulf %866, %1146 : vector<1x8xf32>
    %1168 = arith.addf %1166, %1167 : vector<1x8xf32>
    %1169 = arith.mulf %873, %1147 : vector<1x8xf32>
    %1170 = arith.addf %1168, %1169 : vector<1x8xf32>
    %1171 = arith.mulf %852, %1149 : vector<1x8xf32>
    %1172 = arith.mulf %859, %1148 : vector<1x8xf32>
    %1173 = arith.addf %1171, %1172 : vector<1x8xf32>
    %1174 = arith.mulf %866, %1147 : vector<1x8xf32>
    %1175 = arith.subf %1173, %1174 : vector<1x8xf32>
    %1176 = arith.mulf %873, %1146 : vector<1x8xf32>
    %1177 = arith.addf %1175, %1176 : vector<1x8xf32>
    %cst_318 = arith.constant 0.350379229 : f32
    %1178 = vector.broadcast %cst_318 : f32 to vector<1x8xf32>
    %1179 = arith.mulf %866, %1178 : vector<1x8xf32>
    %cst_319 = arith.constant 1.40542698 : f32
    %1180 = vector.broadcast %cst_319 : f32 to vector<1x8xf32>
    %1181 = arith.mulf %873, %1180 : vector<1x8xf32>
    %1182 = arith.subf %1179, %1181 : vector<1x8xf32>
    %cst_320 = arith.constant 2.000000e+00 : f32
    %1183 = vector.broadcast %cst_320 : f32 to vector<1x8xf32>
    %1184 = arith.mulf %1183, %1182 : vector<1x8xf32>
    %cst_321 = arith.constant 1.55264926 : f32
    %1185 = vector.broadcast %cst_321 : f32 to vector<1x8xf32>
    %1186 = arith.mulf %873, %1185 : vector<1x8xf32>
    %cst_322 = arith.constant 0.350379229 : f32
    %1187 = vector.broadcast %cst_322 : f32 to vector<1x8xf32>
    %1188 = arith.mulf %859, %1187 : vector<1x8xf32>
    %1189 = arith.subf %1186, %1188 : vector<1x8xf32>
    %cst_323 = arith.constant 2.000000e+00 : f32
    %1190 = vector.broadcast %cst_323 : f32 to vector<1x8xf32>
    %1191 = arith.mulf %1190, %1189 : vector<1x8xf32>
    %cst_324 = arith.constant 1.40542698 : f32
    %1192 = vector.broadcast %cst_324 : f32 to vector<1x8xf32>
    %1193 = arith.mulf %859, %1192 : vector<1x8xf32>
    %cst_325 = arith.constant 1.55264926 : f32
    %1194 = vector.broadcast %cst_325 : f32 to vector<1x8xf32>
    %1195 = arith.mulf %866, %1194 : vector<1x8xf32>
    %1196 = arith.subf %1193, %1195 : vector<1x8xf32>
    %cst_326 = arith.constant 2.000000e+00 : f32
    %1197 = vector.broadcast %cst_326 : f32 to vector<1x8xf32>
    %1198 = arith.mulf %1197, %1196 : vector<1x8xf32>
    %1199 = arith.mulf %852, %1184 : vector<1x8xf32>
    %cst_327 = arith.constant 1.55264926 : f32
    %1200 = vector.broadcast %cst_327 : f32 to vector<1x8xf32>
    %1201 = arith.addf %1200, %1199 : vector<1x8xf32>
    %1202 = arith.mulf %866, %1198 : vector<1x8xf32>
    %1203 = arith.mulf %873, %1191 : vector<1x8xf32>
    %1204 = arith.subf %1202, %1203 : vector<1x8xf32>
    %1205 = arith.addf %1201, %1204 : vector<1x8xf32>
    %1206 = arith.mulf %852, %1191 : vector<1x8xf32>
    %cst_328 = arith.constant 1.40542698 : f32
    %1207 = vector.broadcast %cst_328 : f32 to vector<1x8xf32>
    %1208 = arith.addf %1207, %1206 : vector<1x8xf32>
    %1209 = arith.mulf %873, %1184 : vector<1x8xf32>
    %1210 = arith.mulf %859, %1198 : vector<1x8xf32>
    %1211 = arith.subf %1209, %1210 : vector<1x8xf32>
    %1212 = arith.addf %1208, %1211 : vector<1x8xf32>
    %1213 = arith.mulf %852, %1198 : vector<1x8xf32>
    %cst_329 = arith.constant 0.350379229 : f32
    %1214 = vector.broadcast %cst_329 : f32 to vector<1x8xf32>
    %1215 = arith.addf %1214, %1213 : vector<1x8xf32>
    %1216 = arith.mulf %859, %1191 : vector<1x8xf32>
    %1217 = arith.mulf %866, %1184 : vector<1x8xf32>
    %1218 = arith.subf %1216, %1217 : vector<1x8xf32>
    %1219 = arith.addf %1215, %1218 : vector<1x8xf32>
    %c13_330 = arith.constant 13 : index
    %c0_331 = arith.constant 0 : index
    %1220 = vector.load %arg4[%c13_330, %c0_331] : memref<24x8xf32, #tpu.memory_space<vmem>>, vector<1x8xf32>
    %1221 = arith.mulf %1205, %1220 : vector<1x8xf32>
    %1222 = arith.addf %918, %1221 : vector<1x8xf32>
    %1223 = arith.mulf %1212, %1220 : vector<1x8xf32>
    %1224 = arith.addf %920, %1223 : vector<1x8xf32>
    %1225 = arith.mulf %1219, %1220 : vector<1x8xf32>
    %1226 = arith.addf %922, %1225 : vector<1x8xf32>
    %c13_332 = arith.constant 13 : index
    %c0_333 = arith.constant 0 : index
    %1227 = vector.load %arg5[%c13_332, %c0_333] : memref<72x8xf32, #tpu.memory_space<vmem>>, vector<1x8xf32>
    tpu.vector_store %arg5[%c13_332, %c0_333], %1222 {strides = array<i32>} : memref<72x8xf32, #tpu.memory_space<vmem>>, vector<1x8xf32>,
    %c37_334 = arith.constant 37 : index
    %c0_335 = arith.constant 0 : index
    %1228 = vector.load %arg5[%c37_334, %c0_335] : memref<72x8xf32, #tpu.memory_space<vmem>>, vector<1x8xf32>
    tpu.vector_store %arg5[%c37_334, %c0_335], %1224 {strides = array<i32>} : memref<72x8xf32, #tpu.memory_space<vmem>>, vector<1x8xf32>,
    %c61 = arith.constant 61 : index
    %c0_336 = arith.constant 0 : index
    %1229 = vector.load %arg5[%c61, %c0_336] : memref<72x8xf32, #tpu.memory_space<vmem>>, vector<1x8xf32>
    tpu.vector_store %arg5[%c61, %c0_336], %1226 {strides = array<i32>} : memref<72x8xf32, #tpu.memory_space<vmem>>, vector<1x8xf32>,
    %c56_337 = arith.constant 56 : index
    %c0_338 = arith.constant 0 : index
    %1230 = vector.load %arg3[%c56_337, %c0_338] : memref<96x8xf32, #tpu.memory_space<vmem>>, vector<1x8xf32>
    %c57_339 = arith.constant 57 : index
    %c0_340 = arith.constant 0 : index
    %1231 = vector.load %arg3[%c57_339, %c0_340] : memref<96x8xf32, #tpu.memory_space<vmem>>, vector<1x8xf32>
    %c58_341 = arith.constant 58 : index
    %c0_342 = arith.constant 0 : index
    %1232 = vector.load %arg3[%c58_341, %c0_342] : memref<96x8xf32, #tpu.memory_space<vmem>>, vector<1x8xf32>
    %c59_343 = arith.constant 59 : index
    %c0_344 = arith.constant 0 : index
    %1233 = vector.load %arg3[%c59_343, %c0_344] : memref<96x8xf32, #tpu.memory_space<vmem>>, vector<1x8xf32>
    %1234 = arith.mulf %1230, %1230 : vector<1x8xf32>
    %1235 = arith.mulf %1231, %1231 : vector<1x8xf32>
    %1236 = arith.addf %1234, %1235 : vector<1x8xf32>
    %1237 = arith.mulf %1232, %1232 : vector<1x8xf32>
    %1238 = arith.addf %1236, %1237 : vector<1x8xf32>
    %1239 = arith.mulf %1233, %1233 : vector<1x8xf32>
    %1240 = arith.addf %1238, %1239 : vector<1x8xf32>
    %1241 = math.sqrt %1240 : vector<1x8xf32>
    %cst_345 = arith.constant 9.99999993E-9 : f32
    %1242 = vector.broadcast %cst_345 : f32 to vector<1x8xf32>
    %1243 = arith.addf %1241, %1242 : vector<1x8xf32>
    %cst_346 = arith.constant 1.000000e+00 : f32
    %1244 = vector.broadcast %cst_346 : f32 to vector<1x8xf32>
    %1245 = arith.divf %1244, %1243 : vector<1x8xf32>
    %1246 = arith.mulf %1230, %1245 : vector<1x8xf32>
    %1247 = arith.mulf %1231, %1245 : vector<1x8xf32>
    %1248 = arith.mulf %1232, %1245 : vector<1x8xf32>
    %1249 = arith.mulf %1233, %1245 : vector<1x8xf32>
    %1250 = arith.mulf %852, %1246 : vector<1x8xf32>
    %1251 = arith.mulf %859, %1247 : vector<1x8xf32>
    %1252 = arith.subf %1250, %1251 : vector<1x8xf32>
    %1253 = arith.mulf %866, %1248 : vector<1x8xf32>
    %1254 = arith.subf %1252, %1253 : vector<1x8xf32>
    %1255 = arith.mulf %873, %1249 : vector<1x8xf32>
    %1256 = arith.subf %1254, %1255 : vector<1x8xf32>
    %1257 = arith.mulf %852, %1247 : vector<1x8xf32>
    %1258 = arith.mulf %859, %1246 : vector<1x8xf32>
    %1259 = arith.addf %1257, %1258 : vector<1x8xf32>
    %1260 = arith.mulf %866, %1249 : vector<1x8xf32>
    %1261 = arith.addf %1259, %1260 : vector<1x8xf32>
    %1262 = arith.mulf %873, %1248 : vector<1x8xf32>
    %1263 = arith.subf %1261, %1262 : vector<1x8xf32>
    %1264 = arith.mulf %852, %1248 : vector<1x8xf32>
    %1265 = arith.mulf %859, %1249 : vector<1x8xf32>
    %1266 = arith.subf %1264, %1265 : vector<1x8xf32>
    %1267 = arith.mulf %866, %1246 : vector<1x8xf32>
    %1268 = arith.addf %1266, %1267 : vector<1x8xf32>
    %1269 = arith.mulf %873, %1247 : vector<1x8xf32>
    %1270 = arith.addf %1268, %1269 : vector<1x8xf32>
    %1271 = arith.mulf %852, %1249 : vector<1x8xf32>
    %1272 = arith.mulf %859, %1248 : vector<1x8xf32>
    %1273 = arith.addf %1271, %1272 : vector<1x8xf32>
    %1274 = arith.mulf %866, %1247 : vector<1x8xf32>
    %1275 = arith.subf %1273, %1274 : vector<1x8xf32>
    %1276 = arith.mulf %873, %1246 : vector<1x8xf32>
    %1277 = arith.addf %1275, %1276 : vector<1x8xf32>
    %cst_347 = arith.constant -0.212455243 : f32
    %1278 = vector.broadcast %cst_347 : f32 to vector<1x8xf32>
    %1279 = arith.mulf %866, %1278 : vector<1x8xf32>
    %cst_348 = arith.constant 1.14703882 : f32
    %1280 = vector.broadcast %cst_348 : f32 to vector<1x8xf32>
    %1281 = arith.mulf %873, %1280 : vector<1x8xf32>
    %1282 = arith.subf %1279, %1281 : vector<1x8xf32>
    %cst_349 = arith.constant 2.000000e+00 : f32
    %1283 = vector.broadcast %cst_349 : f32 to vector<1x8xf32>
    %1284 = arith.mulf %1283, %1282 : vector<1x8xf32>
    %cst_350 = arith.constant 0.0624630711 : f32
    %1285 = vector.broadcast %cst_350 : f32 to vector<1x8xf32>
    %1286 = arith.mulf %873, %1285 : vector<1x8xf32>
    %cst_351 = arith.constant -0.212455243 : f32
    %1287 = vector.broadcast %cst_351 : f32 to vector<1x8xf32>
    %1288 = arith.mulf %859, %1287 : vector<1x8xf32>
    %1289 = arith.subf %1286, %1288 : vector<1x8xf32>
    %cst_352 = arith.constant 2.000000e+00 : f32
    %1290 = vector.broadcast %cst_352 : f32 to vector<1x8xf32>
    %1291 = arith.mulf %1290, %1289 : vector<1x8xf32>
    %cst_353 = arith.constant 1.14703882 : f32
    %1292 = vector.broadcast %cst_353 : f32 to vector<1x8xf32>
    %1293 = arith.mulf %859, %1292 : vector<1x8xf32>
    %cst_354 = arith.constant 0.0624630711 : f32
    %1294 = vector.broadcast %cst_354 : f32 to vector<1x8xf32>
    %1295 = arith.mulf %866, %1294 : vector<1x8xf32>
    %1296 = arith.subf %1293, %1295 : vector<1x8xf32>
    %cst_355 = arith.constant 2.000000e+00 : f32
    %1297 = vector.broadcast %cst_355 : f32 to vector<1x8xf32>
    %1298 = arith.mulf %1297, %1296 : vector<1x8xf32>
    %1299 = arith.mulf %852, %1284 : vector<1x8xf32>
    %cst_356 = arith.constant 0.0624630711 : f32
    %1300 = vector.broadcast %cst_356 : f32 to vector<1x8xf32>
    %1301 = arith.addf %1300, %1299 : vector<1x8xf32>
    %1302 = arith.mulf %866, %1298 : vector<1x8xf32>
    %1303 = arith.mulf %873, %1291 : vector<1x8xf32>
    %1304 = arith.subf %1302, %1303 : vector<1x8xf32>
    %1305 = arith.addf %1301, %1304 : vector<1x8xf32>
    %1306 = arith.mulf %852, %1291 : vector<1x8xf32>
    %cst_357 = arith.constant 1.14703882 : f32
    %1307 = vector.broadcast %cst_357 : f32 to vector<1x8xf32>
    %1308 = arith.addf %1307, %1306 : vector<1x8xf32>
    %1309 = arith.mulf %873, %1284 : vector<1x8xf32>
    %1310 = arith.mulf %859, %1298 : vector<1x8xf32>
    %1311 = arith.subf %1309, %1310 : vector<1x8xf32>
    %1312 = arith.addf %1308, %1311 : vector<1x8xf32>
    %1313 = arith.mulf %852, %1298 : vector<1x8xf32>
    %cst_358 = arith.constant -0.212455243 : f32
    %1314 = vector.broadcast %cst_358 : f32 to vector<1x8xf32>
    %1315 = arith.addf %1314, %1313 : vector<1x8xf32>
    %1316 = arith.mulf %859, %1291 : vector<1x8xf32>
    %1317 = arith.mulf %866, %1284 : vector<1x8xf32>
    %1318 = arith.subf %1316, %1317 : vector<1x8xf32>
    %1319 = arith.addf %1315, %1318 : vector<1x8xf32>
    %c14_359 = arith.constant 14 : index
    %c0_360 = arith.constant 0 : index
    %1320 = vector.load %arg4[%c14_359, %c0_360] : memref<24x8xf32, #tpu.memory_space<vmem>>, vector<1x8xf32>
    %1321 = arith.mulf %1305, %1320 : vector<1x8xf32>
    %1322 = arith.addf %918, %1321 : vector<1x8xf32>
    %1323 = arith.mulf %1312, %1320 : vector<1x8xf32>
    %1324 = arith.addf %920, %1323 : vector<1x8xf32>
    %1325 = arith.mulf %1319, %1320 : vector<1x8xf32>
    %1326 = arith.addf %922, %1325 : vector<1x8xf32>
    %c14_361 = arith.constant 14 : index
    %c0_362 = arith.constant 0 : index
    %1327 = vector.load %arg5[%c14_361, %c0_362] : memref<72x8xf32, #tpu.memory_space<vmem>>, vector<1x8xf32>
    tpu.vector_store %arg5[%c14_361, %c0_362], %1322 {strides = array<i32>} : memref<72x8xf32, #tpu.memory_space<vmem>>, vector<1x8xf32>,
    %c38_363 = arith.constant 38 : index
    %c0_364 = arith.constant 0 : index
    %1328 = vector.load %arg5[%c38_363, %c0_364] : memref<72x8xf32, #tpu.memory_space<vmem>>, vector<1x8xf32>
    tpu.vector_store %arg5[%c38_363, %c0_364], %1324 {strides = array<i32>} : memref<72x8xf32, #tpu.memory_space<vmem>>, vector<1x8xf32>,
    %c62 = arith.constant 62 : index
    %c0_365 = arith.constant 0 : index
    %1329 = vector.load %arg5[%c62, %c0_365] : memref<72x8xf32, #tpu.memory_space<vmem>>, vector<1x8xf32>
    tpu.vector_store %arg5[%c62, %c0_365], %1326 {strides = array<i32>} : memref<72x8xf32, #tpu.memory_space<vmem>>, vector<1x8xf32>,
    %cst_366 = arith.constant -0.339238763 : f32
    %1330 = vector.broadcast %cst_366 : f32 to vector<1x8xf32>
    %1331 = arith.mulf %1070, %1330 : vector<1x8xf32>
    %cst_367 = arith.constant 0.688853502 : f32
    %1332 = vector.broadcast %cst_367 : f32 to vector<1x8xf32>
    %1333 = arith.mulf %1077, %1332 : vector<1x8xf32>
    %1334 = arith.subf %1331, %1333 : vector<1x8xf32>
    %cst_368 = arith.constant 2.000000e+00 : f32
    %1335 = vector.broadcast %cst_368 : f32 to vector<1x8xf32>
    %1336 = arith.mulf %1335, %1334 : vector<1x8xf32>
    %cst_369 = arith.constant -0.33967492 : f32
    %1337 = vector.broadcast %cst_369 : f32 to vector<1x8xf32>
    %1338 = arith.mulf %1077, %1337 : vector<1x8xf32>
    %cst_370 = arith.constant -0.339238763 : f32
    %1339 = vector.broadcast %cst_370 : f32 to vector<1x8xf32>
    %1340 = arith.mulf %1063, %1339 : vector<1x8xf32>
    %1341 = arith.subf %1338, %1340 : vector<1x8xf32>
    %cst_371 = arith.constant 2.000000e+00 : f32
    %1342 = vector.broadcast %cst_371 : f32 to vector<1x8xf32>
    %1343 = arith.mulf %1342, %1341 : vector<1x8xf32>
    %cst_372 = arith.constant 0.688853502 : f32
    %1344 = vector.broadcast %cst_372 : f32 to vector<1x8xf32>
    %1345 = arith.mulf %1063, %1344 : vector<1x8xf32>
    %cst_373 = arith.constant -0.33967492 : f32
    %1346 = vector.broadcast %cst_373 : f32 to vector<1x8xf32>
    %1347 = arith.mulf %1070, %1346 : vector<1x8xf32>
    %1348 = arith.subf %1345, %1347 : vector<1x8xf32>
    %cst_374 = arith.constant 2.000000e+00 : f32
    %1349 = vector.broadcast %cst_374 : f32 to vector<1x8xf32>
    %1350 = arith.mulf %1349, %1348 : vector<1x8xf32>
    %1351 = arith.mulf %1056, %1336 : vector<1x8xf32>
    %cst_375 = arith.constant -0.33967492 : f32
    %1352 = vector.broadcast %cst_375 : f32 to vector<1x8xf32>
    %1353 = arith.addf %1352, %1351 : vector<1x8xf32>
    %1354 = arith.mulf %1070, %1350 : vector<1x8xf32>
    %1355 = arith.mulf %1077, %1343 : vector<1x8xf32>
    %1356 = arith.subf %1354, %1355 : vector<1x8xf32>
    %1357 = arith.addf %1353, %1356 : vector<1x8xf32>
    %1358 = arith.mulf %1056, %1343 : vector<1x8xf32>
    %cst_376 = arith.constant 0.688853502 : f32
    %1359 = vector.broadcast %cst_376 : f32 to vector<1x8xf32>
    %1360 = arith.addf %1359, %1358 : vector<1x8xf32>
    %1361 = arith.mulf %1077, %1336 : vector<1x8xf32>
    %1362 = arith.mulf %1063, %1350 : vector<1x8xf32>
    %1363 = arith.subf %1361, %1362 : vector<1x8xf32>
    %1364 = arith.addf %1360, %1363 : vector<1x8xf32>
    %1365 = arith.mulf %1056, %1350 : vector<1x8xf32>
    %cst_377 = arith.constant -0.339238763 : f32
    %1366 = vector.broadcast %cst_377 : f32 to vector<1x8xf32>
    %1367 = arith.addf %1366, %1365 : vector<1x8xf32>
    %1368 = arith.mulf %1063, %1343 : vector<1x8xf32>
    %1369 = arith.mulf %1070, %1336 : vector<1x8xf32>
    %1370 = arith.subf %1368, %1369 : vector<1x8xf32>
    %1371 = arith.addf %1367, %1370 : vector<1x8xf32>
    %c15_378 = arith.constant 15 : index
    %c0_379 = arith.constant 0 : index
    %1372 = vector.load %arg4[%c15_378, %c0_379] : memref<24x8xf32, #tpu.memory_space<vmem>>, vector<1x8xf32>
    %1373 = arith.mulf %1357, %1372 : vector<1x8xf32>
    %1374 = arith.addf %1122, %1373 : vector<1x8xf32>
    %1375 = arith.mulf %1364, %1372 : vector<1x8xf32>
    %1376 = arith.addf %1124, %1375 : vector<1x8xf32>
    %1377 = arith.mulf %1371, %1372 : vector<1x8xf32>
    %1378 = arith.addf %1126, %1377 : vector<1x8xf32>
    %c15_380 = arith.constant 15 : index
    %c0_381 = arith.constant 0 : index
    %1379 = vector.load %arg5[%c15_380, %c0_381] : memref<72x8xf32, #tpu.memory_space<vmem>>, vector<1x8xf32>
    tpu.vector_store %arg5[%c15_380, %c0_381], %1374 {strides = array<i32>} : memref<72x8xf32, #tpu.memory_space<vmem>>, vector<1x8xf32>,
    %c39_382 = arith.constant 39 : index
    %c0_383 = arith.constant 0 : index
    %1380 = vector.load %arg5[%c39_382, %c0_383] : memref<72x8xf32, #tpu.memory_space<vmem>>, vector<1x8xf32>
    tpu.vector_store %arg5[%c39_382, %c0_383], %1376 {strides = array<i32>} : memref<72x8xf32, #tpu.memory_space<vmem>>, vector<1x8xf32>,
    %c63 = arith.constant 63 : index
    %c0_384 = arith.constant 0 : index
    %1381 = vector.load %arg5[%c63, %c0_384] : memref<72x8xf32, #tpu.memory_space<vmem>>, vector<1x8xf32>
    tpu.vector_store %arg5[%c63, %c0_384], %1378 {strides = array<i32>} : memref<72x8xf32, #tpu.memory_space<vmem>>, vector<1x8xf32>,
    %c64 = arith.constant 64 : index
    %c0_385 = arith.constant 0 : index
    %1382 = vector.load %arg3[%c64, %c0_385] : memref<96x8xf32, #tpu.memory_space<vmem>>, vector<1x8xf32>
    %c65 = arith.constant 65 : index
    %c0_386 = arith.constant 0 : index
    %1383 = vector.load %arg3[%c65, %c0_386] : memref<96x8xf32, #tpu.memory_space<vmem>>, vector<1x8xf32>
    %c66 = arith.constant 66 : index
    %c0_387 = arith.constant 0 : index
    %1384 = vector.load %arg3[%c66, %c0_387] : memref<96x8xf32, #tpu.memory_space<vmem>>, vector<1x8xf32>
    %c67 = arith.constant 67 : index
    %c0_388 = arith.constant 0 : index
    %1385 = vector.load %arg3[%c67, %c0_388] : memref<96x8xf32, #tpu.memory_space<vmem>>, vector<1x8xf32>
    %1386 = arith.mulf %1382, %1382 : vector<1x8xf32>
    %1387 = arith.mulf %1383, %1383 : vector<1x8xf32>
    %1388 = arith.addf %1386, %1387 : vector<1x8xf32>
    %1389 = arith.mulf %1384, %1384 : vector<1x8xf32>
    %1390 = arith.addf %1388, %1389 : vector<1x8xf32>
    %1391 = arith.mulf %1385, %1385 : vector<1x8xf32>
    %1392 = arith.addf %1390, %1391 : vector<1x8xf32>
    %1393 = math.sqrt %1392 : vector<1x8xf32>
    %cst_389 = arith.constant 9.99999993E-9 : f32
    %1394 = vector.broadcast %cst_389 : f32 to vector<1x8xf32>
    %1395 = arith.addf %1393, %1394 : vector<1x8xf32>
    %cst_390 = arith.constant 1.000000e+00 : f32
    %1396 = vector.broadcast %cst_390 : f32 to vector<1x8xf32>
    %1397 = arith.divf %1396, %1395 : vector<1x8xf32>
    %1398 = arith.mulf %1382, %1397 : vector<1x8xf32>
    %1399 = arith.mulf %1383, %1397 : vector<1x8xf32>
    %1400 = arith.mulf %1384, %1397 : vector<1x8xf32>
    %1401 = arith.mulf %1385, %1397 : vector<1x8xf32>
    %1402 = arith.mulf %1156, %1398 : vector<1x8xf32>
    %1403 = arith.mulf %1163, %1399 : vector<1x8xf32>
    %1404 = arith.subf %1402, %1403 : vector<1x8xf32>
    %1405 = arith.mulf %1170, %1400 : vector<1x8xf32>
    %1406 = arith.subf %1404, %1405 : vector<1x8xf32>
    %1407 = arith.mulf %1177, %1401 : vector<1x8xf32>
    %1408 = arith.subf %1406, %1407 : vector<1x8xf32>
    %1409 = arith.mulf %1156, %1399 : vector<1x8xf32>
    %1410 = arith.mulf %1163, %1398 : vector<1x8xf32>
    %1411 = arith.addf %1409, %1410 : vector<1x8xf32>
    %1412 = arith.mulf %1170, %1401 : vector<1x8xf32>
    %1413 = arith.addf %1411, %1412 : vector<1x8xf32>
    %1414 = arith.mulf %1177, %1400 : vector<1x8xf32>
    %1415 = arith.subf %1413, %1414 : vector<1x8xf32>
    %1416 = arith.mulf %1156, %1400 : vector<1x8xf32>
    %1417 = arith.mulf %1163, %1401 : vector<1x8xf32>
    %1418 = arith.subf %1416, %1417 : vector<1x8xf32>
    %1419 = arith.mulf %1170, %1398 : vector<1x8xf32>
    %1420 = arith.addf %1418, %1419 : vector<1x8xf32>
    %1421 = arith.mulf %1177, %1399 : vector<1x8xf32>
    %1422 = arith.addf %1420, %1421 : vector<1x8xf32>
    %1423 = arith.mulf %1156, %1401 : vector<1x8xf32>
    %1424 = arith.mulf %1163, %1400 : vector<1x8xf32>
    %1425 = arith.addf %1423, %1424 : vector<1x8xf32>
    %1426 = arith.mulf %1170, %1399 : vector<1x8xf32>
    %1427 = arith.subf %1425, %1426 : vector<1x8xf32>
    %1428 = arith.mulf %1177, %1398 : vector<1x8xf32>
    %1429 = arith.addf %1427, %1428 : vector<1x8xf32>
    %cst_391 = arith.constant -1.81260681 : f32
    %1430 = vector.broadcast %cst_391 : f32 to vector<1x8xf32>
    %1431 = arith.mulf %1170, %1430 : vector<1x8xf32>
    %cst_392 = arith.constant 0.21159482 : f32
    %1432 = vector.broadcast %cst_392 : f32 to vector<1x8xf32>
    %1433 = arith.mulf %1177, %1432 : vector<1x8xf32>
    %1434 = arith.subf %1431, %1433 : vector<1x8xf32>
    %cst_393 = arith.constant 2.000000e+00 : f32
    %1435 = vector.broadcast %cst_393 : f32 to vector<1x8xf32>
    %1436 = arith.mulf %1435, %1434 : vector<1x8xf32>
    %cst_394 = arith.constant 0.492005318 : f32
    %1437 = vector.broadcast %cst_394 : f32 to vector<1x8xf32>
    %1438 = arith.mulf %1177, %1437 : vector<1x8xf32>
    %cst_395 = arith.constant -1.81260681 : f32
    %1439 = vector.broadcast %cst_395 : f32 to vector<1x8xf32>
    %1440 = arith.mulf %1163, %1439 : vector<1x8xf32>
    %1441 = arith.subf %1438, %1440 : vector<1x8xf32>
    %cst_396 = arith.constant 2.000000e+00 : f32
    %1442 = vector.broadcast %cst_396 : f32 to vector<1x8xf32>
    %1443 = arith.mulf %1442, %1441 : vector<1x8xf32>
    %cst_397 = arith.constant 0.21159482 : f32
    %1444 = vector.broadcast %cst_397 : f32 to vector<1x8xf32>
    %1445 = arith.mulf %1163, %1444 : vector<1x8xf32>
    %cst_398 = arith.constant 0.492005318 : f32
    %1446 = vector.broadcast %cst_398 : f32 to vector<1x8xf32>
    %1447 = arith.mulf %1170, %1446 : vector<1x8xf32>
    %1448 = arith.subf %1445, %1447 : vector<1x8xf32>
    %cst_399 = arith.constant 2.000000e+00 : f32
    %1449 = vector.broadcast %cst_399 : f32 to vector<1x8xf32>
    %1450 = arith.mulf %1449, %1448 : vector<1x8xf32>
    %1451 = arith.mulf %1156, %1436 : vector<1x8xf32>
    %cst_400 = arith.constant 0.492005318 : f32
    %1452 = vector.broadcast %cst_400 : f32 to vector<1x8xf32>
    %1453 = arith.addf %1452, %1451 : vector<1x8xf32>
    %1454 = arith.mulf %1170, %1450 : vector<1x8xf32>
    %1455 = arith.mulf %1177, %1443 : vector<1x8xf32>
    %1456 = arith.subf %1454, %1455 : vector<1x8xf32>
    %1457 = arith.addf %1453, %1456 : vector<1x8xf32>
    %1458 = arith.mulf %1156, %1443 : vector<1x8xf32>
    %cst_401 = arith.constant 0.21159482 : f32
    %1459 = vector.broadcast %cst_401 : f32 to vector<1x8xf32>
    %1460 = arith.addf %1459, %1458 : vector<1x8xf32>
    %1461 = arith.mulf %1177, %1436 : vector<1x8xf32>
    %1462 = arith.mulf %1163, %1450 : vector<1x8xf32>
    %1463 = arith.subf %1461, %1462 : vector<1x8xf32>
    %1464 = arith.addf %1460, %1463 : vector<1x8xf32>
    %1465 = arith.mulf %1156, %1450 : vector<1x8xf32>
    %cst_402 = arith.constant -1.81260681 : f32
    %1466 = vector.broadcast %cst_402 : f32 to vector<1x8xf32>
    %1467 = arith.addf %1466, %1465 : vector<1x8xf32>
    %1468 = arith.mulf %1163, %1443 : vector<1x8xf32>
    %1469 = arith.mulf %1170, %1436 : vector<1x8xf32>
    %1470 = arith.subf %1468, %1469 : vector<1x8xf32>
    %1471 = arith.addf %1467, %1470 : vector<1x8xf32>
    %c16_403 = arith.constant 16 : index
    %c0_404 = arith.constant 0 : index
    %1472 = vector.load %arg4[%c16_403, %c0_404] : memref<24x8xf32, #tpu.memory_space<vmem>>, vector<1x8xf32>
    %1473 = arith.mulf %1457, %1472 : vector<1x8xf32>
    %1474 = arith.addf %1222, %1473 : vector<1x8xf32>
    %1475 = arith.mulf %1464, %1472 : vector<1x8xf32>
    %1476 = arith.addf %1224, %1475 : vector<1x8xf32>
    %1477 = arith.mulf %1471, %1472 : vector<1x8xf32>
    %1478 = arith.addf %1226, %1477 : vector<1x8xf32>
    %c16_405 = arith.constant 16 : index
    %c0_406 = arith.constant 0 : index
    %1479 = vector.load %arg5[%c16_405, %c0_406] : memref<72x8xf32, #tpu.memory_space<vmem>>, vector<1x8xf32>
    tpu.vector_store %arg5[%c16_405, %c0_406], %1474 {strides = array<i32>} : memref<72x8xf32, #tpu.memory_space<vmem>>, vector<1x8xf32>,
    %c40 = arith.constant 40 : index
    %c0_407 = arith.constant 0 : index
    %1480 = vector.load %arg5[%c40, %c0_407] : memref<72x8xf32, #tpu.memory_space<vmem>>, vector<1x8xf32>
    tpu.vector_store %arg5[%c40, %c0_407], %1476 {strides = array<i32>} : memref<72x8xf32, #tpu.memory_space<vmem>>, vector<1x8xf32>,
    %c64_408 = arith.constant 64 : index
    %c0_409 = arith.constant 0 : index
    %1481 = vector.load %arg5[%c64_408, %c0_409] : memref<72x8xf32, #tpu.memory_space<vmem>>, vector<1x8xf32>
    tpu.vector_store %arg5[%c64_408, %c0_409], %1478 {strides = array<i32>} : memref<72x8xf32, #tpu.memory_space<vmem>>, vector<1x8xf32>,
    %c68 = arith.constant 68 : index
    %c0_410 = arith.constant 0 : index
    %1482 = vector.load %arg3[%c68, %c0_410] : memref<96x8xf32, #tpu.memory_space<vmem>>, vector<1x8xf32>
    %c69 = arith.constant 69 : index
    %c0_411 = arith.constant 0 : index
    %1483 = vector.load %arg3[%c69, %c0_411] : memref<96x8xf32, #tpu.memory_space<vmem>>, vector<1x8xf32>
    %c70 = arith.constant 70 : index
    %c0_412 = arith.constant 0 : index
    %1484 = vector.load %arg3[%c70, %c0_412] : memref<96x8xf32, #tpu.memory_space<vmem>>, vector<1x8xf32>
    %c71 = arith.constant 71 : index
    %c0_413 = arith.constant 0 : index
    %1485 = vector.load %arg3[%c71, %c0_413] : memref<96x8xf32, #tpu.memory_space<vmem>>, vector<1x8xf32>
    %1486 = arith.mulf %1482, %1482 : vector<1x8xf32>
    %1487 = arith.mulf %1483, %1483 : vector<1x8xf32>
    %1488 = arith.addf %1486, %1487 : vector<1x8xf32>
    %1489 = arith.mulf %1484, %1484 : vector<1x8xf32>
    %1490 = arith.addf %1488, %1489 : vector<1x8xf32>
    %1491 = arith.mulf %1485, %1485 : vector<1x8xf32>
    %1492 = arith.addf %1490, %1491 : vector<1x8xf32>
    %1493 = math.sqrt %1492 : vector<1x8xf32>
    %cst_414 = arith.constant 9.99999993E-9 : f32
    %1494 = vector.broadcast %cst_414 : f32 to vector<1x8xf32>
    %1495 = arith.addf %1493, %1494 : vector<1x8xf32>
    %cst_415 = arith.constant 1.000000e+00 : f32
    %1496 = vector.broadcast %cst_415 : f32 to vector<1x8xf32>
    %1497 = arith.divf %1496, %1495 : vector<1x8xf32>
    %1498 = arith.mulf %1482, %1497 : vector<1x8xf32>
    %1499 = arith.mulf %1483, %1497 : vector<1x8xf32>
    %1500 = arith.mulf %1484, %1497 : vector<1x8xf32>
    %1501 = arith.mulf %1485, %1497 : vector<1x8xf32>
    %1502 = arith.mulf %1256, %1498 : vector<1x8xf32>
    %1503 = arith.mulf %1263, %1499 : vector<1x8xf32>
    %1504 = arith.subf %1502, %1503 : vector<1x8xf32>
    %1505 = arith.mulf %1270, %1500 : vector<1x8xf32>
    %1506 = arith.subf %1504, %1505 : vector<1x8xf32>
    %1507 = arith.mulf %1277, %1501 : vector<1x8xf32>
    %1508 = arith.subf %1506, %1507 : vector<1x8xf32>
    %1509 = arith.mulf %1256, %1499 : vector<1x8xf32>
    %1510 = arith.mulf %1263, %1498 : vector<1x8xf32>
    %1511 = arith.addf %1509, %1510 : vector<1x8xf32>
    %1512 = arith.mulf %1270, %1501 : vector<1x8xf32>
    %1513 = arith.addf %1511, %1512 : vector<1x8xf32>
    %1514 = arith.mulf %1277, %1500 : vector<1x8xf32>
    %1515 = arith.subf %1513, %1514 : vector<1x8xf32>
    %1516 = arith.mulf %1256, %1500 : vector<1x8xf32>
    %1517 = arith.mulf %1263, %1501 : vector<1x8xf32>
    %1518 = arith.subf %1516, %1517 : vector<1x8xf32>
    %1519 = arith.mulf %1270, %1498 : vector<1x8xf32>
    %1520 = arith.addf %1518, %1519 : vector<1x8xf32>
    %1521 = arith.mulf %1277, %1499 : vector<1x8xf32>
    %1522 = arith.addf %1520, %1521 : vector<1x8xf32>
    %1523 = arith.mulf %1256, %1501 : vector<1x8xf32>
    %1524 = arith.mulf %1263, %1500 : vector<1x8xf32>
    %1525 = arith.addf %1523, %1524 : vector<1x8xf32>
    %1526 = arith.mulf %1270, %1499 : vector<1x8xf32>
    %1527 = arith.subf %1525, %1526 : vector<1x8xf32>
    %1528 = arith.mulf %1277, %1498 : vector<1x8xf32>
    %1529 = arith.addf %1527, %1528 : vector<1x8xf32>
    %cst_416 = arith.constant 1.68778217 : f32
    %1530 = vector.broadcast %cst_416 : f32 to vector<1x8xf32>
    %1531 = arith.mulf %1270, %1530 : vector<1x8xf32>
    %cst_417 = arith.constant 0.845177233 : f32
    %1532 = vector.broadcast %cst_417 : f32 to vector<1x8xf32>
    %1533 = arith.mulf %1277, %1532 : vector<1x8xf32>
    %1534 = arith.subf %1531, %1533 : vector<1x8xf32>
    %cst_418 = arith.constant 2.000000e+00 : f32
    %1535 = vector.broadcast %cst_418 : f32 to vector<1x8xf32>
    %1536 = arith.mulf %1535, %1534 : vector<1x8xf32>
    %cst_419 = arith.constant 1.88417065 : f32
    %1537 = vector.broadcast %cst_419 : f32 to vector<1x8xf32>
    %1538 = arith.mulf %1277, %1537 : vector<1x8xf32>
    %cst_420 = arith.constant 1.68778217 : f32
    %1539 = vector.broadcast %cst_420 : f32 to vector<1x8xf32>
    %1540 = arith.mulf %1263, %1539 : vector<1x8xf32>
    %1541 = arith.subf %1538, %1540 : vector<1x8xf32>
    %cst_421 = arith.constant 2.000000e+00 : f32
    %1542 = vector.broadcast %cst_421 : f32 to vector<1x8xf32>
    %1543 = arith.mulf %1542, %1541 : vector<1x8xf32>
    %cst_422 = arith.constant 0.845177233 : f32
    %1544 = vector.broadcast %cst_422 : f32 to vector<1x8xf32>
    %1545 = arith.mulf %1263, %1544 : vector<1x8xf32>
    %cst_423 = arith.constant 1.88417065 : f32
    %1546 = vector.broadcast %cst_423 : f32 to vector<1x8xf32>
    %1547 = arith.mulf %1270, %1546 : vector<1x8xf32>
    %1548 = arith.subf %1545, %1547 : vector<1x8xf32>
    %cst_424 = arith.constant 2.000000e+00 : f32
    %1549 = vector.broadcast %cst_424 : f32 to vector<1x8xf32>
    %1550 = arith.mulf %1549, %1548 : vector<1x8xf32>
    %1551 = arith.mulf %1256, %1536 : vector<1x8xf32>
    %cst_425 = arith.constant 1.88417065 : f32
    %1552 = vector.broadcast %cst_425 : f32 to vector<1x8xf32>
    %1553 = arith.addf %1552, %1551 : vector<1x8xf32>
    %1554 = arith.mulf %1270, %1550 : vector<1x8xf32>
    %1555 = arith.mulf %1277, %1543 : vector<1x8xf32>
    %1556 = arith.subf %1554, %1555 : vector<1x8xf32>
    %1557 = arith.addf %1553, %1556 : vector<1x8xf32>
    %1558 = arith.mulf %1256, %1543 : vector<1x8xf32>
    %cst_426 = arith.constant 0.845177233 : f32
    %1559 = vector.broadcast %cst_426 : f32 to vector<1x8xf32>
    %1560 = arith.addf %1559, %1558 : vector<1x8xf32>
    %1561 = arith.mulf %1277, %1536 : vector<1x8xf32>
    %1562 = arith.mulf %1263, %1550 : vector<1x8xf32>
    %1563 = arith.subf %1561, %1562 : vector<1x8xf32>
    %1564 = arith.addf %1560, %1563 : vector<1x8xf32>
    %1565 = arith.mulf %1256, %1550 : vector<1x8xf32>
    %cst_427 = arith.constant 1.68778217 : f32
    %1566 = vector.broadcast %cst_427 : f32 to vector<1x8xf32>
    %1567 = arith.addf %1566, %1565 : vector<1x8xf32>
    %1568 = arith.mulf %1263, %1543 : vector<1x8xf32>
    %1569 = arith.mulf %1270, %1536 : vector<1x8xf32>
    %1570 = arith.subf %1568, %1569 : vector<1x8xf32>
    %1571 = arith.addf %1567, %1570 : vector<1x8xf32>
    %c17_428 = arith.constant 17 : index
    %c0_429 = arith.constant 0 : index
    %1572 = vector.load %arg4[%c17_428, %c0_429] : memref<24x8xf32, #tpu.memory_space<vmem>>, vector<1x8xf32>
    %1573 = arith.mulf %1557, %1572 : vector<1x8xf32>
    %1574 = arith.addf %1322, %1573 : vector<1x8xf32>
    %1575 = arith.mulf %1564, %1572 : vector<1x8xf32>
    %1576 = arith.addf %1324, %1575 : vector<1x8xf32>
    %1577 = arith.mulf %1571, %1572 : vector<1x8xf32>
    %1578 = arith.addf %1326, %1577 : vector<1x8xf32>
    %c17_430 = arith.constant 17 : index
    %c0_431 = arith.constant 0 : index
    %1579 = vector.load %arg5[%c17_430, %c0_431] : memref<72x8xf32, #tpu.memory_space<vmem>>, vector<1x8xf32>
    tpu.vector_store %arg5[%c17_430, %c0_431], %1574 {strides = array<i32>} : memref<72x8xf32, #tpu.memory_space<vmem>>, vector<1x8xf32>,
    %c41 = arith.constant 41 : index
    %c0_432 = arith.constant 0 : index
    %1580 = vector.load %arg5[%c41, %c0_432] : memref<72x8xf32, #tpu.memory_space<vmem>>, vector<1x8xf32>
    tpu.vector_store %arg5[%c41, %c0_432], %1576 {strides = array<i32>} : memref<72x8xf32, #tpu.memory_space<vmem>>, vector<1x8xf32>,
    %c65_433 = arith.constant 65 : index
    %c0_434 = arith.constant 0 : index
    %1581 = vector.load %arg5[%c65_433, %c0_434] : memref<72x8xf32, #tpu.memory_space<vmem>>, vector<1x8xf32>
    tpu.vector_store %arg5[%c65_433, %c0_434], %1578 {strides = array<i32>} : memref<72x8xf32, #tpu.memory_space<vmem>>, vector<1x8xf32>,
    %c72 = arith.constant 72 : index
    %c0_435 = arith.constant 0 : index
    %1582 = vector.load %arg3[%c72, %c0_435] : memref<96x8xf32, #tpu.memory_space<vmem>>, vector<1x8xf32>
    %c73 = arith.constant 73 : index
    %c0_436 = arith.constant 0 : index
    %1583 = vector.load %arg3[%c73, %c0_436] : memref<96x8xf32, #tpu.memory_space<vmem>>, vector<1x8xf32>
    %c74 = arith.constant 74 : index
    %c0_437 = arith.constant 0 : index
    %1584 = vector.load %arg3[%c74, %c0_437] : memref<96x8xf32, #tpu.memory_space<vmem>>, vector<1x8xf32>
    %c75 = arith.constant 75 : index
    %c0_438 = arith.constant 0 : index
    %1585 = vector.load %arg3[%c75, %c0_438] : memref<96x8xf32, #tpu.memory_space<vmem>>, vector<1x8xf32>
    %1586 = arith.mulf %1582, %1582 : vector<1x8xf32>
    %1587 = arith.mulf %1583, %1583 : vector<1x8xf32>
    %1588 = arith.addf %1586, %1587 : vector<1x8xf32>
    %1589 = arith.mulf %1584, %1584 : vector<1x8xf32>
    %1590 = arith.addf %1588, %1589 : vector<1x8xf32>
    %1591 = arith.mulf %1585, %1585 : vector<1x8xf32>
    %1592 = arith.addf %1590, %1591 : vector<1x8xf32>
    %1593 = math.sqrt %1592 : vector<1x8xf32>
    %cst_439 = arith.constant 9.99999993E-9 : f32
    %1594 = vector.broadcast %cst_439 : f32 to vector<1x8xf32>
    %1595 = arith.addf %1593, %1594 : vector<1x8xf32>
    %cst_440 = arith.constant 1.000000e+00 : f32
    %1596 = vector.broadcast %cst_440 : f32 to vector<1x8xf32>
    %1597 = arith.divf %1596, %1595 : vector<1x8xf32>
    %1598 = arith.mulf %1582, %1597 : vector<1x8xf32>
    %1599 = arith.mulf %1583, %1597 : vector<1x8xf32>
    %1600 = arith.mulf %1584, %1597 : vector<1x8xf32>
    %1601 = arith.mulf %1585, %1597 : vector<1x8xf32>
    %1602 = arith.mulf %1408, %1598 : vector<1x8xf32>
    %1603 = arith.mulf %1415, %1599 : vector<1x8xf32>
    %1604 = arith.subf %1602, %1603 : vector<1x8xf32>
    %1605 = arith.mulf %1422, %1600 : vector<1x8xf32>
    %1606 = arith.subf %1604, %1605 : vector<1x8xf32>
    %1607 = arith.mulf %1429, %1601 : vector<1x8xf32>
    %1608 = arith.subf %1606, %1607 : vector<1x8xf32>
    %1609 = arith.mulf %1408, %1599 : vector<1x8xf32>
    %1610 = arith.mulf %1415, %1598 : vector<1x8xf32>
    %1611 = arith.addf %1609, %1610 : vector<1x8xf32>
    %1612 = arith.mulf %1422, %1601 : vector<1x8xf32>
    %1613 = arith.addf %1611, %1612 : vector<1x8xf32>
    %1614 = arith.mulf %1429, %1600 : vector<1x8xf32>
    %1615 = arith.subf %1613, %1614 : vector<1x8xf32>
    %1616 = arith.mulf %1408, %1600 : vector<1x8xf32>
    %1617 = arith.mulf %1415, %1601 : vector<1x8xf32>
    %1618 = arith.subf %1616, %1617 : vector<1x8xf32>
    %1619 = arith.mulf %1422, %1598 : vector<1x8xf32>
    %1620 = arith.addf %1618, %1619 : vector<1x8xf32>
    %1621 = arith.mulf %1429, %1599 : vector<1x8xf32>
    %1622 = arith.addf %1620, %1621 : vector<1x8xf32>
    %1623 = arith.mulf %1408, %1601 : vector<1x8xf32>
    %1624 = arith.mulf %1415, %1600 : vector<1x8xf32>
    %1625 = arith.addf %1623, %1624 : vector<1x8xf32>
    %1626 = arith.mulf %1422, %1599 : vector<1x8xf32>
    %1627 = arith.subf %1625, %1626 : vector<1x8xf32>
    %1628 = arith.mulf %1429, %1598 : vector<1x8xf32>
    %1629 = arith.addf %1627, %1628 : vector<1x8xf32>
    %cst_441 = arith.constant 1.20864582 : f32
    %1630 = vector.broadcast %cst_441 : f32 to vector<1x8xf32>
    %1631 = arith.mulf %1422, %1630 : vector<1x8xf32>
    %cst_442 = arith.constant -0.771603346 : f32
    %1632 = vector.broadcast %cst_442 : f32 to vector<1x8xf32>
    %1633 = arith.mulf %1429, %1632 : vector<1x8xf32>
    %1634 = arith.subf %1631, %1633 : vector<1x8xf32>
    %cst_443 = arith.constant 2.000000e+00 : f32
    %1635 = vector.broadcast %cst_443 : f32 to vector<1x8xf32>
    %1636 = arith.mulf %1635, %1634 : vector<1x8xf32>
    %cst_444 = arith.constant 1.64618957 : f32
    %1637 = vector.broadcast %cst_444 : f32 to vector<1x8xf32>
    %1638 = arith.mulf %1429, %1637 : vector<1x8xf32>
    %cst_445 = arith.constant 1.20864582 : f32
    %1639 = vector.broadcast %cst_445 : f32 to vector<1x8xf32>
    %1640 = arith.mulf %1415, %1639 : vector<1x8xf32>
    %1641 = arith.subf %1638, %1640 : vector<1x8xf32>
    %cst_446 = arith.constant 2.000000e+00 : f32
    %1642 = vector.broadcast %cst_446 : f32 to vector<1x8xf32>
    %1643 = arith.mulf %1642, %1641 : vector<1x8xf32>
    %cst_447 = arith.constant -0.771603346 : f32
    %1644 = vector.broadcast %cst_447 : f32 to vector<1x8xf32>
    %1645 = arith.mulf %1415, %1644 : vector<1x8xf32>
    %cst_448 = arith.constant 1.64618957 : f32
    %1646 = vector.broadcast %cst_448 : f32 to vector<1x8xf32>
    %1647 = arith.mulf %1422, %1646 : vector<1x8xf32>
    %1648 = arith.subf %1645, %1647 : vector<1x8xf32>
    %cst_449 = arith.constant 2.000000e+00 : f32
    %1649 = vector.broadcast %cst_449 : f32 to vector<1x8xf32>
    %1650 = arith.mulf %1649, %1648 : vector<1x8xf32>
    %1651 = arith.mulf %1408, %1636 : vector<1x8xf32>
    %cst_450 = arith.constant 1.64618957 : f32
    %1652 = vector.broadcast %cst_450 : f32 to vector<1x8xf32>
    %1653 = arith.addf %1652, %1651 : vector<1x8xf32>
    %1654 = arith.mulf %1422, %1650 : vector<1x8xf32>
    %1655 = arith.mulf %1429, %1643 : vector<1x8xf32>
    %1656 = arith.subf %1654, %1655 : vector<1x8xf32>
    %1657 = arith.addf %1653, %1656 : vector<1x8xf32>
    %1658 = arith.mulf %1408, %1643 : vector<1x8xf32>
    %cst_451 = arith.constant -0.771603346 : f32
    %1659 = vector.broadcast %cst_451 : f32 to vector<1x8xf32>
    %1660 = arith.addf %1659, %1658 : vector<1x8xf32>
    %1661 = arith.mulf %1429, %1636 : vector<1x8xf32>
    %1662 = arith.mulf %1415, %1650 : vector<1x8xf32>
    %1663 = arith.subf %1661, %1662 : vector<1x8xf32>
    %1664 = arith.addf %1660, %1663 : vector<1x8xf32>
    %1665 = arith.mulf %1408, %1650 : vector<1x8xf32>
    %cst_452 = arith.constant 1.20864582 : f32
    %1666 = vector.broadcast %cst_452 : f32 to vector<1x8xf32>
    %1667 = arith.addf %1666, %1665 : vector<1x8xf32>
    %1668 = arith.mulf %1415, %1643 : vector<1x8xf32>
    %1669 = arith.mulf %1422, %1636 : vector<1x8xf32>
    %1670 = arith.subf %1668, %1669 : vector<1x8xf32>
    %1671 = arith.addf %1667, %1670 : vector<1x8xf32>
    %c18_453 = arith.constant 18 : index
    %c0_454 = arith.constant 0 : index
    %1672 = vector.load %arg4[%c18_453, %c0_454] : memref<24x8xf32, #tpu.memory_space<vmem>>, vector<1x8xf32>
    %1673 = arith.mulf %1657, %1672 : vector<1x8xf32>
    %1674 = arith.addf %1474, %1673 : vector<1x8xf32>
    %1675 = arith.mulf %1664, %1672 : vector<1x8xf32>
    %1676 = arith.addf %1476, %1675 : vector<1x8xf32>
    %1677 = arith.mulf %1671, %1672 : vector<1x8xf32>
    %1678 = arith.addf %1478, %1677 : vector<1x8xf32>
    %c18_455 = arith.constant 18 : index
    %c0_456 = arith.constant 0 : index
    %1679 = vector.load %arg5[%c18_455, %c0_456] : memref<72x8xf32, #tpu.memory_space<vmem>>, vector<1x8xf32>
    tpu.vector_store %arg5[%c18_455, %c0_456], %1674 {strides = array<i32>} : memref<72x8xf32, #tpu.memory_space<vmem>>, vector<1x8xf32>,
    %c42 = arith.constant 42 : index
    %c0_457 = arith.constant 0 : index
    %1680 = vector.load %arg5[%c42, %c0_457] : memref<72x8xf32, #tpu.memory_space<vmem>>, vector<1x8xf32>
    tpu.vector_store %arg5[%c42, %c0_457], %1676 {strides = array<i32>} : memref<72x8xf32, #tpu.memory_space<vmem>>, vector<1x8xf32>,
    %c66_458 = arith.constant 66 : index
    %c0_459 = arith.constant 0 : index
    %1681 = vector.load %arg5[%c66_458, %c0_459] : memref<72x8xf32, #tpu.memory_space<vmem>>, vector<1x8xf32>
    tpu.vector_store %arg5[%c66_458, %c0_459], %1678 {strides = array<i32>} : memref<72x8xf32, #tpu.memory_space<vmem>>, vector<1x8xf32>,
    %c76 = arith.constant 76 : index
    %c0_460 = arith.constant 0 : index
    %1682 = vector.load %arg3[%c76, %c0_460] : memref<96x8xf32, #tpu.memory_space<vmem>>, vector<1x8xf32>
    %c77 = arith.constant 77 : index
    %c0_461 = arith.constant 0 : index
    %1683 = vector.load %arg3[%c77, %c0_461] : memref<96x8xf32, #tpu.memory_space<vmem>>, vector<1x8xf32>
    %c78 = arith.constant 78 : index
    %c0_462 = arith.constant 0 : index
    %1684 = vector.load %arg3[%c78, %c0_462] : memref<96x8xf32, #tpu.memory_space<vmem>>, vector<1x8xf32>
    %c79 = arith.constant 79 : index
    %c0_463 = arith.constant 0 : index
    %1685 = vector.load %arg3[%c79, %c0_463] : memref<96x8xf32, #tpu.memory_space<vmem>>, vector<1x8xf32>
    %1686 = arith.mulf %1682, %1682 : vector<1x8xf32>
    %1687 = arith.mulf %1683, %1683 : vector<1x8xf32>
    %1688 = arith.addf %1686, %1687 : vector<1x8xf32>
    %1689 = arith.mulf %1684, %1684 : vector<1x8xf32>
    %1690 = arith.addf %1688, %1689 : vector<1x8xf32>
    %1691 = arith.mulf %1685, %1685 : vector<1x8xf32>
    %1692 = arith.addf %1690, %1691 : vector<1x8xf32>
    %1693 = math.sqrt %1692 : vector<1x8xf32>
    %cst_464 = arith.constant 9.99999993E-9 : f32
    %1694 = vector.broadcast %cst_464 : f32 to vector<1x8xf32>
    %1695 = arith.addf %1693, %1694 : vector<1x8xf32>
    %cst_465 = arith.constant 1.000000e+00 : f32
    %1696 = vector.broadcast %cst_465 : f32 to vector<1x8xf32>
    %1697 = arith.divf %1696, %1695 : vector<1x8xf32>
    %1698 = arith.mulf %1682, %1697 : vector<1x8xf32>
    %1699 = arith.mulf %1683, %1697 : vector<1x8xf32>
    %1700 = arith.mulf %1684, %1697 : vector<1x8xf32>
    %1701 = arith.mulf %1685, %1697 : vector<1x8xf32>
    %1702 = arith.mulf %1508, %1698 : vector<1x8xf32>
    %1703 = arith.mulf %1515, %1699 : vector<1x8xf32>
    %1704 = arith.subf %1702, %1703 : vector<1x8xf32>
    %1705 = arith.mulf %1522, %1700 : vector<1x8xf32>
    %1706 = arith.subf %1704, %1705 : vector<1x8xf32>
    %1707 = arith.mulf %1529, %1701 : vector<1x8xf32>
    %1708 = arith.subf %1706, %1707 : vector<1x8xf32>
    %1709 = arith.mulf %1508, %1699 : vector<1x8xf32>
    %1710 = arith.mulf %1515, %1698 : vector<1x8xf32>
    %1711 = arith.addf %1709, %1710 : vector<1x8xf32>
    %1712 = arith.mulf %1522, %1701 : vector<1x8xf32>
    %1713 = arith.addf %1711, %1712 : vector<1x8xf32>
    %1714 = arith.mulf %1529, %1700 : vector<1x8xf32>
    %1715 = arith.subf %1713, %1714 : vector<1x8xf32>
    %1716 = arith.mulf %1508, %1700 : vector<1x8xf32>
    %1717 = arith.mulf %1515, %1701 : vector<1x8xf32>
    %1718 = arith.subf %1716, %1717 : vector<1x8xf32>
    %1719 = arith.mulf %1522, %1698 : vector<1x8xf32>
    %1720 = arith.addf %1718, %1719 : vector<1x8xf32>
    %1721 = arith.mulf %1529, %1699 : vector<1x8xf32>
    %1722 = arith.addf %1720, %1721 : vector<1x8xf32>
    %1723 = arith.mulf %1508, %1701 : vector<1x8xf32>
    %1724 = arith.mulf %1515, %1700 : vector<1x8xf32>
    %1725 = arith.addf %1723, %1724 : vector<1x8xf32>
    %1726 = arith.mulf %1522, %1699 : vector<1x8xf32>
    %1727 = arith.subf %1725, %1726 : vector<1x8xf32>
    %1728 = arith.mulf %1529, %1698 : vector<1x8xf32>
    %1729 = arith.addf %1727, %1728 : vector<1x8xf32>
    %cst_466 = arith.constant -0.177192807 : f32
    %1730 = vector.broadcast %cst_466 : f32 to vector<1x8xf32>
    %1731 = arith.mulf %1522, %1730 : vector<1x8xf32>
    %cst_467 = arith.constant 1.07095659 : f32
    %1732 = vector.broadcast %cst_467 : f32 to vector<1x8xf32>
    %1733 = arith.mulf %1529, %1732 : vector<1x8xf32>
    %1734 = arith.subf %1731, %1733 : vector<1x8xf32>
    %cst_468 = arith.constant 2.000000e+00 : f32
    %1735 = vector.broadcast %cst_468 : f32 to vector<1x8xf32>
    %1736 = arith.mulf %1735, %1734 : vector<1x8xf32>
    %cst_469 = arith.constant -0.971193969 : f32
    %1737 = vector.broadcast %cst_469 : f32 to vector<1x8xf32>
    %1738 = arith.mulf %1529, %1737 : vector<1x8xf32>
    %cst_470 = arith.constant -0.177192807 : f32
    %1739 = vector.broadcast %cst_470 : f32 to vector<1x8xf32>
    %1740 = arith.mulf %1515, %1739 : vector<1x8xf32>
    %1741 = arith.subf %1738, %1740 : vector<1x8xf32>
    %cst_471 = arith.constant 2.000000e+00 : f32
    %1742 = vector.broadcast %cst_471 : f32 to vector<1x8xf32>
    %1743 = arith.mulf %1742, %1741 : vector<1x8xf32>
    %cst_472 = arith.constant 1.07095659 : f32
    %1744 = vector.broadcast %cst_472 : f32 to vector<1x8xf32>
    %1745 = arith.mulf %1515, %1744 : vector<1x8xf32>
    %cst_473 = arith.constant -0.971193969 : f32
    %1746 = vector.broadcast %cst_473 : f32 to vector<1x8xf32>
    %1747 = arith.mulf %1522, %1746 : vector<1x8xf32>
    %1748 = arith.subf %1745, %1747 : vector<1x8xf32>
    %cst_474 = arith.constant 2.000000e+00 : f32
    %1749 = vector.broadcast %cst_474 : f32 to vector<1x8xf32>
    %1750 = arith.mulf %1749, %1748 : vector<1x8xf32>
    %1751 = arith.mulf %1508, %1736 : vector<1x8xf32>
    %cst_475 = arith.constant -0.971193969 : f32
    %1752 = vector.broadcast %cst_475 : f32 to vector<1x8xf32>
    %1753 = arith.addf %1752, %1751 : vector<1x8xf32>
    %1754 = arith.mulf %1522, %1750 : vector<1x8xf32>
    %1755 = arith.mulf %1529, %1743 : vector<1x8xf32>
    %1756 = arith.subf %1754, %1755 : vector<1x8xf32>
    %1757 = arith.addf %1753, %1756 : vector<1x8xf32>
    %1758 = arith.mulf %1508, %1743 : vector<1x8xf32>
    %cst_476 = arith.constant 1.07095659 : f32
    %1759 = vector.broadcast %cst_476 : f32 to vector<1x8xf32>
    %1760 = arith.addf %1759, %1758 : vector<1x8xf32>
    %1761 = arith.mulf %1529, %1736 : vector<1x8xf32>
    %1762 = arith.mulf %1515, %1750 : vector<1x8xf32>
    %1763 = arith.subf %1761, %1762 : vector<1x8xf32>
    %1764 = arith.addf %1760, %1763 : vector<1x8xf32>
    %1765 = arith.mulf %1508, %1750 : vector<1x8xf32>
    %cst_477 = arith.constant -0.177192807 : f32
    %1766 = vector.broadcast %cst_477 : f32 to vector<1x8xf32>
    %1767 = arith.addf %1766, %1765 : vector<1x8xf32>
    %1768 = arith.mulf %1515, %1743 : vector<1x8xf32>
    %1769 = arith.mulf %1522, %1736 : vector<1x8xf32>
    %1770 = arith.subf %1768, %1769 : vector<1x8xf32>
    %1771 = arith.addf %1767, %1770 : vector<1x8xf32>
    %c19_478 = arith.constant 19 : index
    %c0_479 = arith.constant 0 : index
    %1772 = vector.load %arg4[%c19_478, %c0_479] : memref<24x8xf32, #tpu.memory_space<vmem>>, vector<1x8xf32>
    %1773 = arith.mulf %1757, %1772 : vector<1x8xf32>
    %1774 = arith.addf %1574, %1773 : vector<1x8xf32>
    %1775 = arith.mulf %1764, %1772 : vector<1x8xf32>
    %1776 = arith.addf %1576, %1775 : vector<1x8xf32>
    %1777 = arith.mulf %1771, %1772 : vector<1x8xf32>
    %1778 = arith.addf %1578, %1777 : vector<1x8xf32>
    %c19_480 = arith.constant 19 : index
    %c0_481 = arith.constant 0 : index
    %1779 = vector.load %arg5[%c19_480, %c0_481] : memref<72x8xf32, #tpu.memory_space<vmem>>, vector<1x8xf32>
    tpu.vector_store %arg5[%c19_480, %c0_481], %1774 {strides = array<i32>} : memref<72x8xf32, #tpu.memory_space<vmem>>, vector<1x8xf32>,
    %c43 = arith.constant 43 : index
    %c0_482 = arith.constant 0 : index
    %1780 = vector.load %arg5[%c43, %c0_482] : memref<72x8xf32, #tpu.memory_space<vmem>>, vector<1x8xf32>
    tpu.vector_store %arg5[%c43, %c0_482], %1776 {strides = array<i32>} : memref<72x8xf32, #tpu.memory_space<vmem>>, vector<1x8xf32>,
    %c67_483 = arith.constant 67 : index
    %c0_484 = arith.constant 0 : index
    %1781 = vector.load %arg5[%c67_483, %c0_484] : memref<72x8xf32, #tpu.memory_space<vmem>>, vector<1x8xf32>
    tpu.vector_store %arg5[%c67_483, %c0_484], %1778 {strides = array<i32>} : memref<72x8xf32, #tpu.memory_space<vmem>>, vector<1x8xf32>,
    %c80 = arith.constant 80 : index
    %c0_485 = arith.constant 0 : index
    %1782 = vector.load %arg3[%c80, %c0_485] : memref<96x8xf32, #tpu.memory_space<vmem>>, vector<1x8xf32>
    %c81 = arith.constant 81 : index
    %c0_486 = arith.constant 0 : index
    %1783 = vector.load %arg3[%c81, %c0_486] : memref<96x8xf32, #tpu.memory_space<vmem>>, vector<1x8xf32>
    %c82 = arith.constant 82 : index
    %c0_487 = arith.constant 0 : index
    %1784 = vector.load %arg3[%c82, %c0_487] : memref<96x8xf32, #tpu.memory_space<vmem>>, vector<1x8xf32>
    %c83 = arith.constant 83 : index
    %c0_488 = arith.constant 0 : index
    %1785 = vector.load %arg3[%c83, %c0_488] : memref<96x8xf32, #tpu.memory_space<vmem>>, vector<1x8xf32>
    %1786 = arith.mulf %1782, %1782 : vector<1x8xf32>
    %1787 = arith.mulf %1783, %1783 : vector<1x8xf32>
    %1788 = arith.addf %1786, %1787 : vector<1x8xf32>
    %1789 = arith.mulf %1784, %1784 : vector<1x8xf32>
    %1790 = arith.addf %1788, %1789 : vector<1x8xf32>
    %1791 = arith.mulf %1785, %1785 : vector<1x8xf32>
    %1792 = arith.addf %1790, %1791 : vector<1x8xf32>
    %1793 = math.sqrt %1792 : vector<1x8xf32>
    %cst_489 = arith.constant 9.99999993E-9 : f32
    %1794 = vector.broadcast %cst_489 : f32 to vector<1x8xf32>
    %1795 = arith.addf %1793, %1794 : vector<1x8xf32>
    %cst_490 = arith.constant 1.000000e+00 : f32
    %1796 = vector.broadcast %cst_490 : f32 to vector<1x8xf32>
    %1797 = arith.divf %1796, %1795 : vector<1x8xf32>
    %1798 = arith.mulf %1782, %1797 : vector<1x8xf32>
    %1799 = arith.mulf %1783, %1797 : vector<1x8xf32>
    %1800 = arith.mulf %1784, %1797 : vector<1x8xf32>
    %1801 = arith.mulf %1785, %1797 : vector<1x8xf32>
    %1802 = arith.mulf %1608, %1798 : vector<1x8xf32>
    %1803 = arith.mulf %1615, %1799 : vector<1x8xf32>
    %1804 = arith.subf %1802, %1803 : vector<1x8xf32>
    %1805 = arith.mulf %1622, %1800 : vector<1x8xf32>
    %1806 = arith.subf %1804, %1805 : vector<1x8xf32>
    %1807 = arith.mulf %1629, %1801 : vector<1x8xf32>
    %1808 = arith.subf %1806, %1807 : vector<1x8xf32>
    %1809 = arith.mulf %1608, %1799 : vector<1x8xf32>
    %1810 = arith.mulf %1615, %1798 : vector<1x8xf32>
    %1811 = arith.addf %1809, %1810 : vector<1x8xf32>
    %1812 = arith.mulf %1622, %1801 : vector<1x8xf32>
    %1813 = arith.addf %1811, %1812 : vector<1x8xf32>
    %1814 = arith.mulf %1629, %1800 : vector<1x8xf32>
    %1815 = arith.subf %1813, %1814 : vector<1x8xf32>
    %1816 = arith.mulf %1608, %1800 : vector<1x8xf32>
    %1817 = arith.mulf %1615, %1801 : vector<1x8xf32>
    %1818 = arith.subf %1816, %1817 : vector<1x8xf32>
    %1819 = arith.mulf %1622, %1798 : vector<1x8xf32>
    %1820 = arith.addf %1818, %1819 : vector<1x8xf32>
    %1821 = arith.mulf %1629, %1799 : vector<1x8xf32>
    %1822 = arith.addf %1820, %1821 : vector<1x8xf32>
    %1823 = arith.mulf %1608, %1801 : vector<1x8xf32>
    %1824 = arith.mulf %1615, %1800 : vector<1x8xf32>
    %1825 = arith.addf %1823, %1824 : vector<1x8xf32>
    %1826 = arith.mulf %1622, %1799 : vector<1x8xf32>
    %1827 = arith.subf %1825, %1826 : vector<1x8xf32>
    %1828 = arith.mulf %1629, %1798 : vector<1x8xf32>
    %1829 = arith.addf %1827, %1828 : vector<1x8xf32>
    %cst_491 = arith.constant -0.62088412 : f32
    %1830 = vector.broadcast %cst_491 : f32 to vector<1x8xf32>
    %1831 = arith.mulf %1622, %1830 : vector<1x8xf32>
    %cst_492 = arith.constant 0.405201554 : f32
    %1832 = vector.broadcast %cst_492 : f32 to vector<1x8xf32>
    %1833 = arith.mulf %1629, %1832 : vector<1x8xf32>
    %1834 = arith.subf %1831, %1833 : vector<1x8xf32>
    %cst_493 = arith.constant 2.000000e+00 : f32
    %1835 = vector.broadcast %cst_493 : f32 to vector<1x8xf32>
    %1836 = arith.mulf %1835, %1834 : vector<1x8xf32>
    %cst_494 = arith.constant 0.863727748 : f32
    %1837 = vector.broadcast %cst_494 : f32 to vector<1x8xf32>
    %1838 = arith.mulf %1629, %1837 : vector<1x8xf32>
    %cst_495 = arith.constant -0.62088412 : f32
    %1839 = vector.broadcast %cst_495 : f32 to vector<1x8xf32>
    %1840 = arith.mulf %1615, %1839 : vector<1x8xf32>
    %1841 = arith.subf %1838, %1840 : vector<1x8xf32>
    %cst_496 = arith.constant 2.000000e+00 : f32
    %1842 = vector.broadcast %cst_496 : f32 to vector<1x8xf32>
    %1843 = arith.mulf %1842, %1841 : vector<1x8xf32>
    %cst_497 = arith.constant 0.405201554 : f32
    %1844 = vector.broadcast %cst_497 : f32 to vector<1x8xf32>
    %1845 = arith.mulf %1615, %1844 : vector<1x8xf32>
    %cst_498 = arith.constant 0.863727748 : f32
    %1846 = vector.broadcast %cst_498 : f32 to vector<1x8xf32>
    %1847 = arith.mulf %1622, %1846 : vector<1x8xf32>
    %1848 = arith.subf %1845, %1847 : vector<1x8xf32>
    %cst_499 = arith.constant 2.000000e+00 : f32
    %1849 = vector.broadcast %cst_499 : f32 to vector<1x8xf32>
    %1850 = arith.mulf %1849, %1848 : vector<1x8xf32>
    %1851 = arith.mulf %1608, %1836 : vector<1x8xf32>
    %cst_500 = arith.constant 0.863727748 : f32
    %1852 = vector.broadcast %cst_500 : f32 to vector<1x8xf32>
    %1853 = arith.addf %1852, %1851 : vector<1x8xf32>
    %1854 = arith.mulf %1622, %1850 : vector<1x8xf32>
    %1855 = arith.mulf %1629, %1843 : vector<1x8xf32>
    %1856 = arith.subf %1854, %1855 : vector<1x8xf32>
    %1857 = arith.addf %1853, %1856 : vector<1x8xf32>
    %1858 = arith.mulf %1608, %1843 : vector<1x8xf32>
    %cst_501 = arith.constant 0.405201554 : f32
    %1859 = vector.broadcast %cst_501 : f32 to vector<1x8xf32>
    %1860 = arith.addf %1859, %1858 : vector<1x8xf32>
    %1861 = arith.mulf %1629, %1836 : vector<1x8xf32>
    %1862 = arith.mulf %1615, %1850 : vector<1x8xf32>
    %1863 = arith.subf %1861, %1862 : vector<1x8xf32>
    %1864 = arith.addf %1860, %1863 : vector<1x8xf32>
    %1865 = arith.mulf %1608, %1850 : vector<1x8xf32>
    %cst_502 = arith.constant -0.62088412 : f32
    %1866 = vector.broadcast %cst_502 : f32 to vector<1x8xf32>
    %1867 = arith.addf %1866, %1865 : vector<1x8xf32>
    %1868 = arith.mulf %1615, %1843 : vector<1x8xf32>
    %1869 = arith.mulf %1622, %1836 : vector<1x8xf32>
    %1870 = arith.subf %1868, %1869 : vector<1x8xf32>
    %1871 = arith.addf %1867, %1870 : vector<1x8xf32>
    %c20_503 = arith.constant 20 : index
    %c0_504 = arith.constant 0 : index
    %1872 = vector.load %arg4[%c20_503, %c0_504] : memref<24x8xf32, #tpu.memory_space<vmem>>, vector<1x8xf32>
    %1873 = arith.mulf %1857, %1872 : vector<1x8xf32>
    %1874 = arith.addf %1674, %1873 : vector<1x8xf32>
    %1875 = arith.mulf %1864, %1872 : vector<1x8xf32>
    %1876 = arith.addf %1676, %1875 : vector<1x8xf32>
    %1877 = arith.mulf %1871, %1872 : vector<1x8xf32>
    %1878 = arith.addf %1678, %1877 : vector<1x8xf32>
    %c20_505 = arith.constant 20 : index
    %c0_506 = arith.constant 0 : index
    %1879 = vector.load %arg5[%c20_505, %c0_506] : memref<72x8xf32, #tpu.memory_space<vmem>>, vector<1x8xf32>
    tpu.vector_store %arg5[%c20_505, %c0_506], %1874 {strides = array<i32>} : memref<72x8xf32, #tpu.memory_space<vmem>>, vector<1x8xf32>,
    %c44 = arith.constant 44 : index
    %c0_507 = arith.constant 0 : index
    %1880 = vector.load %arg5[%c44, %c0_507] : memref<72x8xf32, #tpu.memory_space<vmem>>, vector<1x8xf32>
    tpu.vector_store %arg5[%c44, %c0_507], %1876 {strides = array<i32>} : memref<72x8xf32, #tpu.memory_space<vmem>>, vector<1x8xf32>,
    %c68_508 = arith.constant 68 : index
    %c0_509 = arith.constant 0 : index
    %1881 = vector.load %arg5[%c68_508, %c0_509] : memref<72x8xf32, #tpu.memory_space<vmem>>, vector<1x8xf32>
    tpu.vector_store %arg5[%c68_508, %c0_509], %1878 {strides = array<i32>} : memref<72x8xf32, #tpu.memory_space<vmem>>, vector<1x8xf32>,
    %c84 = arith.constant 84 : index
    %c0_510 = arith.constant 0 : index
    %1882 = vector.load %arg3[%c84, %c0_510] : memref<96x8xf32, #tpu.memory_space<vmem>>, vector<1x8xf32>
    %c85 = arith.constant 85 : index
    %c0_511 = arith.constant 0 : index
    %1883 = vector.load %arg3[%c85, %c0_511] : memref<96x8xf32, #tpu.memory_space<vmem>>, vector<1x8xf32>
    %c86 = arith.constant 86 : index
    %c0_512 = arith.constant 0 : index
    %1884 = vector.load %arg3[%c86, %c0_512] : memref<96x8xf32, #tpu.memory_space<vmem>>, vector<1x8xf32>
    %c87 = arith.constant 87 : index
    %c0_513 = arith.constant 0 : index
    %1885 = vector.load %arg3[%c87, %c0_513] : memref<96x8xf32, #tpu.memory_space<vmem>>, vector<1x8xf32>
    %1886 = arith.mulf %1882, %1882 : vector<1x8xf32>
    %1887 = arith.mulf %1883, %1883 : vector<1x8xf32>
    %1888 = arith.addf %1886, %1887 : vector<1x8xf32>
    %1889 = arith.mulf %1884, %1884 : vector<1x8xf32>
    %1890 = arith.addf %1888, %1889 : vector<1x8xf32>
    %1891 = arith.mulf %1885, %1885 : vector<1x8xf32>
    %1892 = arith.addf %1890, %1891 : vector<1x8xf32>
    %1893 = math.sqrt %1892 : vector<1x8xf32>
    %cst_514 = arith.constant 9.99999993E-9 : f32
    %1894 = vector.broadcast %cst_514 : f32 to vector<1x8xf32>
    %1895 = arith.addf %1893, %1894 : vector<1x8xf32>
    %cst_515 = arith.constant 1.000000e+00 : f32
    %1896 = vector.broadcast %cst_515 : f32 to vector<1x8xf32>
    %1897 = arith.divf %1896, %1895 : vector<1x8xf32>
    %1898 = arith.mulf %1882, %1897 : vector<1x8xf32>
    %1899 = arith.mulf %1883, %1897 : vector<1x8xf32>
    %1900 = arith.mulf %1884, %1897 : vector<1x8xf32>
    %1901 = arith.mulf %1885, %1897 : vector<1x8xf32>
    %1902 = arith.mulf %1708, %1898 : vector<1x8xf32>
    %1903 = arith.mulf %1715, %1899 : vector<1x8xf32>
    %1904 = arith.subf %1902, %1903 : vector<1x8xf32>
    %1905 = arith.mulf %1722, %1900 : vector<1x8xf32>
    %1906 = arith.subf %1904, %1905 : vector<1x8xf32>
    %1907 = arith.mulf %1729, %1901 : vector<1x8xf32>
    %1908 = arith.subf %1906, %1907 : vector<1x8xf32>
    %1909 = arith.mulf %1708, %1899 : vector<1x8xf32>
    %1910 = arith.mulf %1715, %1898 : vector<1x8xf32>
    %1911 = arith.addf %1909, %1910 : vector<1x8xf32>
    %1912 = arith.mulf %1722, %1901 : vector<1x8xf32>
    %1913 = arith.addf %1911, %1912 : vector<1x8xf32>
    %1914 = arith.mulf %1729, %1900 : vector<1x8xf32>
    %1915 = arith.subf %1913, %1914 : vector<1x8xf32>
    %1916 = arith.mulf %1708, %1900 : vector<1x8xf32>
    %1917 = arith.mulf %1715, %1901 : vector<1x8xf32>
    %1918 = arith.subf %1916, %1917 : vector<1x8xf32>
    %1919 = arith.mulf %1722, %1898 : vector<1x8xf32>
    %1920 = arith.addf %1918, %1919 : vector<1x8xf32>
    %1921 = arith.mulf %1729, %1899 : vector<1x8xf32>
    %1922 = arith.addf %1920, %1921 : vector<1x8xf32>
    %1923 = arith.mulf %1708, %1901 : vector<1x8xf32>
    %1924 = arith.mulf %1715, %1900 : vector<1x8xf32>
    %1925 = arith.addf %1923, %1924 : vector<1x8xf32>
    %1926 = arith.mulf %1722, %1899 : vector<1x8xf32>
    %1927 = arith.subf %1925, %1926 : vector<1x8xf32>
    %1928 = arith.mulf %1729, %1898 : vector<1x8xf32>
    %1929 = arith.addf %1927, %1928 : vector<1x8xf32>
    %cst_516 = arith.constant -0.714963853 : f32
    %1930 = vector.broadcast %cst_516 : f32 to vector<1x8xf32>
    %1931 = arith.mulf %1722, %1930 : vector<1x8xf32>
    %cst_517 = arith.constant -2.48331022 : f32
    %1932 = vector.broadcast %cst_517 : f32 to vector<1x8xf32>
    %1933 = arith.mulf %1729, %1932 : vector<1x8xf32>
    %1934 = arith.subf %1931, %1933 : vector<1x8xf32>
    %cst_518 = arith.constant 2.000000e+00 : f32
    %1935 = vector.broadcast %cst_518 : f32 to vector<1x8xf32>
    %1936 = arith.mulf %1935, %1934 : vector<1x8xf32>
    %cst_519 = arith.constant 0.230393931 : f32
    %1937 = vector.broadcast %cst_519 : f32 to vector<1x8xf32>
    %1938 = arith.mulf %1729, %1937 : vector<1x8xf32>
    %cst_520 = arith.constant -0.714963853 : f32
    %1939 = vector.broadcast %cst_520 : f32 to vector<1x8xf32>
    %1940 = arith.mulf %1715, %1939 : vector<1x8xf32>
    %1941 = arith.subf %1938, %1940 : vector<1x8xf32>
    %cst_521 = arith.constant 2.000000e+00 : f32
    %1942 = vector.broadcast %cst_521 : f32 to vector<1x8xf32>
    %1943 = arith.mulf %1942, %1941 : vector<1x8xf32>
    %cst_522 = arith.constant -2.48331022 : f32
    %1944 = vector.broadcast %cst_522 : f32 to vector<1x8xf32>
    %1945 = arith.mulf %1715, %1944 : vector<1x8xf32>
    %cst_523 = arith.constant 0.230393931 : f32
    %1946 = vector.broadcast %cst_523 : f32 to vector<1x8xf32>
    %1947 = arith.mulf %1722, %1946 : vector<1x8xf32>
    %1948 = arith.subf %1945, %1947 : vector<1x8xf32>
    %cst_524 = arith.constant 2.000000e+00 : f32
    %1949 = vector.broadcast %cst_524 : f32 to vector<1x8xf32>
    %1950 = arith.mulf %1949, %1948 : vector<1x8xf32>
    %1951 = arith.mulf %1708, %1936 : vector<1x8xf32>
    %cst_525 = arith.constant 0.230393931 : f32
    %1952 = vector.broadcast %cst_525 : f32 to vector<1x8xf32>
    %1953 = arith.addf %1952, %1951 : vector<1x8xf32>
    %1954 = arith.mulf %1722, %1950 : vector<1x8xf32>
    %1955 = arith.mulf %1729, %1943 : vector<1x8xf32>
    %1956 = arith.subf %1954, %1955 : vector<1x8xf32>
    %1957 = arith.addf %1953, %1956 : vector<1x8xf32>
    %1958 = arith.mulf %1708, %1943 : vector<1x8xf32>
    %cst_526 = arith.constant -2.48331022 : f32
    %1959 = vector.broadcast %cst_526 : f32 to vector<1x8xf32>
    %1960 = arith.addf %1959, %1958 : vector<1x8xf32>
    %1961 = arith.mulf %1729, %1936 : vector<1x8xf32>
    %1962 = arith.mulf %1715, %1950 : vector<1x8xf32>
    %1963 = arith.subf %1961, %1962 : vector<1x8xf32>
    %1964 = arith.addf %1960, %1963 : vector<1x8xf32>
    %1965 = arith.mulf %1708, %1950 : vector<1x8xf32>
    %cst_527 = arith.constant -0.714963853 : f32
    %1966 = vector.broadcast %cst_527 : f32 to vector<1x8xf32>
    %1967 = arith.addf %1966, %1965 : vector<1x8xf32>
    %1968 = arith.mulf %1715, %1943 : vector<1x8xf32>
    %1969 = arith.mulf %1722, %1936 : vector<1x8xf32>
    %1970 = arith.subf %1968, %1969 : vector<1x8xf32>
    %1971 = arith.addf %1967, %1970 : vector<1x8xf32>
    %c21_528 = arith.constant 21 : index
    %c0_529 = arith.constant 0 : index
    %1972 = vector.load %arg4[%c21_528, %c0_529] : memref<24x8xf32, #tpu.memory_space<vmem>>, vector<1x8xf32>
    %1973 = arith.mulf %1957, %1972 : vector<1x8xf32>
    %1974 = arith.addf %1774, %1973 : vector<1x8xf32>
    %1975 = arith.mulf %1964, %1972 : vector<1x8xf32>
    %1976 = arith.addf %1776, %1975 : vector<1x8xf32>
    %1977 = arith.mulf %1971, %1972 : vector<1x8xf32>
    %1978 = arith.addf %1778, %1977 : vector<1x8xf32>
    %c21_530 = arith.constant 21 : index
    %c0_531 = arith.constant 0 : index
    %1979 = vector.load %arg5[%c21_530, %c0_531] : memref<72x8xf32, #tpu.memory_space<vmem>>, vector<1x8xf32>
    tpu.vector_store %arg5[%c21_530, %c0_531], %1974 {strides = array<i32>} : memref<72x8xf32, #tpu.memory_space<vmem>>, vector<1x8xf32>,
    %c45 = arith.constant 45 : index
    %c0_532 = arith.constant 0 : index
    %1980 = vector.load %arg5[%c45, %c0_532] : memref<72x8xf32, #tpu.memory_space<vmem>>, vector<1x8xf32>
    tpu.vector_store %arg5[%c45, %c0_532], %1976 {strides = array<i32>} : memref<72x8xf32, #tpu.memory_space<vmem>>, vector<1x8xf32>,
    %c69_533 = arith.constant 69 : index
    %c0_534 = arith.constant 0 : index
    %1981 = vector.load %arg5[%c69_533, %c0_534] : memref<72x8xf32, #tpu.memory_space<vmem>>, vector<1x8xf32>
    tpu.vector_store %arg5[%c69_533, %c0_534], %1978 {strides = array<i32>} : memref<72x8xf32, #tpu.memory_space<vmem>>, vector<1x8xf32>,
    %cst_535 = arith.constant -1.79603982 : f32
    %1982 = vector.broadcast %cst_535 : f32 to vector<1x8xf32>
    %1983 = arith.mulf %1822, %1982 : vector<1x8xf32>
    %cst_536 = arith.constant 2.3848474 : f32
    %1984 = vector.broadcast %cst_536 : f32 to vector<1x8xf32>
    %1985 = arith.mulf %1829, %1984 : vector<1x8xf32>
    %1986 = arith.subf %1983, %1985 : vector<1x8xf32>
    %cst_537 = arith.constant 2.000000e+00 : f32
    %1987 = vector.broadcast %cst_537 : f32 to vector<1x8xf32>
    %1988 = arith.mulf %1987, %1986 : vector<1x8xf32>
    %cst_538 = arith.constant -0.187430397 : f32
    %1989 = vector.broadcast %cst_538 : f32 to vector<1x8xf32>
    %1990 = arith.mulf %1829, %1989 : vector<1x8xf32>
    %cst_539 = arith.constant -1.79603982 : f32
    %1991 = vector.broadcast %cst_539 : f32 to vector<1x8xf32>
    %1992 = arith.mulf %1815, %1991 : vector<1x8xf32>
    %1993 = arith.subf %1990, %1992 : vector<1x8xf32>
    %cst_540 = arith.constant 2.000000e+00 : f32
    %1994 = vector.broadcast %cst_540 : f32 to vector<1x8xf32>
    %1995 = arith.mulf %1994, %1993 : vector<1x8xf32>
    %cst_541 = arith.constant 2.3848474 : f32
    %1996 = vector.broadcast %cst_541 : f32 to vector<1x8xf32>
    %1997 = arith.mulf %1815, %1996 : vector<1x8xf32>
    %cst_542 = arith.constant -0.187430397 : f32
    %1998 = vector.broadcast %cst_542 : f32 to vector<1x8xf32>
    %1999 = arith.mulf %1822, %1998 : vector<1x8xf32>
    %2000 = arith.subf %1997, %1999 : vector<1x8xf32>
    %cst_543 = arith.constant 2.000000e+00 : f32
    %2001 = vector.broadcast %cst_543 : f32 to vector<1x8xf32>
    %2002 = arith.mulf %2001, %2000 : vector<1x8xf32>
    %2003 = arith.mulf %1808, %1988 : vector<1x8xf32>
    %cst_544 = arith.constant -0.187430397 : f32
    %2004 = vector.broadcast %cst_544 : f32 to vector<1x8xf32>
    %2005 = arith.addf %2004, %2003 : vector<1x8xf32>
    %2006 = arith.mulf %1822, %2002 : vector<1x8xf32>
    %2007 = arith.mulf %1829, %1995 : vector<1x8xf32>
    %2008 = arith.subf %2006, %2007 : vector<1x8xf32>
    %2009 = arith.addf %2005, %2008 : vector<1x8xf32>
    %2010 = arith.mulf %1808, %1995 : vector<1x8xf32>
    %cst_545 = arith.constant 2.3848474 : f32
    %2011 = vector.broadcast %cst_545 : f32 to vector<1x8xf32>
    %2012 = arith.addf %2011, %2010 : vector<1x8xf32>
    %2013 = arith.mulf %1829, %1988 : vector<1x8xf32>
    %2014 = arith.mulf %1815, %2002 : vector<1x8xf32>
    %2015 = arith.subf %2013, %2014 : vector<1x8xf32>
    %2016 = arith.addf %2012, %2015 : vector<1x8xf32>
    %2017 = arith.mulf %1808, %2002 : vector<1x8xf32>
    %cst_546 = arith.constant -1.79603982 : f32
    %2018 = vector.broadcast %cst_546 : f32 to vector<1x8xf32>
    %2019 = arith.addf %2018, %2017 : vector<1x8xf32>
    %2020 = arith.mulf %1815, %1995 : vector<1x8xf32>
    %2021 = arith.mulf %1822, %1988 : vector<1x8xf32>
    %2022 = arith.subf %2020, %2021 : vector<1x8xf32>
    %2023 = arith.addf %2019, %2022 : vector<1x8xf32>
    %c22_547 = arith.constant 22 : index
    %c0_548 = arith.constant 0 : index
    %2024 = vector.load %arg4[%c22_547, %c0_548] : memref<24x8xf32, #tpu.memory_space<vmem>>, vector<1x8xf32>
    %2025 = arith.mulf %2009, %2024 : vector<1x8xf32>
    %2026 = arith.addf %1874, %2025 : vector<1x8xf32>
    %2027 = arith.mulf %2016, %2024 : vector<1x8xf32>
    %2028 = arith.addf %1876, %2027 : vector<1x8xf32>
    %2029 = arith.mulf %2023, %2024 : vector<1x8xf32>
    %2030 = arith.addf %1878, %2029 : vector<1x8xf32>
    %c22_549 = arith.constant 22 : index
    %c0_550 = arith.constant 0 : index
    %2031 = vector.load %arg5[%c22_549, %c0_550] : memref<72x8xf32, #tpu.memory_space<vmem>>, vector<1x8xf32>
    tpu.vector_store %arg5[%c22_549, %c0_550], %2026 {strides = array<i32>} : memref<72x8xf32, #tpu.memory_space<vmem>>, vector<1x8xf32>,
    %c46 = arith.constant 46 : index
    %c0_551 = arith.constant 0 : index
    %2032 = vector.load %arg5[%c46, %c0_551] : memref<72x8xf32, #tpu.memory_space<vmem>>, vector<1x8xf32>
    tpu.vector_store %arg5[%c46, %c0_551], %2028 {strides = array<i32>} : memref<72x8xf32, #tpu.memory_space<vmem>>, vector<1x8xf32>,
    %c70_552 = arith.constant 70 : index
    %c0_553 = arith.constant 0 : index
    %2033 = vector.load %arg5[%c70_552, %c0_553] : memref<72x8xf32, #tpu.memory_space<vmem>>, vector<1x8xf32>
    tpu.vector_store %arg5[%c70_552, %c0_553], %2030 {strides = array<i32>} : memref<72x8xf32, #tpu.memory_space<vmem>>, vector<1x8xf32>,
    %cst_554 = arith.constant -1.50076282 : f32
    %2034 = vector.broadcast %cst_554 : f32 to vector<1x8xf32>
    %2035 = arith.mulf %1922, %2034 : vector<1x8xf32>
    %cst_555 = arith.constant -1.26801443 : f32
    %2036 = vector.broadcast %cst_555 : f32 to vector<1x8xf32>
    %2037 = arith.mulf %1929, %2036 : vector<1x8xf32>
    %2038 = arith.subf %2035, %2037 : vector<1x8xf32>
    %cst_556 = arith.constant 2.000000e+00 : f32
    %2039 = vector.broadcast %cst_556 : f32 to vector<1x8xf32>
    %2040 = arith.mulf %2039, %2038 : vector<1x8xf32>
    %cst_557 = arith.constant -1.03631258 : f32
    %2041 = vector.broadcast %cst_557 : f32 to vector<1x8xf32>
    %2042 = arith.mulf %1929, %2041 : vector<1x8xf32>
    %cst_558 = arith.constant -1.50076282 : f32
    %2043 = vector.broadcast %cst_558 : f32 to vector<1x8xf32>
    %2044 = arith.mulf %1915, %2043 : vector<1x8xf32>
    %2045 = arith.subf %2042, %2044 : vector<1x8xf32>
    %cst_559 = arith.constant 2.000000e+00 : f32
    %2046 = vector.broadcast %cst_559 : f32 to vector<1x8xf32>
    %2047 = arith.mulf %2046, %2045 : vector<1x8xf32>
    %cst_560 = arith.constant -1.26801443 : f32
    %2048 = vector.broadcast %cst_560 : f32 to vector<1x8xf32>
    %2049 = arith.mulf %1915, %2048 : vector<1x8xf32>
    %cst_561 = arith.constant -1.03631258 : f32
    %2050 = vector.broadcast %cst_561 : f32 to vector<1x8xf32>
    %2051 = arith.mulf %1922, %2050 : vector<1x8xf32>
    %2052 = arith.subf %2049, %2051 : vector<1x8xf32>
    %cst_562 = arith.constant 2.000000e+00 : f32
    %2053 = vector.broadcast %cst_562 : f32 to vector<1x8xf32>
    %2054 = arith.mulf %2053, %2052 : vector<1x8xf32>
    %2055 = arith.mulf %1908, %2040 : vector<1x8xf32>
    %cst_563 = arith.constant -1.03631258 : f32
    %2056 = vector.broadcast %cst_563 : f32 to vector<1x8xf32>
    %2057 = arith.addf %2056, %2055 : vector<1x8xf32>
    %2058 = arith.mulf %1922, %2054 : vector<1x8xf32>
    %2059 = arith.mulf %1929, %2047 : vector<1x8xf32>
    %2060 = arith.subf %2058, %2059 : vector<1x8xf32>
    %2061 = arith.addf %2057, %2060 : vector<1x8xf32>
    %2062 = arith.mulf %1908, %2047 : vector<1x8xf32>
    %cst_564 = arith.constant -1.26801443 : f32
    %2063 = vector.broadcast %cst_564 : f32 to vector<1x8xf32>
    %2064 = arith.addf %2063, %2062 : vector<1x8xf32>
    %2065 = arith.mulf %1929, %2040 : vector<1x8xf32>
    %2066 = arith.mulf %1915, %2054 : vector<1x8xf32>
    %2067 = arith.subf %2065, %2066 : vector<1x8xf32>
    %2068 = arith.addf %2064, %2067 : vector<1x8xf32>
    %2069 = arith.mulf %1908, %2054 : vector<1x8xf32>
    %cst_565 = arith.constant -1.50076282 : f32
    %2070 = vector.broadcast %cst_565 : f32 to vector<1x8xf32>
    %2071 = arith.addf %2070, %2069 : vector<1x8xf32>
    %2072 = arith.mulf %1915, %2047 : vector<1x8xf32>
    %2073 = arith.mulf %1922, %2040 : vector<1x8xf32>
    %2074 = arith.subf %2072, %2073 : vector<1x8xf32>
    %2075 = arith.addf %2071, %2074 : vector<1x8xf32>
    %c23_566 = arith.constant 23 : index
    %c0_567 = arith.constant 0 : index
    %2076 = vector.load %arg4[%c23_566, %c0_567] : memref<24x8xf32, #tpu.memory_space<vmem>>, vector<1x8xf32>
    %2077 = arith.mulf %2061, %2076 : vector<1x8xf32>
    %2078 = arith.addf %1974, %2077 : vector<1x8xf32>
    %2079 = arith.mulf %2068, %2076 : vector<1x8xf32>
    %2080 = arith.addf %1976, %2079 : vector<1x8xf32>
    %2081 = arith.mulf %2075, %2076 : vector<1x8xf32>
    %2082 = arith.addf %1978, %2081 : vector<1x8xf32>
    %c23_568 = arith.constant 23 : index
    %c0_569 = arith.constant 0 : index
    %2083 = vector.load %arg5[%c23_568, %c0_569] : memref<72x8xf32, #tpu.memory_space<vmem>>, vector<1x8xf32>
    tpu.vector_store %arg5[%c23_568, %c0_569], %2078 {strides = array<i32>} : memref<72x8xf32, #tpu.memory_space<vmem>>, vector<1x8xf32>,
    %c47 = arith.constant 47 : index
    %c0_570 = arith.constant 0 : index
    %2084 = vector.load %arg5[%c47, %c0_570] : memref<72x8xf32, #tpu.memory_space<vmem>>, vector<1x8xf32>
    tpu.vector_store %arg5[%c47, %c0_570], %2080 {strides = array<i32>} : memref<72x8xf32, #tpu.memory_space<vmem>>, vector<1x8xf32>,
    %c71_571 = arith.constant 71 : index
    %c0_572 = arith.constant 0 : index
    %2085 = vector.load %arg5[%c71_571, %c0_572] : memref<72x8xf32, #tpu.memory_space<vmem>>, vector<1x8xf32>
    tpu.vector_store %arg5[%c71_571, %c0_572], %2082 {strides = array<i32>} : memref<72x8xf32, #tpu.memory_space<vmem>>, vector<1x8xf32>,
    return
  }
  func.func @transform_0(%arg0: i32) -> (i32, i32) {
    %c0_i32 = arith.constant 0 : i32
    %c0_i32_0 = arith.constant 0 : i32
    return %c0_i32, %arg0 : i32, i32
  }
  func.func @transform_1(%arg0: i32) -> (i32, i32) {
    %c0_i32 = arith.constant 0 : i32
    %c0_i32_0 = arith.constant 0 : i32
    return %c0_i32, %arg0 : i32, i32
  }
  func.func @transform_2(%arg0: i32) -> (i32, i32) {
    %c0_i32 = arith.constant 0 : i32
    %c0_i32_0 = arith.constant 0 : i32
    return %c0_i32, %arg0 : i32, i32
  }
  func.func @transform_3(%arg0: i32) -> (i32, i32) {
    %c0_i32 = arith.constant 0 : i32
    %c0_i32_0 = arith.constant 0 : i32
    return %c0_i32, %arg0 : i32, i32
  }
  func.func @transform_4(%arg0: i32) -> (i32, i32) {
    %c0_i32 = arith.constant 0 : i32
    %c0_i32_0 = arith.constant 0 : i32
    return %c0_i32, %arg0 : i32, i32
  }
}

</mosaic_0001>

<llo_original>
// kernel: tpu_custom_call.1
$region0: #{tpu_custom_call.1}
  #allocation0 [shape = 'u32[]', space=smem, size = 0x4, offset = 0x4, fixed_abs, tag = 'smem constant byte address 0x4 - core index']
  #allocation1 [shape = 'u32[72,128]{1,0:T(1,128)}', space=vmem, size = 0x9000, scoped, tag = 'internal scratch']
  %s0 = inlined_call_operand.vmem [shape: f32[4,8], index: 0, kind: input, shape index: {}]
  %s1 = inlined_call_operand.vmem [shape: f32[3,8], index: 1, kind: input, shape index: {}]
  %s2 = inlined_call_operand.vmem [shape: f32[96,8], index: 2, kind: input, shape index: {}]
  %s3 = inlined_call_operand.vmem [shape: f32[24,8], index: 3, kind: input, shape index: {}]
  %s4 = inlined_call_operand.vmem [shape: f32[72,8], index: 4, kind: output, shape index: {}]
  %s5 = sld [smem:[#allocation0]]
  $region26: #{tpu_custom_call.1} parent=0
    _
  %s7 = ssub.s32 1, %s5
  %s8 = scalar_select 0, %s7, %s5
  // Predicated region
  $region2: #{tpu_custom_call.1} parent=0 // pred_check
    _
  $region3: #{tpu_custom_call.1} parent=0 // pred_check_branch
    %10 = sbr.rel (0) target = $region5
  $region4: #{tpu_custom_call.1} parent=0 // pred_region
    _
  $region5: #{tpu_custom_call.1} parent=0 // pred_fallthru
    _
  // Predicated region
  $region6: #{tpu_custom_call.1} parent=0 // pred_check
    _
  $region7: #{tpu_custom_call.1} parent=0 // pred_check_branch
    %12 = sbr.rel (0) target = $region9
  $region8: #{tpu_custom_call.1} parent=0 // pred_region
    _
  $region9: #{tpu_custom_call.1} parent=0 // pred_fallthru
    _
  // Predicated region
  $region10: #{tpu_custom_call.1} parent=0 // pred_check
    _
  $region11: #{tpu_custom_call.1} parent=0 // pred_check_branch
    %14 = sbr.rel (0) target = $region13
  $region12: #{tpu_custom_call.1} parent=0 // pred_region
    _
  $region13: #{tpu_custom_call.1} parent=0 // pred_fallthru
    _
  // Predicated region
  $region14: #{tpu_custom_call.1} parent=0 // pred_check
    _
  $region15: #{tpu_custom_call.1} parent=0 // pred_check_branch
    %16 = sbr.rel (0) target = $region17
  $region16: #{tpu_custom_call.1} parent=0 // pred_region
    _
  $region17: #{tpu_custom_call.1} parent=0 // pred_fallthru
    _
  %v17 = vld [vmem:[%s0] sm:$0x1]
  %v18 = vld [vmem:[%s0 + $0x1] sm:$0x1]
  %v19 = vld [vmem:[%s0 + $0x2] sm:$0x1]
  %v20 = vld [vmem:[%s0 + $0x3] sm:$0x1]
  %v21 = vmul.f32 %v17, %v17
  %v22 = vmul.f32 %v18, %v18
  %v23 = vadd.f32 %v21, %v22
  %v24 = vmul.f32 %v19, %v19
  %v25 = vadd.f32 %v23, %v24
  %v26 = vmul.f32 %v20, %v20
  %v27 = vadd.f32 %v25, %v26
  %v28 = vrsqrt.pop %v27
  %v29 = vmul.f32 %v28, %v27
  %v30 = vmul.f32 %v29, %v28
  %v31 = vmul.f32 0.5, %v30
  %v32 = vsub.f32 1.5, %v31
  %v33 = vmul.f32 %v28, %v32
  %v34 = vmul.f32 %v27, %v33
  %vm35 = vcmp.eq.f32.partialorder %v27, inf
  %v36 = vsel %vm35, %v27, %v34
  %vm37 = vcmp.eq.f32.partialorder %v27, 0.0
  %v38 = vand.u32 %v27, 2147483648
  %v39 = vsel %vm37, %v38, %v36
  %v40 = vadd.f32 %v39, 1e-08
  %v41 = vrcp.pop %v40
  %v42 = vmul.f32 %v40, %v41
  %v43 = vsub.f32 1.0, %v42
  %v44 = vmul.f32 %v41, %v43
  %v45 = vadd.f32 %v41, %v44
  %vm46 = vweird.f32 %v40
  %vm47 = vweird.f32 %v41
  %vm48 = vmor %vm46, %vm47
  %v49 = vsel %vm48, %v41, %v45
  %v50 = vand.u32 2147483647, %v40
  %vm51 = vcmp.eq.f32.partialorder %v50, 8.507059e+37
  %v52 = vand.u32 %v40, 2147483648
  %v53 = vor.u32 1.1754944e-38, %v52
  %v54 = vsel %vm51, %v53, %v49
  %v55 = vmul.f32 1.0, %v54
  %v56 = vmul.f32 %v17, %v55
  %v57 = vmul.f32 %v18, %v55
  %v58 = vmul.f32 %v19, %v55
  %v59 = vmul.f32 %v20, %v55
  %v60 = vld [vmem:[%s1] sm:$0x1]
  %v61 = vld [vmem:[%s1 + $0x1] sm:$0x1]
  %v62 = vld [vmem:[%s1 + $0x2] sm:$0x1]
  %vm63 = vcmask 57344
  %64 = vst.msk [vmem:[%s4] sm:$0x1] %vm63, %v60
  %65 = vst.msk [vmem:[%s4 + $0x18] sm:$0x1] %vm63, %v61
  %66 = vst.msk [vmem:[%s4 + $0x30] sm:$0x1] %vm63, %v62
  %v67 = vld [vmem:[%s2 + $0x4] sm:$0x1]
  %v68 = vld [vmem:[%s2 + $0x5] sm:$0x1]
  %v69 = vld [vmem:[%s2 + $0x6] sm:$0x1]
  %v70 = vld [vmem:[%s2 + $0x7] sm:$0x1]
  %v71 = vmul.f32 %v67, %v67
  %v72 = vmul.f32 %v68, %v68
  %v73 = vadd.f32 %v71, %v72
  %v74 = vmul.f32 %v69, %v69
  %v75 = vadd.f32 %v73, %v74
  %v76 = vmul.f32 %v70, %v70
  %v77 = vadd.f32 %v75, %v76
  %v78 = vrsqrt.pop %v77
  %v79 = vmul.f32 %v78, %v77
  %v80 = vmul.f32 %v79, %v78
  %v81 = vmul.f32 0.5, %v80
  %v82 = vsub.f32 1.5, %v81
  %v83 = vmul.f32 %v78, %v82
  %v84 = vmul.f32 %v77, %v83
  %vm85 = vcmp.eq.f32.partialorder %v77, inf
  %v86 = vsel %vm85, %v77, %v84
  %vm87 = vcmp.eq.f32.partialorder %v77, 0.0
  %v88 = vand.u32 %v77, 2147483648
  %v89 = vsel %vm87, %v88, %v86
  %v90 = vadd.f32 %v89, 1e-08
  %v91 = vrcp.pop %v90
  %v92 = vmul.f32 %v90, %v91
  %v93 = vsub.f32 1.0, %v92
  %v94 = vmul.f32 %v91, %v93
  %v95 = vadd.f32 %v91, %v94
  %vm96 = vweird.f32 %v90
  %vm97 = vweird.f32 %v91
  %vm98 = vmor %vm96, %vm97
  %v99 = vsel %vm98, %v91, %v95
  %v100 = vand.u32 2147483647, %v90
  %vm101 = vcmp.eq.f32.partialorder %v100, 8.507059e+37
  %v102 = vand.u32 %v90, 2147483648
  %v103 = vor.u32 1.1754944e-38, %v102
  %v104 = vsel %vm101, %v103, %v99
  %v105 = vmul.f32 1.0, %v104
  %v106 = vmul.f32 %v67, %v105
  %v107 = vmul.f32 %v68, %v105
  %v108 = vmul.f32 %v69, %v105
  %v109 = vmul.f32 %v70, %v105
  %v110 = vmul.f32 %v56, %v106
  %v111 = vmul.f32 %v57, %v107
  %v112 = vsub.f32 %v110, %v111
  %v113 = vmul.f32 %v58, %v108
  %v114 = vsub.f32 %v112, %v113
  %v115 = vmul.f32 %v59, %v109
  %v116 = vsub.f32 %v114, %v115
  %v117 = vmul.f32 %v56, %v107
  %v118 = vmul.f32 %v57, %v106
  %v119 = vadd.f32 %v117, %v118
  %v120 = vmul.f32 %v58, %v109
  %v121 = vadd.f32 %v119, %v120
  %v122 = vmul.f32 %v59, %v108
  %v123 = vsub.f32 %v121, %v122
  %v124 = vmul.f32 %v56, %v108
  %v125 = vmul.f32 %v57, %v109
  %v126 = vsub.f32 %v124, %v125
  %v127 = vmul.f32 %v58, %v106
  %v128 = vadd.f32 %v126, %v127
  %v129 = vmul.f32 %v59, %v107
  %v130 = vadd.f32 %v128, %v129
  %v131 = vmul.f32 %v56, %v109
  %v132 = vmul.f32 %v57, %v108
  %v133 = vadd.f32 %v131, %v132
  %v134 = vmul.f32 %v58, %v107
  %v135 = vsub.f32 %v133, %v134
  %v136 = vmul.f32 %v59, %v106
  %v137 = vadd.f32 %v135, %v136
  %v138 = vmul.f32 %v58, 0.5888381
  %v139 = vmul.f32 %v59, -0.8712328
  %v140 = vsub.f32 %v138, %v139
  %v141 = vmul.f32 %v140, 2.0
  %v142 = vmul.f32 %v59, -1.1713669
  %v143 = vmul.f32 %v57, 0.5888381
  %v144 = vsub.f32 %v142, %v143
  %v145 = vmul.f32 %v144, 2.0
  %v146 = vmul.f32 %v57, -0.8712328
  %v147 = vmul.f32 %v58, -1.1713669
  %v148 = vsub.f32 %v146, %v147
  %v149 = vmul.f32 %v148, 2.0
  %v150 = vmul.f32 %v56, %v141
  %v151 = vadd.f32 %v150, -1.1713669
  %v152 = vmul.f32 %v58, %v149
  %v153 = vmul.f32 %v59, %v145
  %v154 = vsub.f32 %v152, %v153
  %v155 = vadd.f32 %v151, %v154
  %v156 = vmul.f32 %v56, %v145
  %v157 = vadd.f32 %v156, -0.8712328
  %v158 = vmul.f32 %v59, %v141
  %v159 = vmul.f32 %v57, %v149
  %v160 = vsub.f32 %v158, %v159
  %v161 = vadd.f32 %v157, %v160
  %v162 = vmul.f32 %v56, %v149
  %v163 = vadd.f32 %v162, 0.5888381
  %v164 = vmul.f32 %v57, %v145
  %v165 = vmul.f32 %v58, %v141
  %v166 = vsub.f32 %v164, %v165
  %v167 = vadd.f32 %v163, %v166
  %v168 = vld [vmem:[%s3 + $0x1] sm:$0x1]
  %v169 = vmul.f32 %v155, %v168
  %v170 = vadd.f32 %v60, %v169
  %v171 = vmul.f32 %v161, %v168
  %v172 = vadd.f32 %v61, %v171
  %v173 = vmul.f32 %v167, %v168
  %v174 = vadd.f32 %v62, %v173
  %175 = vst.msk [vmem:[%s4 + $0x1] sm:$0x1] %vm63, %v170
  %176 = vst.msk [vmem:[%s4 + $0x19] sm:$0x1] %vm63, %v172
  %177 = vst.msk [vmem:[%s4 + $0x31] sm:$0x1] %vm63, %v174
  %v178 = vld [vmem:[%s2 + $0x8] sm:$0x1]
  %v179 = vld [vmem:[%s2 + $0x9] sm:$0x1]
  %v180 = vld [vmem:[%s2 + $0xa] sm:$0x1]
  %v181 = vld [vmem:[%s2 + $0xb] sm:$0x1]
  %v182 = vmul.f32 %v178, %v178
  %v183 = vmul.f32 %v179, %v179
  %v184 = vadd.f32 %v182, %v183
  %v185 = vmul.f32 %v180, %v180
  %v186 = vadd.f32 %v184, %v185
  %v187 = vmul.f32 %v181, %v181
  %v188 = vadd.f32 %v186, %v187
  %v189 = vrsqrt.pop %v188
  %v190 = vmul.f32 %v189, %v188
  %v191 = vmul.f32 %v190, %v189
  %v192 = vmul.f32 0.5, %v191
  %v193 = vsub.f32 1.5, %v192
  %v194 = vmul.f32 %v189, %v193
  %v195 = vmul.f32 %v188, %v194
  %vm196 = vcmp.eq.f32.partialorder %v188, inf
  %v197 = vsel %vm196, %v188, %v195
  %vm198 = vcmp.eq.f32.partialorder %v188, 0.0
  %v199 = vand.u32 %v188, 2147483648
  %v200 = vsel %vm198, %v199, %v197
  %v201 = vadd.f32 %v200, 1e-08
  %v202 = vrcp.pop %v201
  %v203 = vmul.f32 %v201, %v202
  %v204 = vsub.f32 1.0, %v203
  %v205 = vmul.f32 %v202, %v204
  %v206 = vadd.f32 %v202, %v205
  %vm207 = vweird.f32 %v201
  %vm208 = vweird.f32 %v202
  %vm209 = vmor %vm207, %vm208
  %v210 = vsel %vm209, %v202, %v206
  %v211 = vand.u32 2147483647, %v201
  %vm212 = vcmp.eq.f32.partialorder %v211, 8.507059e+37
  %v213 = vand.u32 %v201, 2147483648
  %v214 = vor.u32 1.1754944e-38, %v213
  %v215 = vsel %vm212, %v214, %v210
  %v216 = vmul.f32 1.0, %v215
  %v217 = vmul.f32 %v178, %v216
  %v218 = vmul.f32 %v179, %v216
  %v219 = vmul.f32 %v180, %v216
  %v220 = vmul.f32 %v181, %v216
  %v221 = vmul.f32 %v56, %v217
  %v222 = vmul.f32 %v57, %v218
  %v223 = vsub.f32 %v221, %v222
  %v224 = vmul.f32 %v58, %v219
  %v225 = vsub.f32 %v223, %v224
  %v226 = vmul.f32 %v59, %v220
  %v227 = vsub.f32 %v225, %v226
  %v228 = vmul.f32 %v56, %v218
  %v229 = vmul.f32 %v57, %v217
  %v230 = vadd.f32 %v228, %v229
  %v231 = vmul.f32 %v58, %v220
  %v232 = vadd.f32 %v230, %v231
  %v233 = vmul.f32 %v59, %v219
  %v234 = vsub.f32 %v232, %v233
  %v235 = vmul.f32 %v56, %v219
  %v236 = vmul.f32 %v57, %v220
  %v237 = vsub.f32 %v235, %v236
  %v238 = vmul.f32 %v58, %v217
  %v239 = vadd.f32 %v237, %v238
  %v240 = vmul.f32 %v59, %v218
  %v241 = vadd.f32 %v239, %v240
  %v242 = vmul.f32 %v56, %v220
  %v243 = vmul.f32 %v57, %v219
  %v244 = vadd.f32 %v242, %v243
  %v245 = vmul.f32 %v58, %v218
  %v246 = vsub.f32 %v244, %v245
  %v247 = vmul.f32 %v59, %v217
  %v248 = vadd.f32 %v246, %v247
  %v249 = vmul.f32 %v58, 1.661628
  %v250 = vmul.f32 %v59, -1.0255982
  %v251 = vsub.f32 %v249, %v250
  %v252 = vmul.f32 %v251, 2.0
  %v253 = vmul.f32 %v59, 0.72392994
  %v254 = vmul.f32 %v57, 1.661628
  %v255 = vsub.f32 %v253, %v254
  %v256 = vmul.f32 %v255, 2.0
  %v257 = vmul.f32 %v57, -1.0255982
  %v258 = vmul.f32 %v58, 0.72392994
  %v259 = vsub.f32 %v257, %v258
  %v260 = vmul.f32 %v259, 2.0
  %v261 = vmul.f32 %v56, %v252
  %v262 = vadd.f32 %v261, 0.72392994
  %v263 = vmul.f32 %v58, %v260
  %v264 = vmul.f32 %v59, %v256
  %v265 = vsub.f32 %v263, %v264
  %v266 = vadd.f32 %v262, %v265
  %v267 = vmul.f32 %v56, %v256
  %v268 = vadd.f32 %v267, -1.0255982
  %v269 = vmul.f32 %v59, %v252
  %v270 = vmul.f32 %v57, %v260
  %v271 = vsub.f32 %v269, %v270
  %v272 = vadd.f32 %v268, %v271
  %v273 = vmul.f32 %v56, %v260
  %v274 = vadd.f32 %v273, 1.661628
  %v275 = vmul.f32 %v57, %v256
  %v276 = vmul.f32 %v58, %v252
  %v277 = vsub.f32 %v275, %v276
  %v278 = vadd.f32 %v274, %v277
  %v279 = vld [vmem:[%s3 + $0x2] sm:$0x1]
  %v280 = vmul.f32 %v266, %v279
  %v281 = vadd.f32 %v60, %v280
  %v282 = vmul.f32 %v272, %v279
  %v283 = vadd.f32 %v61, %v282
  %v284 = vmul.f32 %v278, %v279
  %v285 = vadd.f32 %v62, %v284
  %286 = vst.msk [vmem:[%s4 + $0x2] sm:$0x1] %vm63, %v281
  %287 = vst.msk [vmem:[%s4 + $0x1a] sm:$0x1] %vm63, %v283
  %288 = vst.msk [vmem:[%s4 + $0x32] sm:$0x1] %vm63, %v285
  %v289 = vld [vmem:[%s2 + $0xc] sm:$0x1]
  %v290 = vld [vmem:[%s2 + $0xd] sm:$0x1]
  %v291 = vld [vmem:[%s2 + $0xe] sm:$0x1]
  %v292 = vld [vmem:[%s2 + $0xf] sm:$0x1]
  %v293 = vmul.f32 %v289, %v289
  %v294 = vmul.f32 %v290, %v290
  %v295 = vadd.f32 %v293, %v294
  %v296 = vmul.f32 %v291, %v291
  %v297 = vadd.f32 %v295, %v296
  %v298 = vmul.f32 %v292, %v292
  %v299 = vadd.f32 %v297, %v298
  %v300 = vrsqrt.pop %v299
  %v301 = vmul.f32 %v300, %v299
  %v302 = vmul.f32 %v301, %v300
  %v303 = vmul.f32 0.5, %v302
  %v304 = vsub.f32 1.5, %v303
  %v305 = vmul.f32 %v300, %v304
  %v306 = vmul.f32 %v299, %v305
  %vm307 = vcmp.eq.f32.partialorder %v299, inf
  %v308 = vsel %vm307, %v299, %v306
  %vm309 = vcmp.eq.f32.partialorder %v299, 0.0
  %v310 = vand.u32 %v299, 2147483648
  %v311 = vsel %vm309, %v310, %v308
  %v312 = vadd.f32 %v311, 1e-08
  %v313 = vrcp.pop %v312
  %v314 = vmul.f32 %v312, %v313
  %v315 = vsub.f32 1.0, %v314
  %v316 = vmul.f32 %v313, %v315
  %v317 = vadd.f32 %v313, %v316
  %vm318 = vweird.f32 %v312
  %vm319 = vweird.f32 %v313
  %vm320 = vmor %vm318, %vm319
  %v321 = vsel %vm320, %v313, %v317
  %v322 = vand.u32 2147483647, %v312
  %vm323 = vcmp.eq.f32.partialorder %v322, 8.507059e+37
  %v324 = vand.u32 %v312, 2147483648
  %v325 = vor.u32 1.1754944e-38, %v324
  %v326 = vsel %vm323, %v325, %v321
  %v327 = vmul.f32 1.0, %v326
  %v328 = vmul.f32 %v289, %v327
  %v329 = vmul.f32 %v290, %v327
  %v330 = vmul.f32 %v291, %v327
  %v331 = vmul.f32 %v292, %v327
  %v332 = vmul.f32 %v56, %v328
  %v333 = vmul.f32 %v57, %v329
  %v334 = vsub.f32 %v332, %v333
  %v335 = vmul.f32 %v58, %v330
  %v336 = vsub.f32 %v334, %v335
  %v337 = vmul.f32 %v59, %v331
  %v338 = vsub.f32 %v336, %v337
  %v339 = vmul.f32 %v56, %v329
  %v340 = vmul.f32 %v57, %v328
  %v341 = vadd.f32 %v339, %v340
  %v342 = vmul.f32 %v58, %v331
  %v343 = vadd.f32 %v341, %v342
  %v344 = vmul.f32 %v59, %v330
  %v345 = vsub.f32 %v343, %v344
  %v346 = vmul.f32 %v56, %v330
  %v347 = vmul.f32 %v57, %v331
  %v348 = vsub.f32 %v346, %v347
  %v349 = vmul.f32 %v58, %v328
  %v350 = vadd.f32 %v348, %v349
  %v351 = vmul.f32 %v59, %v329
  %v352 = vadd.f32 %v350, %v351
  %v353 = vmul.f32 %v56, %v331
  %v354 = vmul.f32 %v57, %v330
  %v355 = vadd.f32 %v353, %v354
  %v356 = vmul.f32 %v58, %v329
  %v357 = vsub.f32 %v355, %v356
  %v358 = vmul.f32 %v59, %v328
  %v359 = vadd.f32 %v357, %v358
  %v360 = vmul.f32 %v58, 0.13360691
  %v361 = vmul.f32 %v59, -1.2889339
  %v362 = vsub.f32 %v360, %v361
  %v363 = vmul.f32 %v362, 2.0
  %v364 = vmul.f32 %v59, -1.8910251
  %v365 = vmul.f32 %v57, 0.13360691
  %v366 = vsub.f32 %v364, %v365
  %v367 = vmul.f32 %v366, 2.0
  %v368 = vmul.f32 %v57, -1.2889339
  %v369 = vmul.f32 %v58, -1.8910251
  %v370 = vsub.f32 %v368, %v369
  %v371 = vmul.f32 %v370, 2.0
  %v372 = vmul.f32 %v56, %v363
  %v373 = vadd.f32 %v372, -1.8910251
  %v374 = vmul.f32 %v58, %v371
  %v375 = vmul.f32 %v59, %v367
  %v376 = vsub.f32 %v374, %v375
  %v377 = vadd.f32 %v373, %v376
  %v378 = vmul.f32 %v56, %v367
  %v379 = vadd.f32 %v378, -1.2889339
  %v380 = vmul.f32 %v59, %v363
  %v381 = vmul.f32 %v57, %v371
  %v382 = vsub.f32 %v380, %v381
  %v383 = vadd.f32 %v379, %v382
  %v384 = vmul.f32 %v56, %v371
  %v385 = vadd.f32 %v384, 0.13360691
  %v386 = vmul.f32 %v57, %v367
  %v387 = vmul.f32 %v58, %v363
  %v388 = vsub.f32 %v386, %v387
  %v389 = vadd.f32 %v385, %v388
  %v390 = vld [vmem:[%s3 + $0x3] sm:$0x1]
  %v391 = vmul.f32 %v377, %v390
  %v392 = vadd.f32 %v60, %v391
  %v393 = vmul.f32 %v383, %v390
  %v394 = vadd.f32 %v61, %v393
  %v395 = vmul.f32 %v389, %v390
  %v396 = vadd.f32 %v62, %v395
  %397 = vst.msk [vmem:[%s4 + $0x3] sm:$0x1] %vm63, %v392
  %398 = vst.msk [vmem:[%s4 + $0x1b] sm:$0x1] %vm63, %v394
  %399 = vst.msk [vmem:[%s4 + $0x33] sm:$0x1] %vm63, %v396
  %v400 = vld [vmem:[%s2 + $0x10] sm:$0x1]
  %v401 = vld [vmem:[%s2 + $0x11] sm:$0x1]
  %v402 = vld [vmem:[%s2 + $0x12] sm:$0x1]
  %v403 = vld [vmem:[%s2 + $0x13] sm:$0x1]
  %v404 = vmul.f32 %v400, %v400
  %v405 = vmul.f32 %v401, %v401
  %v406 = vadd.f32 %v404, %v405
  %v407 = vmul.f32 %v402, %v402
  %v408 = vadd.f32 %v406, %v407
  %v409 = vmul.f32 %v403, %v403
  %v410 = vadd.f32 %v408, %v409
  %v411 = vrsqrt.pop %v410
  %v412 = vmul.f32 %v411, %v410
  %v413 = vmul.f32 %v412, %v411
  %v414 = vmul.f32 0.5, %v413
  %v415 = vsub.f32 1.5, %v414
  %v416 = vmul.f32 %v411, %v415
  %v417 = vmul.f32 %v410, %v416
  %vm418 = vcmp.eq.f32.partialorder %v410, inf
  %v419 = vsel %vm418, %v410, %v417
  %vm420 = vcmp.eq.f32.partialorder %v410, 0.0
  %v421 = vand.u32 %v410, 2147483648
  %v422 = vsel %vm420, %v421, %v419
  %v423 = vadd.f32 %v422, 1e-08
  %v424 = vrcp.pop %v423
  %v425 = vmul.f32 %v423, %v424
  %v426 = vsub.f32 1.0, %v425
  %v427 = vmul.f32 %v424, %v426
  %v428 = vadd.f32 %v424, %v427
  %vm429 = vweird.f32 %v423
  %vm430 = vweird.f32 %v424
  %vm431 = vmor %vm429, %vm430
  %v432 = vsel %vm431, %v424, %v428
  %v433 = vand.u32 2147483647, %v423
  %vm434 = vcmp.eq.f32.partialorder %v433, 8.507059e+37
  %v435 = vand.u32 %v423, 2147483648
  %v436 = vor.u32 1.1754944e-38, %v435
  %v437 = vsel %vm434, %v436, %v432
  %v438 = vmul.f32 1.0, %v437
  %v439 = vmul.f32 %v400, %v438
  %v440 = vmul.f32 %v401, %v438
  %v441 = vmul.f32 %v402, %v438
  %v442 = vmul.f32 %v403, %v438
  %v443 = vmul.f32 %v116, %v439
  %v444 = vmul.f32 %v123, %v440
  %v445 = vsub.f32 %v443, %v444
  %v446 = vmul.f32 %v130, %v441
  %v447 = vsub.f32 %v445, %v446
  %v448 = vmul.f32 %v137, %v442
  %v449 = vsub.f32 %v447, %v448
  %v450 = vmul.f32 %v116, %v440
  %v451 = vmul.f32 %v123, %v439
  %v452 = vadd.f32 %v450, %v451
  %v453 = vmul.f32 %v130, %v442
  %v454 = vadd.f32 %v452, %v453
  %v455 = vmul.f32 %v137, %v441
  %v456 = vsub.f32 %v454, %v455
  %v457 = vmul.f32 %v116, %v441
  %v458 = vmul.f32 %v123, %v442
  %v459 = vsub.f32 %v457, %v458
  %v460 = vmul.f32 %v130, %v439
  %v461 = vadd.f32 %v459, %v460
  %v462 = vmul.f32 %v137, %v440
  %v463 = vadd.f32 %v461, %v462
  %v464 = vmul.f32 %v116, %v442
  %v465 = vmul.f32 %v123, %v441
  %v466 = vadd.f32 %v464, %v465
  %v467 = vmul.f32 %v130, %v440
  %v468 = vsub.f32 %v466, %v467
  %v469 = vmul.f32 %v137, %v439
  %v470 = vadd.f32 %v468, %v469
  %v471 = vmul.f32 %v130, 1.7448074
  %v472 = vmul.f32 %v137, 0.23929629
  %v473 = vsub.f32 %v471, %v472
  %v474 = vmul.f32 %v473, 2.0
  %v475 = vmul.f32 %v137, -1.1530392
  %v476 = vmul.f32 %v123, 1.7448074
  %v477 = vsub.f32 %v475, %v476
  %v478 = vmul.f32 %v477, 2.0
  %v479 = vmul.f32 %v123, 0.23929629
  %v480 = vmul.f32 %v130, -1.1530392
  %v481 = vsub.f32 %v479, %v480
  %v482 = vmul.f32 %v481, 2.0
  %v483 = vmul.f32 %v116, %v474
  %v484 = vadd.f32 %v483, -1.1530392
  %v485 = vmul.f32 %v130, %v482
  %v486 = vmul.f32 %v137, %v478
  %v487 = vsub.f32 %v485, %v486
  %v488 = vadd.f32 %v484, %v487
  %v489 = vmul.f32 %v116, %v478
  %v490 = vadd.f32 %v489, 0.23929629
  %v491 = vmul.f32 %v137, %v474
  %v492 = vmul.f32 %v123, %v482
  %v493 = vsub.f32 %v491, %v492
  %v494 = vadd.f32 %v490, %v493
  %v495 = vmul.f32 %v116, %v482
  %v496 = vadd.f32 %v495, 1.7448074
  %v497 = vmul.f32 %v123, %v478
  %v498 = vmul.f32 %v130, %v474
  %v499 = vsub.f32 %v497, %v498
  %v500 = vadd.f32 %v496, %v499
  %v501 = vld [vmem:[%s3 + $0x4] sm:$0x1]
  %v502 = vmul.f32 %v488, %v501
  %v503 = vadd.f32 %v170, %v502
  %v504 = vmul.f32 %v494, %v501
  %v505 = vadd.f32 %v172, %v504
  %v506 = vmul.f32 %v500, %v501
  %v507 = vadd.f32 %v174, %v506
  %508 = vst.msk [vmem:[%s4 + $0x4] sm:$0x1] %vm63, %v503
  %509 = vst.msk [vmem:[%s4 + $0x1c] sm:$0x1] %vm63, %v505
  %510 = vst.msk [vmem:[%s4 + $0x34] sm:$0x1] %vm63, %v507
  %v511 = vld [vmem:[%s2 + $0x14] sm:$0x1]
  %v512 = vld [vmem:[%s2 + $0x15] sm:$0x1]
  %v513 = vld [vmem:[%s2 + $0x16] sm:$0x1]
  %v514 = vld [vmem:[%s2 + $0x17] sm:$0x1]
  %v515 = vmul.f32 %v511, %v511
  %v516 = vmul.f32 %v512, %v512
  %v517 = vadd.f32 %v515, %v516
  %v518 = vmul.f32 %v513, %v513
  %v519 = vadd.f32 %v517, %v518
  %v520 = vmul.f32 %v514, %v514
  %v521 = vadd.f32 %v519, %v520
  %v522 = vrsqrt.pop %v521
  %v523 = vmul.f32 %v522, %v521
  %v524 = vmul.f32 %v523, %v522
  %v525 = vmul.f32 0.5, %v524
  %v526 = vsub.f32 1.5, %v525
  %v527 = vmul.f32 %v522, %v526
  %v528 = vmul.f32 %v521, %v527
  %vm529 = vcmp.eq.f32.partialorder %v521, inf
  %v530 = vsel %vm529, %v521, %v528
  %vm531 = vcmp.eq.f32.partialorder %v521, 0.0
  %v532 = vand.u32 %v521, 2147483648
  %v533 = vsel %vm531, %v532, %v530
  %v534 = vadd.f32 %v533, 1e-08
  %v535 = vrcp.pop %v534
  %v536 = vmul.f32 %v534, %v535
  %v537 = vsub.f32 1.0, %v536
  %v538 = vmul.f32 %v535, %v537
  %v539 = vadd.f32 %v535, %v538
  %vm540 = vweird.f32 %v534
  %vm541 = vweird.f32 %v535
  %vm542 = vmor %vm540, %vm541
  %v543 = vsel %vm542, %v535, %v539
  %v544 = vand.u32 2147483647, %v534
  %vm545 = vcmp.eq.f32.partialorder %v544, 8.507059e+37
  %v546 = vand.u32 %v534, 2147483648
  %v547 = vor.u32 1.1754944e-38, %v546
  %v548 = vsel %vm545, %v547, %v543
  %v549 = vmul.f32 1.0, %v548
  %v550 = vmul.f32 %v511, %v549
  %v551 = vmul.f32 %v512, %v549
  %v552 = vmul.f32 %v513, %v549
  %v553 = vmul.f32 %v514, %v549
  %v554 = vmul.f32 %v227, %v550
  %v555 = vmul.f32 %v234, %v551
  %v556 = vsub.f32 %v554, %v555
  %v557 = vmul.f32 %v241, %v552
  %v558 = vsub.f32 %v556, %v557
  %v559 = vmul.f32 %v248, %v553
  %v560 = vsub.f32 %v558, %v559
  %v561 = vmul.f32 %v227, %v551
  %v562 = vmul.f32 %v234, %v550
  %v563 = vadd.f32 %v561, %v562
  %v564 = vmul.f32 %v241, %v553
  %v565 = vadd.f32 %v563, %v564
  %v566 = vmul.f32 %v248, %v552
  %v567 = vsub.f32 %v565, %v566
  %v568 = vmul.f32 %v227, %v552
  %v569 = vmul.f32 %v234, %v553
  %v570 = vsub.f32 %v568, %v569
  %v571 = vmul.f32 %v241, %v550
  %v572 = vadd.f32 %v570, %v571
  %v573 = vmul.f32 %v248, %v551
  %v574 = vadd.f32 %v572, %v573
  %v575 = vmul.f32 %v227, %v553
  %v576 = vmul.f32 %v234, %v552
  %v577 = vadd.f32 %v575, %v576
  %v578 = vmul.f32 %v241, %v551
  %v579 = vsub.f32 %v577, %v578
  %v580 = vmul.f32 %v248, %v550
  %v581 = vadd.f32 %v579, %v580
  %v582 = vmul.f32 %v241, -0.47283807
  %v583 = vmul.f32 %v248, 0.595053
  %v584 = vsub.f32 %v582, %v583
  %v585 = vmul.f32 %v584, 2.0
  %v586 = vmul.f32 %v248, 0.5050189
  %v587 = vmul.f32 %v234, -0.47283807
  %v588 = vsub.f32 %v586, %v587
  %v589 = vmul.f32 %v588, 2.0
  %v590 = vmul.f32 %v234, 0.595053
  %v591 = vmul.f32 %v241, 0.5050189
  %v592 = vsub.f32 %v590, %v591
  %v593 = vmul.f32 %v592, 2.0
  %v594 = vmul.f32 %v227, %v585
  %v595 = vadd.f32 %v594, 0.5050189
  %v596 = vmul.f32 %v241, %v593
  %v597 = vmul.f32 %v248, %v589
  %v598 = vsub.f32 %v596, %v597
  %v599 = vadd.f32 %v595, %v598
  %v600 = vmul.f32 %v227, %v589
  %v601 = vadd.f32 %v600, 0.595053
  %v602 = vmul.f32 %v248, %v585
  %v603 = vmul.f32 %v234, %v593
  %v604 = vsub.f32 %v602, %v603
  %v605 = vadd.f32 %v601, %v604
  %v606 = vmul.f32 %v227, %v593
  %v607 = vadd.f32 %v606, -0.47283807
  %v608 = vmul.f32 %v234, %v589
  %v609 = vmul.f32 %v241, %v585
  %v610 = vsub.f32 %v608, %v609
  %v611 = vadd.f32 %v607, %v610
  %v612 = vld [vmem:[%s3 + $0x5] sm:$0x1]
  %v613 = vmul.f32 %v599, %v612
  %v614 = vadd.f32 %v281, %v613
  %v615 = vmul.f32 %v605, %v612
  %v616 = vadd.f32 %v283, %v615
  %v617 = vmul.f32 %v611, %v612
  %v618 = vadd.f32 %v285, %v617
  %619 = vst.msk [vmem:[%s4 + $0x5] sm:$0x1] %vm63, %v614
  %620 = vst.msk [vmem:[%s4 + $0x1d] sm:$0x1] %vm63, %v616
  %621 = vst.msk [vmem:[%s4 + $0x35] sm:$0x1] %vm63, %v618
  %v622 = vld [vmem:[%s2 + $0x18] sm:$0x1]
  %v623 = vld [vmem:[%s2 + $0x19] sm:$0x1]
  %v624 = vld [vmem:[%s2 + $0x1a] sm:$0x1]
  %v625 = vld [vmem:[%s2 + $0x1b] sm:$0x1]
  %v626 = vmul.f32 %v622, %v622
  %v627 = vmul.f32 %v623, %v623
  %v628 = vadd.f32 %v626, %v627
  %v629 = vmul.f32 %v624, %v624
  %v630 = vadd.f32 %v628, %v629
  %v631 = vmul.f32 %v625, %v625
  %v632 = vadd.f32 %v630, %v631
  %v633 = vrsqrt.pop %v632
  %v634 = vmul.f32 %v633, %v632
  %v635 = vmul.f32 %v634, %v633
  %v636 = vmul.f32 0.5, %v635
  %v637 = vsub.f32 1.5, %v636
  %v638 = vmul.f32 %v633, %v637
  %v639 = vmul.f32 %v632, %v638
  %vm640 = vcmp.eq.f32.partialorder %v632, inf
  %v641 = vsel %vm640, %v632, %v639
  %vm642 = vcmp.eq.f32.partialorder %v632, 0.0
  %v643 = vand.u32 %v632, 2147483648
  %v644 = vsel %vm642, %v643, %v641
  %v645 = vadd.f32 %v644, 1e-08
  %v646 = vrcp.pop %v645
  %v647 = vmul.f32 %v645, %v646
  %v648 = vsub.f32 1.0, %v647
  %v649 = vmul.f32 %v646, %v648
  %v650 = vadd.f32 %v646, %v649
  %vm651 = vweird.f32 %v645
  %vm652 = vweird.f32 %v646
  %vm653 = vmor %vm651, %vm652
  %v654 = vsel %vm653, %v646, %v650
  %v655 = vand.u32 2147483647, %v645
  %vm656 = vcmp.eq.f32.partialorder %v655, 8.507059e+37
  %v657 = vand.u32 %v645, 2147483648
  %v658 = vor.u32 1.1754944e-38, %v657
  %v659 = vsel %vm656, %v658, %v654
  %v660 = vmul.f32 1.0, %v659
  %v661 = vmul.f32 %v622, %v660
  %v662 = vmul.f32 %v623, %v660
  %v663 = vmul.f32 %v624, %v660
  %v664 = vmul.f32 %v625, %v660
  %v665 = vmul.f32 %v338, %v661
  %v666 = vmul.f32 %v345, %v662
  %v667 = vsub.f32 %v665, %v666
  %v668 = vmul.f32 %v352, %v663
  %v669 = vsub.f32 %v667, %v668
  %v670 = vmul.f32 %v359, %v664
  %v671 = vsub.f32 %v669, %v670
  %v672 = vmul.f32 %v338, %v662
  %v673 = vmul.f32 %v345, %v661
  %v674 = vadd.f32 %v672, %v673
  %v675 = vmul.f32 %v352, %v664
  %v676 = vadd.f32 %v674, %v675
  %v677 = vmul.f32 %v359, %v663
  %v678 = vsub.f32 %v676, %v677
  %v679 = vmul.f32 %v338, %v663
  %v680 = vmul.f32 %v345, %v664
  %v681 = vsub.f32 %v679, %v680
  %v682 = vmul.f32 %v352, %v661
  %v683 = vadd.f32 %v681, %v682
  %v684 = vmul.f32 %v359, %v662
  %v685 = vadd.f32 %v683, %v684
  %v686 = vmul.f32 %v338, %v664
  %v687 = vmul.f32 %v345, %v663
  %v688 = vadd.f32 %v686, %v687
  %v689 = vmul.f32 %v352, %v662
  %v690 = vsub.f32 %v688, %v689
  %v691 = vmul.f32 %v359, %v661
  %v692 = vadd.f32 %v690, %v691
  %v693 = vmul.f32 %v352, -0.63416433
  %v694 = vmul.f32 %v359, 0.3612034
  %v695 = vsub.f32 %v693, %v694
  %v696 = vmul.f32 %v695, 2.0
  %v697 = vmul.f32 %v359, 0.9156375
  %v698 = vmul.f32 %v345, -0.63416433
  %v699 = vsub.f32 %v697, %v698
  %v700 = vmul.f32 %v699, 2.0
  %v701 = vmul.f32 %v345, 0.3612034
  %v702 = vmul.f32 %v352, 0.9156375
  %v703 = vsub.f32 %v701, %v702
  %v704 = vmul.f32 %v703, 2.0
  %v705 = vmul.f32 %v338, %v696
  %v706 = vadd.f32 %v705, 0.9156375
  %v707 = vmul.f32 %v352, %v704
  %v708 = vmul.f32 %v359, %v700
  %v709 = vsub.f32 %v707, %v708
  %v710 = vadd.f32 %v706, %v709
  %v711 = vmul.f32 %v338, %v700
  %v712 = vadd.f32 %v711, 0.3612034
  %v713 = vmul.f32 %v359, %v696
  %v714 = vmul.f32 %v345, %v704
  %v715 = vsub.f32 %v713, %v714
  %v716 = vadd.f32 %v712, %v715
  %v717 = vmul.f32 %v338, %v704
  %v718 = vadd.f32 %v717, -0.63416433
  %v719 = vmul.f32 %v345, %v700
  %v720 = vmul.f32 %v352, %v696
  %v721 = vsub.f32 %v719, %v720
  %v722 = vadd.f32 %v718, %v721
  %v723 = vld [vmem:[%s3 + $0x6] sm:$0x1]
  %v724 = vmul.f32 %v710, %v723
  %v725 = vadd.f32 %v392, %v724
  %v726 = vmul.f32 %v716, %v723
  %v727 = vadd.f32 %v394, %v726
  %v728 = vmul.f32 %v722, %v723
  %v729 = vadd.f32 %v396, %v728
  %730 = vst.msk [vmem:[%s4 + $0x6] sm:$0x1] %vm63, %v725
  %731 = vst.msk [vmem:[%s4 + $0x1e] sm:$0x1] %vm63, %v727
  %732 = vst.msk [vmem:[%s4 + $0x36] sm:$0x1] %vm63, %v729
  %v733 = vld [vmem:[%s2 + $0x1c] sm:$0x1]
  %v734 = vld [vmem:[%s2 + $0x1d] sm:$0x1]
  %v735 = vld [vmem:[%s2 + $0x1e] sm:$0x1]
  %v736 = vld [vmem:[%s2 + $0x1f] sm:$0x1]
  %v737 = vmul.f32 %v733, %v733
  %v738 = vmul.f32 %v734, %v734
  %v739 = vadd.f32 %v737, %v738
  %v740 = vmul.f32 %v735, %v735
  %v741 = vadd.f32 %v739, %v740
  %v742 = vmul.f32 %v736, %v736
  %v743 = vadd.f32 %v741, %v742
  %v744 = vrsqrt.pop %v743
  %v745 = vmul.f32 %v744, %v743
  %v746 = vmul.f32 %v745, %v744
  %v747 = vmul.f32 0.5, %v746
  %v748 = vsub.f32 1.5, %v747
  %v749 = vmul.f32 %v744, %v748
  %v750 = vmul.f32 %v743, %v749
  %vm751 = vcmp.eq.f32.partialorder %v743, inf
  %v752 = vsel %vm751, %v743, %v750
  %vm753 = vcmp.eq.f32.partialorder %v743, 0.0
  %v754 = vand.u32 %v743, 2147483648
  %v755 = vsel %vm753, %v754, %v752
  %v756 = vadd.f32 %v755, 1e-08
  %v757 = vrcp.pop %v756
  %v758 = vmul.f32 %v756, %v757
  %v759 = vsub.f32 1.0, %v758
  %v760 = vmul.f32 %v757, %v759
  %v761 = vadd.f32 %v757, %v760
  %vm762 = vweird.f32 %v756
  %vm763 = vweird.f32 %v757
  %vm764 = vmor %vm762, %vm763
  %v765 = vsel %vm764, %v757, %v761
  %v766 = vand.u32 2147483647, %v756
  %vm767 = vcmp.eq.f32.partialorder %v766, 8.507059e+37
  %v768 = vand.u32 %v756, 2147483648
  %v769 = vor.u32 1.1754944e-38, %v768
  %v770 = vsel %vm767, %v769, %v765
  %v771 = vmul.f32 1.0, %v770
  %v772 = vmul.f32 %v733, %v771
  %v773 = vmul.f32 %v734, %v771
  %v774 = vmul.f32 %v735, %v771
  %v775 = vmul.f32 %v736, %v771
  %v776 = vmul.f32 %v449, %v772
  %v777 = vmul.f32 %v456, %v773
  %v778 = vsub.f32 %v776, %v777
  %v779 = vmul.f32 %v463, %v774
  %v780 = vsub.f32 %v778, %v779
  %v781 = vmul.f32 %v470, %v775
  %v782 = vsub.f32 %v780, %v781
  %v783 = vmul.f32 %v449, %v773
  %v784 = vmul.f32 %v456, %v772
  %v785 = vadd.f32 %v783, %v784
  %v786 = vmul.f32 %v463, %v775
  %v787 = vadd.f32 %v785, %v786
  %v788 = vmul.f32 %v470, %v774
  %v789 = vsub.f32 %v787, %v788
  %v790 = vmul.f32 %v449, %v774
  %v791 = vmul.f32 %v456, %v775
  %v792 = vsub.f32 %v790, %v791
  %v793 = vmul.f32 %v463, %v772
  %v794 = vadd.f32 %v792, %v793
  %v795 = vmul.f32 %v470, %v773
  %v796 = vadd.f32 %v794, %v795
  %v797 = vmul.f32 %v449, %v775
  %v798 = vmul.f32 %v456, %v774
  %v799 = vadd.f32 %v797, %v798
  %v800 = vmul.f32 %v463, %v773
  %v801 = vsub.f32 %v799, %v800
  %v802 = vmul.f32 %v470, %v772
  %v803 = vadd.f32 %v801, %v802
  %v804 = vmul.f32 %v463, 1.0628535
  %v805 = vmul.f32 %v470, 0.7583879
  %v806 = vsub.f32 %v804, %v805
  %v807 = vmul.f32 %v806, 2.0
  %v808 = vmul.f32 %v470, -0.870491
  %v809 = vmul.f32 %v456, 1.0628535
  %v810 = vsub.f32 %v808, %v809
  %v811 = vmul.f32 %v810, 2.0
  %v812 = vmul.f32 %v456, 0.7583879
  %v813 = vmul.f32 %v463, -0.870491
  %v814 = vsub.f32 %v812, %v813
  %v815 = vmul.f32 %v814, 2.0
  %v816 = vmul.f32 %v449, %v807
  %v817 = vadd.f32 %v816, -0.870491
  %v818 = vmul.f32 %v463, %v815
  %v819 = vmul.f32 %v470, %v811
  %v820 = vsub.f32 %v818, %v819
  %v821 = vadd.f32 %v817, %v820
  %v822 = vmul.f32 %v449, %v811
  %v823 = vadd.f32 %v822, 0.7583879
  %v824 = vmul.f32 %v470, %v807
  %v825 = vmul.f32 %v456, %v815
  %v826 = vsub.f32 %v824, %v825
  %v827 = vadd.f32 %v823, %v826
  %v828 = vmul.f32 %v449, %v815
  %v829 = vadd.f32 %v828, 1.0628535
  %v830 = vmul.f32 %v456, %v811
  %v831 = vmul.f32 %v463, %v807
  %v832 = vsub.f32 %v830, %v831
  %v833 = vadd.f32 %v829, %v832
  %v834 = vld [vmem:[%s3 + $0x7] sm:$0x1]
  %v835 = vmul.f32 %v821, %v834
  %v836 = vadd.f32 %v503, %v835
  %v837 = vmul.f32 %v827, %v834
  %v838 = vadd.f32 %v505, %v837
  %v839 = vmul.f32 %v833, %v834
  %v840 = vadd.f32 %v507, %v839
  %841 = vst.msk [vmem:[%s4 + $0x7] sm:$0x1] %vm63, %v836
  %842 = vst.msk [vmem:[%s4 + $0x1f] sm:$0x1] %vm63, %v838
  %843 = vst.msk [vmem:[%s4 + $0x37] sm:$0x1] %vm63, %v840
  %v844 = vld [vmem:[%s2 + $0x20] sm:$0x1]
  %v845 = vld [vmem:[%s2 + $0x21] sm:$0x1]
  %v846 = vld [vmem:[%s2 + $0x22] sm:$0x1]
  %v847 = vld [vmem:[%s2 + $0x23] sm:$0x1]
  %v848 = vmul.f32 %v844, %v844
  %v849 = vmul.f32 %v845, %v845
  %v850 = vadd.f32 %v848, %v849
  %v851 = vmul.f32 %v846, %v846
  %v852 = vadd.f32 %v850, %v851
  %v853 = vmul.f32 %v847, %v847
  %v854 = vadd.f32 %v852, %v853
  %v855 = vrsqrt.pop %v854
  %v856 = vmul.f32 %v855, %v854
  %v857 = vmul.f32 %v856, %v855
  %v858 = vmul.f32 0.5, %v857
  %v859 = vsub.f32 1.5, %v858
  %v860 = vmul.f32 %v855, %v859
  %v861 = vmul.f32 %v854, %v860
  %vm862 = vcmp.eq.f32.partialorder %v854, inf
  %v863 = vsel %vm862, %v854, %v861
  %vm864 = vcmp.eq.f32.partialorder %v854, 0.0
  %v865 = vand.u32 %v854, 2147483648
  %v866 = vsel %vm864, %v865, %v863
  %v867 = vadd.f32 %v866, 1e-08
  %v868 = vrcp.pop %v867
  %v869 = vmul.f32 %v867, %v868
  %v870 = vsub.f32 1.0, %v869
  %v871 = vmul.f32 %v868, %v870
  %v872 = vadd.f32 %v868, %v871
  %vm873 = vweird.f32 %v867
  %vm874 = vweird.f32 %v868
  %vm875 = vmor %vm873, %vm874
  %v876 = vsel %vm875, %v868, %v872
  %v877 = vand.u32 2147483647, %v867
  %vm878 = vcmp.eq.f32.partialorder %v877, 8.507059e+37
  %v879 = vand.u32 %v867, 2147483648
  %v880 = vor.u32 1.1754944e-38, %v879
  %v881 = vsel %vm878, %v880, %v876
  %v882 = vmul.f32 1.0, %v881
  %v883 = vmul.f32 %v844, %v882
  %v884 = vmul.f32 %v845, %v882
  %v885 = vmul.f32 %v846, %v882
  %v886 = vmul.f32 %v847, %v882
  %v887 = vmul.f32 %v560, %v883
  %v888 = vmul.f32 %v567, %v884
  %v889 = vsub.f32 %v887, %v888
  %v890 = vmul.f32 %v574, %v885
  %v891 = vsub.f32 %v889, %v890
  %v892 = vmul.f32 %v581, %v886
  %v893 = vsub.f32 %v891, %v892
  %v894 = vmul.f32 %v560, %v884
  %v895 = vmul.f32 %v567, %v883
  %v896 = vadd.f32 %v894, %v895
  %v897 = vmul.f32 %v574, %v886
  %v898 = vadd.f32 %v896, %v897
  %v899 = vmul.f32 %v581, %v885
  %v900 = vsub.f32 %v898, %v899
  %v901 = vmul.f32 %v560, %v885
  %v902 = vmul.f32 %v567, %v886
  %v903 = vsub.f32 %v901, %v902
  %v904 = vmul.f32 %v574, %v883
  %v905 = vadd.f32 %v903, %v904
  %v906 = vmul.f32 %v581, %v884
  %v907 = vadd.f32 %v905, %v906
  %v908 = vmul.f32 %v560, %v886
  %v909 = vmul.f32 %v567, %v885
  %v910 = vadd.f32 %v908, %v909
  %v911 = vmul.f32 %v574, %v884
  %v912 = vsub.f32 %v910, %v911
  %v913 = vmul.f32 %v581, %v883
  %v914 = vadd.f32 %v912, %v913
  %v915 = vmul.f32 %v574, 0.88849205
  %v916 = vmul.f32 %v581, -0.49232015
  %v917 = vsub.f32 %v915, %v916
  %v918 = vmul.f32 %v917, 2.0
  %v919 = vmul.f32 %v581, 0.90835655
  %v920 = vmul.f32 %v567, 0.88849205
  %v921 = vsub.f32 %v919, %v920
  %v922 = vmul.f32 %v921, 2.0
  %v923 = vmul.f32 %v567, -0.49232015
  %v924 = vmul.f32 %v574, 0.90835655
  %v925 = vsub.f32 %v923, %v924
  %v926 = vmul.f32 %v925, 2.0
  %v927 = vmul.f32 %v560, %v918
  %v928 = vadd.f32 %v927, 0.90835655
  %v929 = vmul.f32 %v574, %v926
  %v930 = vmul.f32 %v581, %v922
  %v931 = vsub.f32 %v929, %v930
  %v932 = vadd.f32 %v928, %v931
  %v933 = vmul.f32 %v560, %v922
  %v934 = vadd.f32 %v933, -0.49232015
  %v935 = vmul.f32 %v581, %v918
  %v936 = vmul.f32 %v567, %v926
  %v937 = vsub.f32 %v935, %v936
  %v938 = vadd.f32 %v934, %v937
  %v939 = vmul.f32 %v560, %v926
  %v940 = vadd.f32 %v939, 0.88849205
  %v941 = vmul.f32 %v567, %v922
  %v942 = vmul.f32 %v574, %v918
  %v943 = vsub.f32 %v941, %v942
  %v944 = vadd.f32 %v940, %v943
  %v945 = vld [vmem:[%s3 + $0x8] sm:$0x1]
  %v946 = vmul.f32 %v932, %v945
  %v947 = vadd.f32 %v614, %v946
  %v948 = vmul.f32 %v938, %v945
  %v949 = vadd.f32 %v616, %v948
  %v950 = vmul.f32 %v944, %v945
  %v951 = vadd.f32 %v618, %v950
  %952 = vst.msk [vmem:[%s4 + $0x8] sm:$0x1] %vm63, %v947
  %953 = vst.msk [vmem:[%s4 + $0x20] sm:$0x1] %vm63, %v949
  %954 = vst.msk [vmem:[%s4 + $0x38] sm:$0x1] %vm63, %v951
  %v955 = vld [vmem:[%s2 + $0x24] sm:$0x1]
  %v956 = vld [vmem:[%s2 + $0x25] sm:$0x1]
  %v957 = vld [vmem:[%s2 + $0x26] sm:$0x1]
  %v958 = vld [vmem:[%s2 + $0x27] sm:$0x1]
  %v959 = vmul.f32 %v955, %v955
  %v960 = vmul.f32 %v956, %v956
  %v961 = vadd.f32 %v959, %v960
  %v962 = vmul.f32 %v957, %v957
  %v963 = vadd.f32 %v961, %v962
  %v964 = vmul.f32 %v958, %v958
  %v965 = vadd.f32 %v963, %v964
  %v966 = vrsqrt.pop %v965
  %v967 = vmul.f32 %v966, %v965
  %v968 = vmul.f32 %v967, %v966
  %v969 = vmul.f32 0.5, %v968
  %v970 = vsub.f32 1.5, %v969
  %v971 = vmul.f32 %v966, %v970
  %v972 = vmul.f32 %v965, %v971
  %vm973 = vcmp.eq.f32.partialorder %v965, inf
  %v974 = vsel %vm973, %v965, %v972
  %vm975 = vcmp.eq.f32.partialorder %v965, 0.0
  %v976 = vand.u32 %v965, 2147483648
  %v977 = vsel %vm975, %v976, %v974
  %v978 = vadd.f32 %v977, 1e-08
  %v979 = vrcp.pop %v978
  %v980 = vmul.f32 %v978, %v979
  %v981 = vsub.f32 1.0, %v980
  %v982 = vmul.f32 %v979, %v981
  %v983 = vadd.f32 %v979, %v982
  %vm984 = vweird.f32 %v978
  %vm985 = vweird.f32 %v979
  %vm986 = vmor %vm984, %vm985
  %v987 = vsel %vm986, %v979, %v983
  %v988 = vand.u32 2147483647, %v978
  %vm989 = vcmp.eq.f32.partialorder %v988, 8.507059e+37
  %v990 = vand.u32 %v978, 2147483648
  %v991 = vor.u32 1.1754944e-38, %v990
  %v992 = vsel %vm989, %v991, %v987
  %v993 = vmul.f32 1.0, %v992
  %v994 = vmul.f32 %v955, %v993
  %v995 = vmul.f32 %v956, %v993
  %v996 = vmul.f32 %v957, %v993
  %v997 = vmul.f32 %v958, %v993
  %v998 = vmul.f32 %v671, %v994
  %v999 = vmul.f32 %v678, %v995
  %v1000 = vsub.f32 %v998, %v999
  %v1001 = vmul.f32 %v685, %v996
  %v1002 = vsub.f32 %v1000, %v1001
  %v1003 = vmul.f32 %v692, %v997
  %v1004 = vsub.f32 %v1002, %v1003
  %v1005 = vmul.f32 %v671, %v995
  %v1006 = vmul.f32 %v678, %v994
  %v1007 = vadd.f32 %v1005, %v1006
  %v1008 = vmul.f32 %v685, %v997
  %v1009 = vadd.f32 %v1007, %v1008
  %v1010 = vmul.f32 %v692, %v996
  %v1011 = vsub.f32 %v1009, %v1010
  %v1012 = vmul.f32 %v671, %v996
  %v1013 = vmul.f32 %v678, %v997
  %v1014 = vsub.f32 %v1012, %v1013
  %v1015 = vmul.f32 %v685, %v994
  %v1016 = vadd.f32 %v1014, %v1015
  %v1017 = vmul.f32 %v692, %v995
  %v1018 = vadd.f32 %v1016, %v1017
  %v1019 = vmul.f32 %v671, %v997
  %v1020 = vmul.f32 %v678, %v996
  %v1021 = vadd.f32 %v1019, %v1020
  %v1022 = vmul.f32 %v685, %v995
  %v1023 = vsub.f32 %v1021, %v1022
  %v1024 = vmul.f32 %v692, %v994
  %v1025 = vadd.f32 %v1023, %v1024
  %v1026 = vmul.f32 %v685, 0.4417807
  %v1027 = vmul.f32 %v692, -2.5158658
  %v1028 = vsub.f32 %v1026, %v1027
  %v1029 = vmul.f32 %v1028, 2.0
  %v1030 = vmul.f32 %v692, 1.6453909
  %v1031 = vmul.f32 %v678, 0.4417807
  %v1032 = vsub.f32 %v1030, %v1031
  %v1033 = vmul.f32 %v1032, 2.0
  %v1034 = vmul.f32 %v678, -2.5158658
  %v1035 = vmul.f32 %v685, 1.6453909
  %v1036 = vsub.f32 %v1034, %v1035
  %v1037 = vmul.f32 %v1036, 2.0
  %v1038 = vmul.f32 %v671, %v1029
  %v1039 = vadd.f32 %v1038, 1.6453909
  %v1040 = vmul.f32 %v685, %v1037
  %v1041 = vmul.f32 %v692, %v1033
  %v1042 = vsub.f32 %v1040, %v1041
  %v1043 = vadd.f32 %v1039, %v1042
  %v1044 = vmul.f32 %v671, %v1033
  %v1045 = vadd.f32 %v1044, -2.5158658
  %v1046 = vmul.f32 %v692, %v1029
  %v1047 = vmul.f32 %v678, %v1037
  %v1048 = vsub.f32 %v1046, %v1047
  %v1049 = vadd.f32 %v1045, %v1048
  %v1050 = vmul.f32 %v671, %v1037
  %v1051 = vadd.f32 %v1050, 0.4417807
  %v1052 = vmul.f32 %v678, %v1033
  %v1053 = vmul.f32 %v685, %v1029
  %v1054 = vsub.f32 %v1052, %v1053
  %v1055 = vadd.f32 %v1051, %v1054
  %v1056 = vld [vmem:[%s3 + $0x9] sm:$0x1]
  %v1057 = vmul.f32 %v1043, %v1056
  %v1058 = vadd.f32 %v725, %v1057
  %v1059 = vmul.f32 %v1049, %v1056
  %v1060 = vadd.f32 %v727, %v1059
  %v1061 = vmul.f32 %v1055, %v1056
  %v1062 = vadd.f32 %v729, %v1061
  %1063 = vst.msk [vmem:[%s4 + $0x9] sm:$0x1] %vm63, %v1058
  %1064 = vst.msk [vmem:[%s4 + $0x21] sm:$0x1] %vm63, %v1060
  %1065 = vst.msk [vmem:[%s4 + $0x39] sm:$0x1] %vm63, %v1062
  %v1066 = vmul.f32 %v796, -0.5887164
  %v1067 = vmul.f32 %v803, -1.1731389
  %v1068 = vsub.f32 %v1066, %v1067
  %v1069 = vmul.f32 %v1068, 2.0
  %v1070 = vmul.f32 %v803, 1.8173127
  %v1071 = vmul.f32 %v789, -0.5887164
  %v1072 = vsub.f32 %v1070, %v1071
  %v1073 = vmul.f32 %v1072, 2.0
  %v1074 = vmul.f32 %v789, -1.1731389
  %v1075 = vmul.f32 %v796, 1.8173127
  %v1076 = vsub.f32 %v1074, %v1075
  %v1077 = vmul.f32 %v1076, 2.0
  %v1078 = vmul.f32 %v782, %v1069
  %v1079 = vadd.f32 %v1078, 1.8173127
  %v1080 = vmul.f32 %v796, %v1077
  %v1081 = vmul.f32 %v803, %v1073
  %v1082 = vsub.f32 %v1080, %v1081
  %v1083 = vadd.f32 %v1079, %v1082
  %v1084 = vmul.f32 %v782, %v1073
  %v1085 = vadd.f32 %v1084, -1.1731389
  %v1086 = vmul.f32 %v803, %v1069
  %v1087 = vmul.f32 %v789, %v1077
  %v1088 = vsub.f32 %v1086, %v1087
  %v1089 = vadd.f32 %v1085, %v1088
  %v1090 = vmul.f32 %v782, %v1077
  %v1091 = vadd.f32 %v1090, -0.5887164
  %v1092 = vmul.f32 %v789, %v1073
  %v1093 = vmul.f32 %v796, %v1069
  %v1094 = vsub.f32 %v1092, %v1093
  %v1095 = vadd.f32 %v1091, %v1094
  %v1096 = vld [vmem:[%s3 + $0xa] sm:$0x1]
  %v1097 = vmul.f32 %v1083, %v1096
  %v1098 = vadd.f32 %v836, %v1097
  %v1099 = vmul.f32 %v1089, %v1096
  %v1100 = vadd.f32 %v838, %v1099
  %v1101 = vmul.f32 %v1095, %v1096
  %v1102 = vadd.f32 %v840, %v1101
  %1103 = vst.msk [vmem:[%s4 + $0xa] sm:$0x1] %vm63, %v1098
  %1104 = vst.msk [vmem:[%s4 + $0x22] sm:$0x1] %vm63, %v1100
  %1105 = vst.msk [vmem:[%s4 + $0x3a] sm:$0x1] %vm63, %v1102
  %v1106 = vmul.f32 %v907, -0.19745427
  %v1107 = vmul.f32 %v914, 0.80188036
  %v1108 = vsub.f32 %v1106, %v1107
  %v1109 = vmul.f32 %v1108, 2.0
  %v1110 = vmul.f32 %v914, 2.146985
  %v1111 = vmul.f32 %v900, -0.19745427
  %v1112 = vsub.f32 %v1110, %v1111
  %v1113 = vmul.f32 %v1112, 2.0
  %v1114 = vmul.f32 %v900, 0.80188036
  %v1115 = vmul.f32 %v907, 2.146985
  %v1116 = vsub.f32 %v1114, %v1115
  %v1117 = vmul.f32 %v1116, 2.0
  %v1118 = vmul.f32 %v893, %v1109
  %v1119 = vadd.f32 %v1118, 2.146985
  %v1120 = vmul.f32 %v907, %v1117
  %v1121 = vmul.f32 %v914, %v1113
  %v1122 = vsub.f32 %v1120, %v1121
  %v1123 = vadd.f32 %v1119, %v1122
  %v1124 = vmul.f32 %v893, %v1113
  %v1125 = vadd.f32 %v1124, 0.80188036
  %v1126 = vmul.f32 %v914, %v1109
  %v1127 = vmul.f32 %v900, %v1117
  %v1128 = vsub.f32 %v1126, %v1127
  %v1129 = vadd.f32 %v1125, %v1128
  %v1130 = vmul.f32 %v893, %v1117
  %v1131 = vadd.f32 %v1130, -0.19745427
  %v1132 = vmul.f32 %v900, %v1113
  %v1133 = vmul.f32 %v907, %v1109
  %v1134 = vsub.f32 %v1132, %v1133
  %v1135 = vadd.f32 %v1131, %v1134
  %v1136 = vld [vmem:[%s3 + $0xb] sm:$0x1]
  %v1137 = vmul.f32 %v1123, %v1136
  %v1138 = vadd.f32 %v947, %v1137
  %v1139 = vmul.f32 %v1129, %v1136
  %v1140 = vadd.f32 %v949, %v1139
  %v1141 = vmul.f32 %v1135, %v1136
  %v1142 = vadd.f32 %v951, %v1141
  %1143 = vst.msk [vmem:[%s4 + $0xb] sm:$0x1] %vm63, %v1138
  %1144 = vst.msk [vmem:[%s4 + $0x23] sm:$0x1] %vm63, %v1140
  %1145 = vst.msk [vmem:[%s4 + $0x3b] sm:$0x1] %vm63, %v1142
  %v1146 = vld [vmem:[%s2 + $0x30] sm:$0x1]
  %v1147 = vld [vmem:[%s2 + $0x31] sm:$0x1]
  %v1148 = vld [vmem:[%s2 + $0x32] sm:$0x1]
  %v1149 = vld [vmem:[%s2 + $0x33] sm:$0x1]
  %v1150 = vmul.f32 %v1146, %v1146
  %v1151 = vmul.f32 %v1147, %v1147
  %v1152 = vadd.f32 %v1150, %v1151
  %v1153 = vmul.f32 %v1148, %v1148
  %v1154 = vadd.f32 %v1152, %v1153
  %v1155 = vmul.f32 %v1149, %v1149
  %v1156 = vadd.f32 %v1154, %v1155
  %v1157 = vrsqrt.pop %v1156
  %v1158 = vmul.f32 %v1157, %v1156
  %v1159 = vmul.f32 %v1158, %v1157
  %v1160 = vmul.f32 0.5, %v1159
  %v1161 = vsub.f32 1.5, %v1160
  %v1162 = vmul.f32 %v1157, %v1161
  %v1163 = vmul.f32 %v1156, %v1162
  %vm1164 = vcmp.eq.f32.partialorder %v1156, inf
  %v1165 = vsel %vm1164, %v1156, %v1163
  %vm1166 = vcmp.eq.f32.partialorder %v1156, 0.0
  %v1167 = vand.u32 %v1156, 2147483648
  %v1168 = vsel %vm1166, %v1167, %v1165
  %v1169 = vadd.f32 %v1168, 1e-08
  %v1170 = vrcp.pop %v1169
  %v1171 = vmul.f32 %v1169, %v1170
  %v1172 = vsub.f32 1.0, %v1171
  %v1173 = vmul.f32 %v1170, %v1172
  %v1174 = vadd.f32 %v1170, %v1173
  %vm1175 = vweird.f32 %v1169
  %vm1176 = vweird.f32 %v1170
  %vm1177 = vmor %vm1175, %vm1176
  %v1178 = vsel %vm1177, %v1170, %v1174
  %v1179 = vand.u32 2147483647, %v1169
  %vm1180 = vcmp.eq.f32.partialorder %v1179, 8.507059e+37
  %v1181 = vand.u32 %v1169, 2147483648
  %v1182 = vor.u32 1.1754944e-38, %v1181
  %v1183 = vsel %vm1180, %v1182, %v1178
  %v1184 = vmul.f32 1.0, %v1183
  %v1185 = vmul.f32 %v1146, %v1184
  %v1186 = vmul.f32 %v1147, %v1184
  %v1187 = vmul.f32 %v1148, %v1184
  %v1188 = vmul.f32 %v1149, %v1184
  %v1189 = vmul.f32 %v1004, %v1185
  %v1190 = vmul.f32 %v1011, %v1186
  %v1191 = vsub.f32 %v1189, %v1190
  %v1192 = vmul.f32 %v1018, %v1187
  %v1193 = vsub.f32 %v1191, %v1192
  %v1194 = vmul.f32 %v1025, %v1188
  %v1195 = vsub.f32 %v1193, %v1194
  %v1196 = vmul.f32 %v1004, %v1186
  %v1197 = vmul.f32 %v1011, %v1185
  %v1198 = vadd.f32 %v1196, %v1197
  %v1199 = vmul.f32 %v1018, %v1188
  %v1200 = vadd.f32 %v1198, %v1199
  %v1201 = vmul.f32 %v1025, %v1187
  %v1202 = vsub.f32 %v1200, %v1201
  %v1203 = vmul.f32 %v1004, %v1187
  %v1204 = vmul.f32 %v1011, %v1188
  %v1205 = vsub.f32 %v1203, %v1204
  %v1206 = vmul.f32 %v1018, %v1185
  %v1207 = vadd.f32 %v1205, %v1206
  %v1208 = vmul.f32 %v1025, %v1186
  %v1209 = vadd.f32 %v1207, %v1208
  %v1210 = vmul.f32 %v1004, %v1188
  %v1211 = vmul.f32 %v1011, %v1187
  %v1212 = vadd.f32 %v1210, %v1211
  %v1213 = vmul.f32 %v1018, %v1186
  %v1214 = vsub.f32 %v1212, %v1213
  %v1215 = vmul.f32 %v1025, %v1185
  %v1216 = vadd.f32 %v1214, %v1215
  %v1217 = vmul.f32 %v1018, -2.362677
  %v1218 = vmul.f32 %v1025, -0.8214191
  %v1219 = vsub.f32 %v1217, %v1218
  %v1220 = vmul.f32 %v1219, 2.0
  %v1221 = vmul.f32 %v1025, -1.7398049
  %v1222 = vmul.f32 %v1011, -2.362677
  %v1223 = vsub.f32 %v1221, %v1222
  %v1224 = vmul.f32 %v1223, 2.0
  %v1225 = vmul.f32 %v1011, -0.8214191
  %v1226 = vmul.f32 %v1018, -1.7398049
  %v1227 = vsub.f32 %v1225, %v1226
  %v1228 = vmul.f32 %v1227, 2.0
  %v1229 = vmul.f32 %v1004, %v1220
  %v1230 = vadd.f32 %v1229, -1.7398049
  %v1231 = vmul.f32 %v1018, %v1228
  %v1232 = vmul.f32 %v1025, %v1224
  %v1233 = vsub.f32 %v1231, %v1232
  %v1234 = vadd.f32 %v1230, %v1233
  %v1235 = vmul.f32 %v1004, %v1224
  %v1236 = vadd.f32 %v1235, -0.8214191
  %v1237 = vmul.f32 %v1025, %v1220
  %v1238 = vmul.f32 %v1011, %v1228
  %v1239 = vsub.f32 %v1237, %v1238
  %v1240 = vadd.f32 %v1236, %v1239
  %v1241 = vmul.f32 %v1004, %v1228
  %v1242 = vadd.f32 %v1241, -2.362677
  %v1243 = vmul.f32 %v1011, %v1224
  %v1244 = vmul.f32 %v1018, %v1220
  %v1245 = vsub.f32 %v1243, %v1244
  %v1246 = vadd.f32 %v1242, %v1245
  %v1247 = vld [vmem:[%s3 + $0xc] sm:$0x1]
  %v1248 = vmul.f32 %v1234, %v1247
  %v1249 = vadd.f32 %v1058, %v1248
  %v1250 = vmul.f32 %v1240, %v1247
  %v1251 = vadd.f32 %v1060, %v1250
  %v1252 = vmul.f32 %v1246, %v1247
  %v1253 = vadd.f32 %v1062, %v1252
  %1254 = vst.msk [vmem:[%s4 + $0xc] sm:$0x1] %vm63, %v1249
  %1255 = vst.msk [vmem:[%s4 + $0x24] sm:$0x1] %vm63, %v1251
  %1256 = vst.msk [vmem:[%s4 + $0x3c] sm:$0x1] %vm63, %v1253
  %v1257 = vld [vmem:[%s2 + $0x34] sm:$0x1]
  %v1258 = vld [vmem:[%s2 + $0x35] sm:$0x1]
  %v1259 = vld [vmem:[%s2 + $0x36] sm:$0x1]
  %v1260 = vld [vmem:[%s2 + $0x37] sm:$0x1]
  %v1261 = vmul.f32 %v1257, %v1257
  %v1262 = vmul.f32 %v1258, %v1258
  %v1263 = vadd.f32 %v1261, %v1262
  %v1264 = vmul.f32 %v1259, %v1259
  %v1265 = vadd.f32 %v1263, %v1264
  %v1266 = vmul.f32 %v1260, %v1260
  %v1267 = vadd.f32 %v1265, %v1266
  %v1268 = vrsqrt.pop %v1267
  %v1269 = vmul.f32 %v1268, %v1267
  %v1270 = vmul.f32 %v1269, %v1268
  %v1271 = vmul.f32 0.5, %v1270
  %v1272 = vsub.f32 1.5, %v1271
  %v1273 = vmul.f32 %v1268, %v1272
  %v1274 = vmul.f32 %v1267, %v1273
  %vm1275 = vcmp.eq.f32.partialorder %v1267, inf
  %v1276 = vsel %vm1275, %v1267, %v1274
  %vm1277 = vcmp.eq.f32.partialorder %v1267, 0.0
  %v1278 = vand.u32 %v1267, 2147483648
  %v1279 = vsel %vm1277, %v1278, %v1276
  %v1280 = vadd.f32 %v1279, 1e-08
  %v1281 = vrcp.pop %v1280
  %v1282 = vmul.f32 %v1280, %v1281
  %v1283 = vsub.f32 1.0, %v1282
  %v1284 = vmul.f32 %v1281, %v1283
  %v1285 = vadd.f32 %v1281, %v1284
  %vm1286 = vweird.f32 %v1280
  %vm1287 = vweird.f32 %v1281
  %vm1288 = vmor %vm1286, %vm1287
  %v1289 = vsel %vm1288, %v1281, %v1285
  %v1290 = vand.u32 2147483647, %v1280
  %vm1291 = vcmp.eq.f32.partialorder %v1290, 8.507059e+37
  %v1292 = vand.u32 %v1280, 2147483648
  %v1293 = vor.u32 1.1754944e-38, %v1292
  %v1294 = vsel %vm1291, %v1293, %v1289
  %v1295 = vmul.f32 1.0, %v1294
  %v1296 = vmul.f32 %v1257, %v1295
  %v1297 = vmul.f32 %v1258, %v1295
  %v1298 = vmul.f32 %v1259, %v1295
  %v1299 = vmul.f32 %v1260, %v1295
  %v1300 = vmul.f32 %v1004, %v1296
  %v1301 = vmul.f32 %v1011, %v1297
  %v1302 = vsub.f32 %v1300, %v1301
  %v1303 = vmul.f32 %v1018, %v1298
  %v1304 = vsub.f32 %v1302, %v1303
  %v1305 = vmul.f32 %v1025, %v1299
  %v1306 = vsub.f32 %v1304, %v1305
  %v1307 = vmul.f32 %v1004, %v1297
  %v1308 = vmul.f32 %v1011, %v1296
  %v1309 = vadd.f32 %v1307, %v1308
  %v1310 = vmul.f32 %v1018, %v1299
  %v1311 = vadd.f32 %v1309, %v1310
  %v1312 = vmul.f32 %v1025, %v1298
  %v1313 = vsub.f32 %v1311, %v1312
  %v1314 = vmul.f32 %v1004, %v1298
  %v1315 = vmul.f32 %v1011, %v1299
  %v1316 = vsub.f32 %v1314, %v1315
  %v1317 = vmul.f32 %v1018, %v1296
  %v1318 = vadd.f32 %v1316, %v1317
  %v1319 = vmul.f32 %v1025, %v1297
  %v1320 = vadd.f32 %v1318, %v1319
  %v1321 = vmul.f32 %v1004, %v1299
  %v1322 = vmul.f32 %v1011, %v1298
  %v1323 = vadd.f32 %v1321, %v1322
  %v1324 = vmul.f32 %v1018, %v1297
  %v1325 = vsub.f32 %v1323, %v1324
  %v1326 = vmul.f32 %v1025, %v1296
  %v1327 = vadd.f32 %v1325, %v1326
  %v1328 = vmul.f32 %v1018, 0.35037923
  %v1329 = vmul.f32 %v1025, 1.405427
  %v1330 = vsub.f32 %v1328, %v1329
  %v1331 = vmul.f32 %v1330, 2.0
  %v1332 = vmul.f32 %v1025, 1.5526493
  %v1333 = vmul.f32 %v1011, 0.35037923
  %v1334 = vsub.f32 %v1332, %v1333
  %v1335 = vmul.f32 %v1334, 2.0
  %v1336 = vmul.f32 %v1011, 1.405427
  %v1337 = vmul.f32 %v1018, 1.5526493
  %v1338 = vsub.f32 %v1336, %v1337
  %v1339 = vmul.f32 %v1338, 2.0
  %v1340 = vmul.f32 %v1004, %v1331
  %v1341 = vadd.f32 %v1340, 1.5526493
  %v1342 = vmul.f32 %v1018, %v1339
  %v1343 = vmul.f32 %v1025, %v1335
  %v1344 = vsub.f32 %v1342, %v1343
  %v1345 = vadd.f32 %v1341, %v1344
  %v1346 = vmul.f32 %v1004, %v1335
  %v1347 = vadd.f32 %v1346, 1.405427
  %v1348 = vmul.f32 %v1025, %v1331
  %v1349 = vmul.f32 %v1011, %v1339
  %v1350 = vsub.f32 %v1348, %v1349
  %v1351 = vadd.f32 %v1347, %v1350
  %v1352 = vmul.f32 %v1004, %v1339
  %v1353 = vadd.f32 %v1352, 0.35037923
  %v1354 = vmul.f32 %v1011, %v1335
  %v1355 = vmul.f32 %v1018, %v1331
  %v1356 = vsub.f32 %v1354, %v1355
  %v1357 = vadd.f32 %v1353, %v1356
  %v1358 = vld [vmem:[%s3 + $0xd] sm:$0x1]
  %v1359 = vmul.f32 %v1345, %v1358
  %v1360 = vadd.f32 %v1058, %v1359
  %v1361 = vmul.f32 %v1351, %v1358
  %v1362 = vadd.f32 %v1060, %v1361
  %v1363 = vmul.f32 %v1357, %v1358
  %v1364 = vadd.f32 %v1062, %v1363
  %1365 = vst.msk [vmem:[%s4 + $0xd] sm:$0x1] %vm63, %v1360
  %1366 = vst.msk [vmem:[%s4 + $0x25] sm:$0x1] %vm63, %v1362
  %1367 = vst.msk [vmem:[%s4 + $0x3d] sm:$0x1] %vm63, %v1364
  %v1368 = vld [vmem:[%s2 + $0x38] sm:$0x1]
  %v1369 = vld [vmem:[%s2 + $0x39] sm:$0x1]
  %v1370 = vld [vmem:[%s2 + $0x3a] sm:$0x1]
  %v1371 = vld [vmem:[%s2 + $0x3b] sm:$0x1]
  %v1372 = vmul.f32 %v1368, %v1368
  %v1373 = vmul.f32 %v1369, %v1369
  %v1374 = vadd.f32 %v1372, %v1373
  %v1375 = vmul.f32 %v1370, %v1370
  %v1376 = vadd.f32 %v1374, %v1375
  %v1377 = vmul.f32 %v1371, %v1371
  %v1378 = vadd.f32 %v1376, %v1377
  %v1379 = vrsqrt.pop %v1378
  %v1380 = vmul.f32 %v1379, %v1378
  %v1381 = vmul.f32 %v1380, %v1379
  %v1382 = vmul.f32 0.5, %v1381
  %v1383 = vsub.f32 1.5, %v1382
  %v1384 = vmul.f32 %v1379, %v1383
  %v1385 = vmul.f32 %v1378, %v1384
  %vm1386 = vcmp.eq.f32.partialorder %v1378, inf
  %v1387 = vsel %vm1386, %v1378, %v1385
  %vm1388 = vcmp.eq.f32.partialorder %v1378, 0.0
  %v1389 = vand.u32 %v1378, 2147483648
  %v1390 = vsel %vm1388, %v1389, %v1387
  %v1391 = vadd.f32 %v1390, 1e-08
  %v1392 = vrcp.pop %v1391
  %v1393 = vmul.f32 %v1391, %v1392
  %v1394 = vsub.f32 1.0, %v1393
  %v1395 = vmul.f32 %v1392, %v1394
  %v1396 = vadd.f32 %v1392, %v1395
  %vm1397 = vweird.f32 %v1391
  %vm1398 = vweird.f32 %v1392
  %vm1399 = vmor %vm1397, %vm1398
  %v1400 = vsel %vm1399, %v1392, %v1396
  %v1401 = vand.u32 2147483647, %v1391
  %vm1402 = vcmp.eq.f32.partialorder %v1401, 8.507059e+37
  %v1403 = vand.u32 %v1391, 2147483648
  %v1404 = vor.u32 1.1754944e-38, %v1403
  %v1405 = vsel %vm1402, %v1404, %v1400
  %v1406 = vmul.f32 1.0, %v1405
  %v1407 = vmul.f32 %v1368, %v1406
  %v1408 = vmul.f32 %v1369, %v1406
  %v1409 = vmul.f32 %v1370, %v1406
  %v1410 = vmul.f32 %v1371, %v1406
  %v1411 = vmul.f32 %v1004, %v1407
  %v1412 = vmul.f32 %v1011, %v1408
  %v1413 = vsub.f32 %v1411, %v1412
  %v1414 = vmul.f32 %v1018, %v1409
  %v1415 = vsub.f32 %v1413, %v1414
  %v1416 = vmul.f32 %v1025, %v1410
  %v1417 = vsub.f32 %v1415, %v1416
  %v1418 = vmul.f32 %v1004, %v1408
  %v1419 = vmul.f32 %v1011, %v1407
  %v1420 = vadd.f32 %v1418, %v1419
  %v1421 = vmul.f32 %v1018, %v1410
  %v1422 = vadd.f32 %v1420, %v1421
  %v1423 = vmul.f32 %v1025, %v1409
  %v1424 = vsub.f32 %v1422, %v1423
  %v1425 = vmul.f32 %v1004, %v1409
  %v1426 = vmul.f32 %v1011, %v1410
  %v1427 = vsub.f32 %v1425, %v1426
  %v1428 = vmul.f32 %v1018, %v1407
  %v1429 = vadd.f32 %v1427, %v1428
  %v1430 = vmul.f32 %v1025, %v1408
  %v1431 = vadd.f32 %v1429, %v1430
  %v1432 = vmul.f32 %v1004, %v1410
  %v1433 = vmul.f32 %v1011, %v1409
  %v1434 = vadd.f32 %v1432, %v1433
  %v1435 = vmul.f32 %v1018, %v1408
  %v1436 = vsub.f32 %v1434, %v1435
  %v1437 = vmul.f32 %v1025, %v1407
  %v1438 = vadd.f32 %v1436, %v1437
  %v1439 = vmul.f32 %v1018, -0.21245524
  %v1440 = vmul.f32 %v1025, 1.1470388
  %v1441 = vsub.f32 %v1439, %v1440
  %v1442 = vmul.f32 %v1441, 2.0
  %v1443 = vmul.f32 %v1025, 0.06246307
  %v1444 = vmul.f32 %v1011, -0.21245524
  %v1445 = vsub.f32 %v1443, %v1444
  %v1446 = vmul.f32 %v1445, 2.0
  %v1447 = vmul.f32 %v1011, 1.1470388
  %v1448 = vmul.f32 %v1018, 0.06246307
  %v1449 = vsub.f32 %v1447, %v1448
  %v1450 = vmul.f32 %v1449, 2.0
  %v1451 = vmul.f32 %v1004, %v1442
  %v1452 = vadd.f32 %v1451, 0.06246307
  %v1453 = vmul.f32 %v1018, %v1450
  %v1454 = vmul.f32 %v1025, %v1446
  %v1455 = vsub.f32 %v1453, %v1454
  %v1456 = vadd.f32 %v1452, %v1455
  %v1457 = vmul.f32 %v1004, %v1446
  %v1458 = vadd.f32 %v1457, 1.1470388
  %v1459 = vmul.f32 %v1025, %v1442
  %v1460 = vmul.f32 %v1011, %v1450
  %v1461 = vsub.f32 %v1459, %v1460
  %v1462 = vadd.f32 %v1458, %v1461
  %v1463 = vmul.f32 %v1004, %v1450
  %v1464 = vadd.f32 %v1463, -0.21245524
  %v1465 = vmul.f32 %v1011, %v1446
  %v1466 = vmul.f32 %v1018, %v1442
  %v1467 = vsub.f32 %v1465, %v1466
  %v1468 = vadd.f32 %v1464, %v1467
  %v1469 = vld [vmem:[%s3 + $0xe] sm:$0x1]
  %v1470 = vmul.f32 %v1456, %v1469
  %v1471 = vadd.f32 %v1058, %v1470
  %v1472 = vmul.f32 %v1462, %v1469
  %v1473 = vadd.f32 %v1060, %v1472
  %v1474 = vmul.f32 %v1468, %v1469
  %v1475 = vadd.f32 %v1062, %v1474
  %1476 = vst.msk [vmem:[%s4 + $0xe] sm:$0x1] %vm63, %v1471
  %1477 = vst.msk [vmem:[%s4 + $0x26] sm:$0x1] %vm63, %v1473
  %1478 = vst.msk [vmem:[%s4 + $0x3e] sm:$0x1] %vm63, %v1475
  %v1479 = vmul.f32 %v1209, -0.33923876
  %v1480 = vmul.f32 %v1216, 0.6888535
  %v1481 = vsub.f32 %v1479, %v1480
  %v1482 = vmul.f32 %v1481, 2.0
  %v1483 = vmul.f32 %v1216, -0.33967492
  %v1484 = vmul.f32 %v1202, -0.33923876
  %v1485 = vsub.f32 %v1483, %v1484
  %v1486 = vmul.f32 %v1485, 2.0
  %v1487 = vmul.f32 %v1202, 0.6888535
  %v1488 = vmul.f32 %v1209, -0.33967492
  %v1489 = vsub.f32 %v1487, %v1488
  %v1490 = vmul.f32 %v1489, 2.0
  %v1491 = vmul.f32 %v1195, %v1482
  %v1492 = vadd.f32 %v1491, -0.33967492
  %v1493 = vmul.f32 %v1209, %v1490
  %v1494 = vmul.f32 %v1216, %v1486
  %v1495 = vsub.f32 %v1493, %v1494
  %v1496 = vadd.f32 %v1492, %v1495
  %v1497 = vmul.f32 %v1195, %v1486
  %v1498 = vadd.f32 %v1497, 0.6888535
  %v1499 = vmul.f32 %v1216, %v1482
  %v1500 = vmul.f32 %v1202, %v1490
  %v1501 = vsub.f32 %v1499, %v1500
  %v1502 = vadd.f32 %v1498, %v1501
  %v1503 = vmul.f32 %v1195, %v1490
  %v1504 = vadd.f32 %v1503, -0.33923876
  %v1505 = vmul.f32 %v1202, %v1486
  %v1506 = vmul.f32 %v1209, %v1482
  %v1507 = vsub.f32 %v1505, %v1506
  %v1508 = vadd.f32 %v1504, %v1507
  %v1509 = vld [vmem:[%s3 + $0xf] sm:$0x1]
  %v1510 = vmul.f32 %v1496, %v1509
  %v1511 = vadd.f32 %v1249, %v1510
  %v1512 = vmul.f32 %v1502, %v1509
  %v1513 = vadd.f32 %v1251, %v1512
  %v1514 = vmul.f32 %v1508, %v1509
  %v1515 = vadd.f32 %v1253, %v1514
  %1516 = vst.msk [vmem:[%s4 + $0xf] sm:$0x1] %vm63, %v1511
  %1517 = vst.msk [vmem:[%s4 + $0x27] sm:$0x1] %vm63, %v1513
  %1518 = vst.msk [vmem:[%s4 + $0x3f] sm:$0x1] %vm63, %v1515
  %v1519 = vld [vmem:[%s2 + $0x40] sm:$0x1]
  %v1520 = vld [vmem:[%s2 + $0x41] sm:$0x1]
  %v1521 = vld [vmem:[%s2 + $0x42] sm:$0x1]
  %v1522 = vld [vmem:[%s2 + $0x43] sm:$0x1]
  %v1523 = vmul.f32 %v1519, %v1519
  %v1524 = vmul.f32 %v1520, %v1520
  %v1525 = vadd.f32 %v1523, %v1524
  %v1526 = vmul.f32 %v1521, %v1521
  %v1527 = vadd.f32 %v1525, %v1526
  %v1528 = vmul.f32 %v1522, %v1522
  %v1529 = vadd.f32 %v1527, %v1528
  %v1530 = vrsqrt.pop %v1529
  %v1531 = vmul.f32 %v1530, %v1529
  %v1532 = vmul.f32 %v1531, %v1530
  %v1533 = vmul.f32 0.5, %v1532
  %v1534 = vsub.f32 1.5, %v1533
  %v1535 = vmul.f32 %v1530, %v1534
  %v1536 = vmul.f32 %v1529, %v1535
  %vm1537 = vcmp.eq.f32.partialorder %v1529, inf
  %v1538 = vsel %vm1537, %v1529, %v1536
  %vm1539 = vcmp.eq.f32.partialorder %v1529, 0.0
  %v1540 = vand.u32 %v1529, 2147483648
  %v1541 = vsel %vm1539, %v1540, %v1538
  %v1542 = vadd.f32 %v1541, 1e-08
  %v1543 = vrcp.pop %v1542
  %v1544 = vmul.f32 %v1542, %v1543
  %v1545 = vsub.f32 1.0, %v1544
  %v1546 = vmul.f32 %v1543, %v1545
  %v1547 = vadd.f32 %v1543, %v1546
  %vm1548 = vweird.f32 %v1542
  %vm1549 = vweird.f32 %v1543
  %vm1550 = vmor %vm1548, %vm1549
  %v1551 = vsel %vm1550, %v1543, %v1547
  %v1552 = vand.u32 2147483647, %v1542
  %vm1553 = vcmp.eq.f32.partialorder %v1552, 8.507059e+37
  %v1554 = vand.u32 %v1542, 2147483648
  %v1555 = vor.u32 1.1754944e-38, %v1554
  %v1556 = vsel %vm1553, %v1555, %v1551
  %v1557 = vmul.f32 1.0, %v1556
  %v1558 = vmul.f32 %v1519, %v1557
  %v1559 = vmul.f32 %v1520, %v1557
  %v1560 = vmul.f32 %v1521, %v1557
  %v1561 = vmul.f32 %v1522, %v1557
  %v1562 = vmul.f32 %v1306, %v1558
  %v1563 = vmul.f32 %v1313, %v1559
  %v1564 = vsub.f32 %v1562, %v1563
  %v1565 = vmul.f32 %v1320, %v1560
  %v1566 = vsub.f32 %v1564, %v1565
  %v1567 = vmul.f32 %v1327, %v1561
  %v1568 = vsub.f32 %v1566, %v1567
  %v1569 = vmul.f32 %v1306, %v1559
  %v1570 = vmul.f32 %v1313, %v1558
  %v1571 = vadd.f32 %v1569, %v1570
  %v1572 = vmul.f32 %v1320, %v1561
  %v1573 = vadd.f32 %v1571, %v1572
  %v1574 = vmul.f32 %v1327, %v1560
  %v1575 = vsub.f32 %v1573, %v1574
  %v1576 = vmul.f32 %v1306, %v1560
  %v1577 = vmul.f32 %v1313, %v1561
  %v1578 = vsub.f32 %v1576, %v1577
  %v1579 = vmul.f32 %v1320, %v1558
  %v1580 = vadd.f32 %v1578, %v1579
  %v1581 = vmul.f32 %v1327, %v1559
  %v1582 = vadd.f32 %v1580, %v1581
  %v1583 = vmul.f32 %v1306, %v1561
  %v1584 = vmul.f32 %v1313, %v1560
  %v1585 = vadd.f32 %v1583, %v1584
  %v1586 = vmul.f32 %v1320, %v1559
  %v1587 = vsub.f32 %v1585, %v1586
  %v1588 = vmul.f32 %v1327, %v1558
  %v1589 = vadd.f32 %v1587, %v1588
  %v1590 = vmul.f32 %v1320, -1.8126068
  %v1591 = vmul.f32 %v1327, 0.21159482
  %v1592 = vsub.f32 %v1590, %v1591
  %v1593 = vmul.f32 %v1592, 2.0
  %v1594 = vmul.f32 %v1327, 0.49200532
  %v1595 = vmul.f32 %v1313, -1.8126068
  %v1596 = vsub.f32 %v1594, %v1595
  %v1597 = vmul.f32 %v1596, 2.0
  %v1598 = vmul.f32 %v1313, 0.21159482
  %v1599 = vmul.f32 %v1320, 0.49200532
  %v1600 = vsub.f32 %v1598, %v1599
  %v1601 = vmul.f32 %v1600, 2.0
  %v1602 = vmul.f32 %v1306, %v1593
  %v1603 = vadd.f32 %v1602, 0.49200532
  %v1604 = vmul.f32 %v1320, %v1601
  %v1605 = vmul.f32 %v1327, %v1597
  %v1606 = vsub.f32 %v1604, %v1605
  %v1607 = vadd.f32 %v1603, %v1606
  %v1608 = vmul.f32 %v1306, %v1597
  %v1609 = vadd.f32 %v1608, 0.21159482
  %v1610 = vmul.f32 %v1327, %v1593
  %v1611 = vmul.f32 %v1313, %v1601
  %v1612 = vsub.f32 %v1610, %v1611
  %v1613 = vadd.f32 %v1609, %v1612
  %v1614 = vmul.f32 %v1306, %v1601
  %v1615 = vadd.f32 %v1614, -1.8126068
  %v1616 = vmul.f32 %v1313, %v1597
  %v1617 = vmul.f32 %v1320, %v1593
  %v1618 = vsub.f32 %v1616, %v1617
  %v1619 = vadd.f32 %v1615, %v1618
  %v1620 = vld [vmem:[%s3 + $0x10] sm:$0x1]
  %v1621 = vmul.f32 %v1607, %v1620
  %v1622 = vadd.f32 %v1360, %v1621
  %v1623 = vmul.f32 %v1613, %v1620
  %v1624 = vadd.f32 %v1362, %v1623
  %v1625 = vmul.f32 %v1619, %v1620
  %v1626 = vadd.f32 %v1364, %v1625
  %1627 = vst.msk [vmem:[%s4 + $0x10] sm:$0x1] %vm63, %v1622
  %1628 = vst.msk [vmem:[%s4 + $0x28] sm:$0x1] %vm63, %v1624
  %1629 = vst.msk [vmem:[%s4 + $0x40] sm:$0x1] %vm63, %v1626
  %v1630 = vld [vmem:[%s2 + $0x44] sm:$0x1]
  %v1631 = vld [vmem:[%s2 + $0x45] sm:$0x1]
  %v1632 = vld [vmem:[%s2 + $0x46] sm:$0x1]
  %v1633 = vld [vmem:[%s2 + $0x47] sm:$0x1]
  %v1634 = vmul.f32 %v1630, %v1630
  %v1635 = vmul.f32 %v1631, %v1631
  %v1636 = vadd.f32 %v1634, %v1635
  %v1637 = vmul.f32 %v1632, %v1632
  %v1638 = vadd.f32 %v1636, %v1637
  %v1639 = vmul.f32 %v1633, %v1633
  %v1640 = vadd.f32 %v1638, %v1639
  %v1641 = vrsqrt.pop %v1640
  %v1642 = vmul.f32 %v1641, %v1640
  %v1643 = vmul.f32 %v1642, %v1641
  %v1644 = vmul.f32 0.5, %v1643
  %v1645 = vsub.f32 1.5, %v1644
  %v1646 = vmul.f32 %v1641, %v1645
  %v1647 = vmul.f32 %v1640, %v1646
  %vm1648 = vcmp.eq.f32.partialorder %v1640, inf
  %v1649 = vsel %vm1648, %v1640, %v1647
  %vm1650 = vcmp.eq.f32.partialorder %v1640, 0.0
  %v1651 = vand.u32 %v1640, 2147483648
  %v1652 = vsel %vm1650, %v1651, %v1649
  %v1653 = vadd.f32 %v1652, 1e-08
  %v1654 = vrcp.pop %v1653
  %v1655 = vmul.f32 %v1653, %v1654
  %v1656 = vsub.f32 1.0, %v1655
  %v1657 = vmul.f32 %v1654, %v1656
  %v1658 = vadd.f32 %v1654, %v1657
  %vm1659 = vweird.f32 %v1653
  %vm1660 = vweird.f32 %v1654
  %vm1661 = vmor %vm1659, %vm1660
  %v1662 = vsel %vm1661, %v1654, %v1658
  %v1663 = vand.u32 2147483647, %v1653
  %vm1664 = vcmp.eq.f32.partialorder %v1663, 8.507059e+37
  %v1665 = vand.u32 %v1653, 2147483648
  %v1666 = vor.u32 1.1754944e-38, %v1665
  %v1667 = vsel %vm1664, %v1666, %v1662
  %v1668 = vmul.f32 1.0, %v1667
  %v1669 = vmul.f32 %v1630, %v1668
  %v1670 = vmul.f32 %v1631, %v1668
  %v1671 = vmul.f32 %v1632, %v1668
  %v1672 = vmul.f32 %v1633, %v1668
  %v1673 = vmul.f32 %v1417, %v1669
  %v1674 = vmul.f32 %v1424, %v1670
  %v1675 = vsub.f32 %v1673, %v1674
  %v1676 = vmul.f32 %v1431, %v1671
  %v1677 = vsub.f32 %v1675, %v1676
  %v1678 = vmul.f32 %v1438, %v1672
  %v1679 = vsub.f32 %v1677, %v1678
  %v1680 = vmul.f32 %v1417, %v1670
  %v1681 = vmul.f32 %v1424, %v1669
  %v1682 = vadd.f32 %v1680, %v1681
  %v1683 = vmul.f32 %v1431, %v1672
  %v1684 = vadd.f32 %v1682, %v1683
  %v1685 = vmul.f32 %v1438, %v1671
  %v1686 = vsub.f32 %v1684, %v1685
  %v1687 = vmul.f32 %v1417, %v1671
  %v1688 = vmul.f32 %v1424, %v1672
  %v1689 = vsub.f32 %v1687, %v1688
  %v1690 = vmul.f32 %v1431, %v1669
  %v1691 = vadd.f32 %v1689, %v1690
  %v1692 = vmul.f32 %v1438, %v1670
  %v1693 = vadd.f32 %v1691, %v1692
  %v1694 = vmul.f32 %v1417, %v1672
  %v1695 = vmul.f32 %v1424, %v1671
  %v1696 = vadd.f32 %v1694, %v1695
  %v1697 = vmul.f32 %v1431, %v1670
  %v1698 = vsub.f32 %v1696, %v1697
  %v1699 = vmul.f32 %v1438, %v1669
  %v1700 = vadd.f32 %v1698, %v1699
  %v1701 = vmul.f32 %v1431, 1.6877822
  %v1702 = vmul.f32 %v1438, 0.84517723
  %v1703 = vsub.f32 %v1701, %v1702
  %v1704 = vmul.f32 %v1703, 2.0
  %v1705 = vmul.f32 %v1438, 1.8841707
  %v1706 = vmul.f32 %v1424, 1.6877822
  %v1707 = vsub.f32 %v1705, %v1706
  %v1708 = vmul.f32 %v1707, 2.0
  %v1709 = vmul.f32 %v1424, 0.84517723
  %v1710 = vmul.f32 %v1431, 1.8841707
  %v1711 = vsub.f32 %v1709, %v1710
  %v1712 = vmul.f32 %v1711, 2.0
  %v1713 = vmul.f32 %v1417, %v1704
  %v1714 = vadd.f32 %v1713, 1.8841707
  %v1715 = vmul.f32 %v1431, %v1712
  %v1716 = vmul.f32 %v1438, %v1708
  %v1717 = vsub.f32 %v1715, %v1716
  %v1718 = vadd.f32 %v1714, %v1717
  %v1719 = vmul.f32 %v1417, %v1708
  %v1720 = vadd.f32 %v1719, 0.84517723
  %v1721 = vmul.f32 %v1438, %v1704
  %v1722 = vmul.f32 %v1424, %v1712
  %v1723 = vsub.f32 %v1721, %v1722
  %v1724 = vadd.f32 %v1720, %v1723
  %v1725 = vmul.f32 %v1417, %v1712
  %v1726 = vadd.f32 %v1725, 1.6877822
  %v1727 = vmul.f32 %v1424, %v1708
  %v1728 = vmul.f32 %v1431, %v1704
  %v1729 = vsub.f32 %v1727, %v1728
  %v1730 = vadd.f32 %v1726, %v1729
  %v1731 = vld [vmem:[%s3 + $0x11] sm:$0x1]
  %v1732 = vmul.f32 %v1718, %v1731
  %v1733 = vadd.f32 %v1471, %v1732
  %v1734 = vmul.f32 %v1724, %v1731
  %v1735 = vadd.f32 %v1473, %v1734
  %v1736 = vmul.f32 %v1730, %v1731
  %v1737 = vadd.f32 %v1475, %v1736
  %1738 = vst.msk [vmem:[%s4 + $0x11] sm:$0x1] %vm63, %v1733
  %1739 = vst.msk [vmem:[%s4 + $0x29] sm:$0x1] %vm63, %v1735
  %1740 = vst.msk [vmem:[%s4 + $0x41] sm:$0x1] %vm63, %v1737
  %v1741 = vld [vmem:[%s2 + $0x48] sm:$0x1]
  %v1742 = vld [vmem:[%s2 + $0x49] sm:$0x1]
  %v1743 = vld [vmem:[%s2 + $0x4a] sm:$0x1]
  %v1744 = vld [vmem:[%s2 + $0x4b] sm:$0x1]
  %v1745 = vmul.f32 %v1741, %v1741
  %v1746 = vmul.f32 %v1742, %v1742
  %v1747 = vadd.f32 %v1745, %v1746
  %v1748 = vmul.f32 %v1743, %v1743
  %v1749 = vadd.f32 %v1747, %v1748
  %v1750 = vmul.f32 %v1744, %v1744
  %v1751 = vadd.f32 %v1749, %v1750
  %v1752 = vrsqrt.pop %v1751
  %v1753 = vmul.f32 %v1752, %v1751
  %v1754 = vmul.f32 %v1753, %v1752
  %v1755 = vmul.f32 0.5, %v1754
  %v1756 = vsub.f32 1.5, %v1755
  %v1757 = vmul.f32 %v1752, %v1756
  %v1758 = vmul.f32 %v1751, %v1757
  %vm1759 = vcmp.eq.f32.partialorder %v1751, inf
  %v1760 = vsel %vm1759, %v1751, %v1758
  %vm1761 = vcmp.eq.f32.partialorder %v1751, 0.0
  %v1762 = vand.u32 %v1751, 2147483648
  %v1763 = vsel %vm1761, %v1762, %v1760
  %v1764 = vadd.f32 %v1763, 1e-08
  %v1765 = vrcp.pop %v1764
  %v1766 = vmul.f32 %v1764, %v1765
  %v1767 = vsub.f32 1.0, %v1766
  %v1768 = vmul.f32 %v1765, %v1767
  %v1769 = vadd.f32 %v1765, %v1768
  %vm1770 = vweird.f32 %v1764
  %vm1771 = vweird.f32 %v1765
  %vm1772 = vmor %vm1770, %vm1771
  %v1773 = vsel %vm1772, %v1765, %v1769
  %v1774 = vand.u32 2147483647, %v1764
  %vm1775 = vcmp.eq.f32.partialorder %v1774, 8.507059e+37
  %v1776 = vand.u32 %v1764, 2147483648
  %v1777 = vor.u32 1.1754944e-38, %v1776
  %v1778 = vsel %vm1775, %v1777, %v1773
  %v1779 = vmul.f32 1.0, %v1778
  %v1780 = vmul.f32 %v1741, %v1779
  %v1781 = vmul.f32 %v1742, %v1779
  %v1782 = vmul.f32 %v1743, %v1779
  %v1783 = vmul.f32 %v1744, %v1779
  %v1784 = vmul.f32 %v1568, %v1780
  %v1785 = vmul.f32 %v1575, %v1781
  %v1786 = vsub.f32 %v1784, %v1785
  %v1787 = vmul.f32 %v1582, %v1782
  %v1788 = vsub.f32 %v1786, %v1787
  %v1789 = vmul.f32 %v1589, %v1783
  %v1790 = vsub.f32 %v1788, %v1789
  %v1791 = vmul.f32 %v1568, %v1781
  %v1792 = vmul.f32 %v1575, %v1780
  %v1793 = vadd.f32 %v1791, %v1792
  %v1794 = vmul.f32 %v1582, %v1783
  %v1795 = vadd.f32 %v1793, %v1794
  %v1796 = vmul.f32 %v1589, %v1782
  %v1797 = vsub.f32 %v1795, %v1796
  %v1798 = vmul.f32 %v1568, %v1782
  %v1799 = vmul.f32 %v1575, %v1783
  %v1800 = vsub.f32 %v1798, %v1799
  %v1801 = vmul.f32 %v1582, %v1780
  %v1802 = vadd.f32 %v1800, %v1801
  %v1803 = vmul.f32 %v1589, %v1781
  %v1804 = vadd.f32 %v1802, %v1803
  %v1805 = vmul.f32 %v1568, %v1783
  %v1806 = vmul.f32 %v1575, %v1782
  %v1807 = vadd.f32 %v1805, %v1806
  %v1808 = vmul.f32 %v1582, %v1781
  %v1809 = vsub.f32 %v1807, %v1808
  %v1810 = vmul.f32 %v1589, %v1780
  %v1811 = vadd.f32 %v1809, %v1810
  %v1812 = vmul.f32 %v1582, 1.2086458
  %v1813 = vmul.f32 %v1589, -0.77160335
  %v1814 = vsub.f32 %v1812, %v1813
  %v1815 = vmul.f32 %v1814, 2.0
  %v1816 = vmul.f32 %v1589, 1.6461896
  %v1817 = vmul.f32 %v1575, 1.2086458
  %v1818 = vsub.f32 %v1816, %v1817
  %v1819 = vmul.f32 %v1818, 2.0
  %v1820 = vmul.f32 %v1575, -0.77160335
  %v1821 = vmul.f32 %v1582, 1.6461896
  %v1822 = vsub.f32 %v1820, %v1821
  %v1823 = vmul.f32 %v1822, 2.0
  %v1824 = vmul.f32 %v1568, %v1815
  %v1825 = vadd.f32 %v1824, 1.6461896
  %v1826 = vmul.f32 %v1582, %v1823
  %v1827 = vmul.f32 %v1589, %v1819
  %v1828 = vsub.f32 %v1826, %v1827
  %v1829 = vadd.f32 %v1825, %v1828
  %v1830 = vmul.f32 %v1568, %v1819
  %v1831 = vadd.f32 %v1830, -0.77160335
  %v1832 = vmul.f32 %v1589, %v1815
  %v1833 = vmul.f32 %v1575, %v1823
  %v1834 = vsub.f32 %v1832, %v1833
  %v1835 = vadd.f32 %v1831, %v1834
  %v1836 = vmul.f32 %v1568, %v1823
  %v1837 = vadd.f32 %v1836, 1.2086458
  %v1838 = vmul.f32 %v1575, %v1819
  %v1839 = vmul.f32 %v1582, %v1815
  %v1840 = vsub.f32 %v1838, %v1839
  %v1841 = vadd.f32 %v1837, %v1840
  %v1842 = vld [vmem:[%s3 + $0x12] sm:$0x1]
  %v1843 = vmul.f32 %v1829, %v1842
  %v1844 = vadd.f32 %v1622, %v1843
  %v1845 = vmul.f32 %v1835, %v1842
  %v1846 = vadd.f32 %v1624, %v1845
  %v1847 = vmul.f32 %v1841, %v1842
  %v1848 = vadd.f32 %v1626, %v1847
  %1849 = vst.msk [vmem:[%s4 + $0x12] sm:$0x1] %vm63, %v1844
  %1850 = vst.msk [vmem:[%s4 + $0x2a] sm:$0x1] %vm63, %v1846
  %1851 = vst.msk [vmem:[%s4 + $0x42] sm:$0x1] %vm63, %v1848
  %v1852 = vld [vmem:[%s2 + $0x4c] sm:$0x1]
  %v1853 = vld [vmem:[%s2 + $0x4d] sm:$0x1]
  %v1854 = vld [vmem:[%s2 + $0x4e] sm:$0x1]
  %v1855 = vld [vmem:[%s2 + $0x4f] sm:$0x1]
  %v1856 = vmul.f32 %v1852, %v1852
  %v1857 = vmul.f32 %v1853, %v1853
  %v1858 = vadd.f32 %v1856, %v1857
  %v1859 = vmul.f32 %v1854, %v1854
  %v1860 = vadd.f32 %v1858, %v1859
  %v1861 = vmul.f32 %v1855, %v1855
  %v1862 = vadd.f32 %v1860, %v1861
  %v1863 = vrsqrt.pop %v1862
  %v1864 = vmul.f32 %v1863, %v1862
  %v1865 = vmul.f32 %v1864, %v1863
  %v1866 = vmul.f32 0.5, %v1865
  %v1867 = vsub.f32 1.5, %v1866
  %v1868 = vmul.f32 %v1863, %v1867
  %v1869 = vmul.f32 %v1862, %v1868
  %vm1870 = vcmp.eq.f32.partialorder %v1862, inf
  %v1871 = vsel %vm1870, %v1862, %v1869
  %vm1872 = vcmp.eq.f32.partialorder %v1862, 0.0
  %v1873 = vand.u32 %v1862, 2147483648
  %v1874 = vsel %vm1872, %v1873, %v1871
  %v1875 = vadd.f32 %v1874, 1e-08
  %v1876 = vrcp.pop %v1875
  %v1877 = vmul.f32 %v1875, %v1876
  %v1878 = vsub.f32 1.0, %v1877
  %v1879 = vmul.f32 %v1876, %v1878
  %v1880 = vadd.f32 %v1876, %v1879
  %vm1881 = vweird.f32 %v1875
  %vm1882 = vweird.f32 %v1876
  %vm1883 = vmor %vm1881, %vm1882
  %v1884 = vsel %vm1883, %v1876, %v1880
  %v1885 = vand.u32 2147483647, %v1875
  %vm1886 = vcmp.eq.f32.partialorder %v1885, 8.507059e+37
  %v1887 = vand.u32 %v1875, 2147483648
  %v1888 = vor.u32 1.1754944e-38, %v1887
  %v1889 = vsel %vm1886, %v1888, %v1884
  %v1890 = vmul.f32 1.0, %v1889
  %v1891 = vmul.f32 %v1852, %v1890
  %v1892 = vmul.f32 %v1853, %v1890
  %v1893 = vmul.f32 %v1854, %v1890
  %v1894 = vmul.f32 %v1855, %v1890
  %v1895 = vmul.f32 %v1679, %v1891
  %v1896 = vmul.f32 %v1686, %v1892
  %v1897 = vsub.f32 %v1895, %v1896
  %v1898 = vmul.f32 %v1693, %v1893
  %v1899 = vsub.f32 %v1897, %v1898
  %v1900 = vmul.f32 %v1700, %v1894
  %v1901 = vsub.f32 %v1899, %v1900
  %v1902 = vmul.f32 %v1679, %v1892
  %v1903 = vmul.f32 %v1686, %v1891
  %v1904 = vadd.f32 %v1902, %v1903
  %v1905 = vmul.f32 %v1693, %v1894
  %v1906 = vadd.f32 %v1904, %v1905
  %v1907 = vmul.f32 %v1700, %v1893
  %v1908 = vsub.f32 %v1906, %v1907
  %v1909 = vmul.f32 %v1679, %v1893
  %v1910 = vmul.f32 %v1686, %v1894
  %v1911 = vsub.f32 %v1909, %v1910
  %v1912 = vmul.f32 %v1693, %v1891
  %v1913 = vadd.f32 %v1911, %v1912
  %v1914 = vmul.f32 %v1700, %v1892
  %v1915 = vadd.f32 %v1913, %v1914
  %v1916 = vmul.f32 %v1679, %v1894
  %v1917 = vmul.f32 %v1686, %v1893
  %v1918 = vadd.f32 %v1916, %v1917
  %v1919 = vmul.f32 %v1693, %v1892
  %v1920 = vsub.f32 %v1918, %v1919
  %v1921 = vmul.f32 %v1700, %v1891
  %v1922 = vadd.f32 %v1920, %v1921
  %v1923 = vmul.f32 %v1693, -0.1771928
  %v1924 = vmul.f32 %v1700, 1.0709566
  %v1925 = vsub.f32 %v1923, %v1924
  %v1926 = vmul.f32 %v1925, 2.0
  %v1927 = vmul.f32 %v1700, -0.97119397
  %v1928 = vmul.f32 %v1686, -0.1771928
  %v1929 = vsub.f32 %v1927, %v1928
  %v1930 = vmul.f32 %v1929, 2.0
  %v1931 = vmul.f32 %v1686, 1.0709566
  %v1932 = vmul.f32 %v1693, -0.97119397
  %v1933 = vsub.f32 %v1931, %v1932
  %v1934 = vmul.f32 %v1933, 2.0
  %v1935 = vmul.f32 %v1679, %v1926
  %v1936 = vadd.f32 %v1935, -0.97119397
  %v1937 = vmul.f32 %v1693, %v1934
  %v1938 = vmul.f32 %v1700, %v1930
  %v1939 = vsub.f32 %v1937, %v1938
  %v1940 = vadd.f32 %v1936, %v1939
  %v1941 = vmul.f32 %v1679, %v1930
  %v1942 = vadd.f32 %v1941, 1.0709566
  %v1943 = vmul.f32 %v1700, %v1926
  %v1944 = vmul.f32 %v1686, %v1934
  %v1945 = vsub.f32 %v1943, %v1944
  %v1946 = vadd.f32 %v1942, %v1945
  %v1947 = vmul.f32 %v1679, %v1934
  %v1948 = vadd.f32 %v1947, -0.1771928
  %v1949 = vmul.f32 %v1686, %v1930
  %v1950 = vmul.f32 %v1693, %v1926
  %v1951 = vsub.f32 %v1949, %v1950
  %v1952 = vadd.f32 %v1948, %v1951
  %v1953 = vld [vmem:[%s3 + $0x13] sm:$0x1]
  %v1954 = vmul.f32 %v1940, %v1953
  %v1955 = vadd.f32 %v1733, %v1954
  %v1956 = vmul.f32 %v1946, %v1953
  %v1957 = vadd.f32 %v1735, %v1956
  %v1958 = vmul.f32 %v1952, %v1953
  %v1959 = vadd.f32 %v1737, %v1958
  %1960 = vst.msk [vmem:[%s4 + $0x13] sm:$0x1] %vm63, %v1955
  %1961 = vst.msk [vmem:[%s4 + $0x2b] sm:$0x1] %vm63, %v1957
  %1962 = vst.msk [vmem:[%s4 + $0x43] sm:$0x1] %vm63, %v1959
  %v1963 = vld [vmem:[%s2 + $0x50] sm:$0x1]
  %v1964 = vld [vmem:[%s2 + $0x51] sm:$0x1]
  %v1965 = vld [vmem:[%s2 + $0x52] sm:$0x1]
  %v1966 = vld [vmem:[%s2 + $0x53] sm:$0x1]
  %v1967 = vmul.f32 %v1963, %v1963
  %v1968 = vmul.f32 %v1964, %v1964
  %v1969 = vadd.f32 %v1967, %v1968
  %v1970 = vmul.f32 %v1965, %v1965
  %v1971 = vadd.f32 %v1969, %v1970
  %v1972 = vmul.f32 %v1966, %v1966
  %v1973 = vadd.f32 %v1971, %v1972
  %v1974 = vrsqrt.pop %v1973
  %v1975 = vmul.f32 %v1974, %v1973
  %v1976 = vmul.f32 %v1975, %v1974
  %v1977 = vmul.f32 0.5, %v1976
  %v1978 = vsub.f32 1.5, %v1977
  %v1979 = vmul.f32 %v1974, %v1978
  %v1980 = vmul.f32 %v1973, %v1979
  %vm1981 = vcmp.eq.f32.partialorder %v1973, inf
  %v1982 = vsel %vm1981, %v1973, %v1980
  %vm1983 = vcmp.eq.f32.partialorder %v1973, 0.0
  %v1984 = vand.u32 %v1973, 2147483648
  %v1985 = vsel %vm1983, %v1984, %v1982
  %v1986 = vadd.f32 %v1985, 1e-08
  %v1987 = vrcp.pop %v1986
  %v1988 = vmul.f32 %v1986, %v1987
  %v1989 = vsub.f32 1.0, %v1988
  %v1990 = vmul.f32 %v1987, %v1989
  %v1991 = vadd.f32 %v1987, %v1990
  %vm1992 = vweird.f32 %v1986
  %vm1993 = vweird.f32 %v1987
  %vm1994 = vmor %vm1992, %vm1993
  %v1995 = vsel %vm1994, %v1987, %v1991
  %v1996 = vand.u32 2147483647, %v1986
  %vm1997 = vcmp.eq.f32.partialorder %v1996, 8.507059e+37
  %v1998 = vand.u32 %v1986, 2147483648
  %v1999 = vor.u32 1.1754944e-38, %v1998
  %v2000 = vsel %vm1997, %v1999, %v1995
  %v2001 = vmul.f32 1.0, %v2000
  %v2002 = vmul.f32 %v1963, %v2001
  %v2003 = vmul.f32 %v1964, %v2001
  %v2004 = vmul.f32 %v1965, %v2001
  %v2005 = vmul.f32 %v1966, %v2001
  %v2006 = vmul.f32 %v1790, %v2002
  %v2007 = vmul.f32 %v1797, %v2003
  %v2008 = vsub.f32 %v2006, %v2007
  %v2009 = vmul.f32 %v1804, %v2004
  %v2010 = vsub.f32 %v2008, %v2009
  %v2011 = vmul.f32 %v1811, %v2005
  %v2012 = vsub.f32 %v2010, %v2011
  %v2013 = vmul.f32 %v1790, %v2003
  %v2014 = vmul.f32 %v1797, %v2002
  %v2015 = vadd.f32 %v2013, %v2014
  %v2016 = vmul.f32 %v1804, %v2005
  %v2017 = vadd.f32 %v2015, %v2016
  %v2018 = vmul.f32 %v1811, %v2004
  %v2019 = vsub.f32 %v2017, %v2018
  %v2020 = vmul.f32 %v1790, %v2004
  %v2021 = vmul.f32 %v1797, %v2005
  %v2022 = vsub.f32 %v2020, %v2021
  %v2023 = vmul.f32 %v1804, %v2002
  %v2024 = vadd.f32 %v2022, %v2023
  %v2025 = vmul.f32 %v1811, %v2003
  %v2026 = vadd.f32 %v2024, %v2025
  %v2027 = vmul.f32 %v1790, %v2005
  %v2028 = vmul.f32 %v1797, %v2004
  %v2029 = vadd.f32 %v2027, %v2028
  %v2030 = vmul.f32 %v1804, %v2003
  %v2031 = vsub.f32 %v2029, %v2030
  %v2032 = vmul.f32 %v1811, %v2002
  %v2033 = vadd.f32 %v2031, %v2032
  %v2034 = vmul.f32 %v1804, -0.6208841
  %v2035 = vmul.f32 %v1811, 0.40520155
  %v2036 = vsub.f32 %v2034, %v2035
  %v2037 = vmul.f32 %v2036, 2.0
  %v2038 = vmul.f32 %v1811, 0.86372775
  %v2039 = vmul.f32 %v1797, -0.6208841
  %v2040 = vsub.f32 %v2038, %v2039
  %v2041 = vmul.f32 %v2040, 2.0
  %v2042 = vmul.f32 %v1797, 0.40520155
  %v2043 = vmul.f32 %v1804, 0.86372775
  %v2044 = vsub.f32 %v2042, %v2043
  %v2045 = vmul.f32 %v2044, 2.0
  %v2046 = vmul.f32 %v1790, %v2037
  %v2047 = vadd.f32 %v2046, 0.86372775
  %v2048 = vmul.f32 %v1804, %v2045
  %v2049 = vmul.f32 %v1811, %v2041
  %v2050 = vsub.f32 %v2048, %v2049
  %v2051 = vadd.f32 %v2047, %v2050
  %v2052 = vmul.f32 %v1790, %v2041
  %v2053 = vadd.f32 %v2052, 0.40520155
  %v2054 = vmul.f32 %v1811, %v2037
  %v2055 = vmul.f32 %v1797, %v2045
  %v2056 = vsub.f32 %v2054, %v2055
  %v2057 = vadd.f32 %v2053, %v2056
  %v2058 = vmul.f32 %v1790, %v2045
  %v2059 = vadd.f32 %v2058, -0.6208841
  %v2060 = vmul.f32 %v1797, %v2041
  %v2061 = vmul.f32 %v1804, %v2037
  %v2062 = vsub.f32 %v2060, %v2061
  %v2063 = vadd.f32 %v2059, %v2062
  %v2064 = vld [vmem:[%s3 + $0x14] sm:$0x1]
  %v2065 = vmul.f32 %v2051, %v2064
  %v2066 = vadd.f32 %v1844, %v2065
  %v2067 = vmul.f32 %v2057, %v2064
  %v2068 = vadd.f32 %v1846, %v2067
  %v2069 = vmul.f32 %v2063, %v2064
  %v2070 = vadd.f32 %v1848, %v2069
  %2071 = vst.msk [vmem:[%s4 + $0x14] sm:$0x1] %vm63, %v2066
  %2072 = vst.msk [vmem:[%s4 + $0x2c] sm:$0x1] %vm63, %v2068
  %2073 = vst.msk [vmem:[%s4 + $0x44] sm:$0x1] %vm63, %v2070
  %v2074 = vld [vmem:[%s2 + $0x54] sm:$0x1]
  %v2075 = vld [vmem:[%s2 + $0x55] sm:$0x1]
  %v2076 = vld [vmem:[%s2 + $0x56] sm:$0x1]
  %v2077 = vld [vmem:[%s2 + $0x57] sm:$0x1]
  %v2078 = vmul.f32 %v2074, %v2074
  %v2079 = vmul.f32 %v2075, %v2075
  %v2080 = vadd.f32 %v2078, %v2079
  %v2081 = vmul.f32 %v2076, %v2076
  %v2082 = vadd.f32 %v2080, %v2081
  %v2083 = vmul.f32 %v2077, %v2077
  %v2084 = vadd.f32 %v2082, %v2083
  %v2085 = vrsqrt.pop %v2084
  %v2086 = vmul.f32 %v2085, %v2084
  %v2087 = vmul.f32 %v2086, %v2085
  %v2088 = vmul.f32 0.5, %v2087
  %v2089 = vsub.f32 1.5, %v2088
  %v2090 = vmul.f32 %v2085, %v2089
  %v2091 = vmul.f32 %v2084, %v2090
  %vm2092 = vcmp.eq.f32.partialorder %v2084, inf
  %v2093 = vsel %vm2092, %v2084, %v2091
  %vm2094 = vcmp.eq.f32.partialorder %v2084, 0.0
  %v2095 = vand.u32 %v2084, 2147483648
  %v2096 = vsel %vm2094, %v2095, %v2093
  %v2097 = vadd.f32 %v2096, 1e-08
  %v2098 = vrcp.pop %v2097
  %v2099 = vmul.f32 %v2097, %v2098
  %v2100 = vsub.f32 1.0, %v2099
  %v2101 = vmul.f32 %v2098, %v2100
  %v2102 = vadd.f32 %v2098, %v2101
  %vm2103 = vweird.f32 %v2097
  %vm2104 = vweird.f32 %v2098
  %vm2105 = vmor %vm2103, %vm2104
  %v2106 = vsel %vm2105, %v2098, %v2102
  %v2107 = vand.u32 2147483647, %v2097
  %vm2108 = vcmp.eq.f32.partialorder %v2107, 8.507059e+37
  %v2109 = vand.u32 %v2097, 2147483648
  %v2110 = vor.u32 1.1754944e-38, %v2109
  %v2111 = vsel %vm2108, %v2110, %v2106
  %v2112 = vmul.f32 1.0, %v2111
  %v2113 = vmul.f32 %v2074, %v2112
  %v2114 = vmul.f32 %v2075, %v2112
  %v2115 = vmul.f32 %v2076, %v2112
  %v2116 = vmul.f32 %v2077, %v2112
  %v2117 = vmul.f32 %v1901, %v2113
  %v2118 = vmul.f32 %v1908, %v2114
  %v2119 = vsub.f32 %v2117, %v2118
  %v2120 = vmul.f32 %v1915, %v2115
  %v2121 = vsub.f32 %v2119, %v2120
  %v2122 = vmul.f32 %v1922, %v2116
  %v2123 = vsub.f32 %v2121, %v2122
  %v2124 = vmul.f32 %v1901, %v2114
  %v2125 = vmul.f32 %v1908, %v2113
  %v2126 = vadd.f32 %v2124, %v2125
  %v2127 = vmul.f32 %v1915, %v2116
  %v2128 = vadd.f32 %v2126, %v2127
  %v2129 = vmul.f32 %v1922, %v2115
  %v2130 = vsub.f32 %v2128, %v2129
  %v2131 = vmul.f32 %v1901, %v2115
  %v2132 = vmul.f32 %v1908, %v2116
  %v2133 = vsub.f32 %v2131, %v2132
  %v2134 = vmul.f32 %v1915, %v2113
  %v2135 = vadd.f32 %v2133, %v2134
  %v2136 = vmul.f32 %v1922, %v2114
  %v2137 = vadd.f32 %v2135, %v2136
  %v2138 = vmul.f32 %v1901, %v2116
  %v2139 = vmul.f32 %v1908, %v2115
  %v2140 = vadd.f32 %v2138, %v2139
  %v2141 = vmul.f32 %v1915, %v2114
  %v2142 = vsub.f32 %v2140, %v2141
  %v2143 = vmul.f32 %v1922, %v2113
  %v2144 = vadd.f32 %v2142, %v2143
  %v2145 = vmul.f32 %v1915, -0.71496385
  %v2146 = vmul.f32 %v1922, -2.4833102
  %v2147 = vsub.f32 %v2145, %v2146
  %v2148 = vmul.f32 %v2147, 2.0
  %v2149 = vmul.f32 %v1922, 0.23039393
  %v2150 = vmul.f32 %v1908, -0.71496385
  %v2151 = vsub.f32 %v2149, %v2150
  %v2152 = vmul.f32 %v2151, 2.0
  %v2153 = vmul.f32 %v1908, -2.4833102
  %v2154 = vmul.f32 %v1915, 0.23039393
  %v2155 = vsub.f32 %v2153, %v2154
  %v2156 = vmul.f32 %v2155, 2.0
  %v2157 = vmul.f32 %v1901, %v2148
  %v2158 = vadd.f32 %v2157, 0.23039393
  %v2159 = vmul.f32 %v1915, %v2156
  %v2160 = vmul.f32 %v1922, %v2152
  %v2161 = vsub.f32 %v2159, %v2160
  %v2162 = vadd.f32 %v2158, %v2161
  %v2163 = vmul.f32 %v1901, %v2152
  %v2164 = vadd.f32 %v2163, -2.4833102
  %v2165 = vmul.f32 %v1922, %v2148
  %v2166 = vmul.f32 %v1908, %v2156
  %v2167 = vsub.f32 %v2165, %v2166
  %v2168 = vadd.f32 %v2164, %v2167
  %v2169 = vmul.f32 %v1901, %v2156
  %v2170 = vadd.f32 %v2169, -0.71496385
  %v2171 = vmul.f32 %v1908, %v2152
  %v2172 = vmul.f32 %v1915, %v2148
  %v2173 = vsub.f32 %v2171, %v2172
  %v2174 = vadd.f32 %v2170, %v2173
  %v2175 = vld [vmem:[%s3 + $0x15] sm:$0x1]
  %v2176 = vmul.f32 %v2162, %v2175
  %v2177 = vadd.f32 %v1955, %v2176
  %v2178 = vmul.f32 %v2168, %v2175
  %v2179 = vadd.f32 %v1957, %v2178
  %v2180 = vmul.f32 %v2174, %v2175
  %v2181 = vadd.f32 %v1959, %v2180
  %2182 = vst.msk [vmem:[%s4 + $0x15] sm:$0x1] %vm63, %v2177
  %2183 = vst.msk [vmem:[%s4 + $0x2d] sm:$0x1] %vm63, %v2179
  %2184 = vst.msk [vmem:[%s4 + $0x45] sm:$0x1] %vm63, %v2181
  %v2185 = vmul.f32 %v2026, -1.7960398
  %v2186 = vmul.f32 %v2033, 2.3848474
  %v2187 = vsub.f32 %v2185, %v2186
  %v2188 = vmul.f32 %v2187, 2.0
  %v2189 = vmul.f32 %v2033, -0.1874304
  %v2190 = vmul.f32 %v2019, -1.7960398
  %v2191 = vsub.f32 %v2189, %v2190
  %v2192 = vmul.f32 %v2191, 2.0
  %v2193 = vmul.f32 %v2019, 2.3848474
  %v2194 = vmul.f32 %v2026, -0.1874304
  %v2195 = vsub.f32 %v2193, %v2194
  %v2196 = vmul.f32 %v2195, 2.0
  %v2197 = vmul.f32 %v2012, %v2188
  %v2198 = vadd.f32 %v2197, -0.1874304
  %v2199 = vmul.f32 %v2026, %v2196
  %v2200 = vmul.f32 %v2033, %v2192
  %v2201 = vsub.f32 %v2199, %v2200
  %v2202 = vadd.f32 %v2198, %v2201
  %v2203 = vmul.f32 %v2012, %v2192
  %v2204 = vadd.f32 %v2203, 2.3848474
  %v2205 = vmul.f32 %v2033, %v2188
  %v2206 = vmul.f32 %v2019, %v2196
  %v2207 = vsub.f32 %v2205, %v2206
  %v2208 = vadd.f32 %v2204, %v2207
  %v2209 = vmul.f32 %v2012, %v2196
  %v2210 = vadd.f32 %v2209, -1.7960398
  %v2211 = vmul.f32 %v2019, %v2192
  %v2212 = vmul.f32 %v2026, %v2188
  %v2213 = vsub.f32 %v2211, %v2212
  %v2214 = vadd.f32 %v2210, %v2213
  %v2215 = vld [vmem:[%s3 + $0x16] sm:$0x1]
  %v2216 = vmul.f32 %v2202, %v2215
  %v2217 = vadd.f32 %v2066, %v2216
  %v2218 = vmul.f32 %v2208, %v2215
  %v2219 = vadd.f32 %v2068, %v2218
  %v2220 = vmul.f32 %v2214, %v2215
  %v2221 = vadd.f32 %v2070, %v2220
  %2222 = vst.msk [vmem:[%s4 + $0x16] sm:$0x1] %vm63, %v2217
  %2223 = vst.msk [vmem:[%s4 + $0x2e] sm:$0x1] %vm63, %v2219
  %2224 = vst.msk [vmem:[%s4 + $0x46] sm:$0x1] %vm63, %v2221
  %v2225 = vmul.f32 %v2137, -1.5007628
  %v2226 = vmul.f32 %v2144, -1.2680144
  %v2227 = vsub.f32 %v2225, %v2226
  %v2228 = vmul.f32 %v2227, 2.0
  %v2229 = vmul.f32 %v2144, -1.0363126
  %v2230 = vmul.f32 %v2130, -1.5007628
  %v2231 = vsub.f32 %v2229, %v2230
  %v2232 = vmul.f32 %v2231, 2.0
  %v2233 = vmul.f32 %v2130, -1.2680144
  %v2234 = vmul.f32 %v2137, -1.0363126
  %v2235 = vsub.f32 %v2233, %v2234
  %v2236 = vmul.f32 %v2235, 2.0
  %v2237 = vmul.f32 %v2123, %v2228
  %v2238 = vadd.f32 %v2237, -1.0363126
  %v2239 = vmul.f32 %v2137, %v2236
  %v2240 = vmul.f32 %v2144, %v2232
  %v2241 = vsub.f32 %v2239, %v2240
  %v2242 = vadd.f32 %v2238, %v2241
  %v2243 = vmul.f32 %v2123, %v2232
  %v2244 = vadd.f32 %v2243, -1.2680144
  %v2245 = vmul.f32 %v2144, %v2228
  %v2246 = vmul.f32 %v2130, %v2236
  %v2247 = vsub.f32 %v2245, %v2246
  %v2248 = vadd.f32 %v2244, %v2247
  %v2249 = vmul.f32 %v2123, %v2236
  %v2250 = vadd.f32 %v2249, -1.5007628
  %v2251 = vmul.f32 %v2130, %v2232
  %v2252 = vmul.f32 %v2137, %v2228
  %v2253 = vsub.f32 %v2251, %v2252
  %v2254 = vadd.f32 %v2250, %v2253
  %v2255 = vld [vmem:[%s3 + $0x17] sm:$0x1]
  %v2256 = vmul.f32 %v2242, %v2255
  %v2257 = vadd.f32 %v2177, %v2256
  %v2258 = vmul.f32 %v2248, %v2255
  %v2259 = vadd.f32 %v2179, %v2258
  %v2260 = vmul.f32 %v2254, %v2255
  %v2261 = vadd.f32 %v2181, %v2260
  %2262 = vst.msk [vmem:[%s4 + $0x17] sm:$0x1] %vm63, %v2257
  %2263 = vst.msk [vmem:[%s4 + $0x2f] sm:$0x1] %vm63, %v2259
  %2264 = vst.msk [vmem:[%s4 + $0x47] sm:$0x1] %vm63, %v2261
  // Predicated region
  $region18: #{tpu_custom_call.1} parent=0 // pred_check
    _
  $region19: #{tpu_custom_call.1} parent=0 // pred_check_branch
    %2266 = sbr.rel (0) target = $region21
  $region20: #{tpu_custom_call.1} parent=0 // pred_region
    _
  $region21: #{tpu_custom_call.1} parent=0 // pred_fallthru
    _
  // Predicated region
  $region22: #{tpu_custom_call.1} parent=0 // pred_check
    _
  $region23: #{tpu_custom_call.1} parent=0 // pred_check_branch
    %2268 = sbr.rel (0) target = $region25
  $region24: #{tpu_custom_call.1} parent=0 // pred_region
    _
  $region25: #{tpu_custom_call.1} parent=0 // pred_fallthru
    _

</llo_original>
